<compile_context>
chip_gen: v7x
topology: tpu7x:2x2x1
jax: 0.10.0
libtpu: 0.0.40
codegen_flags: <defaults>
</compile_context>

<pallas_src>
import functools

import numpy as np
import jax
import jax.numpy as jnp
from jax.experimental import pallas as pl
from jax.experimental.pallas import tpu as pltpu


def out_size(sequence_length, filter_size, padding=0, dilation=1, stride=1):
    length = sequence_length + 2 * padding - dilation * (filter_size - 1) - 1
    length = int(length / stride)
    return length + 1


# ----------------------------------------------------------------------------
# Host-side (one-time) weight packing.
#
# Builds:
#   wtoep [S*E, P*PADW] : im2col/Toeplitz form of all Conv1d layers.  Column
#                         r*PADW + j is the (c, l) conv output that is element
#                         r of pool window j (global, torch-concatenated order).
#   bflat [1, P*PADW]   : matching per-column conv bias.
#   w1p   [PADW, H]     : linear1 weight (rows = pool windows), zero-padded.
# ----------------------------------------------------------------------------
def prepare_fused_weights(weights, params, S, E):
    C = params['cnn_out_channels']
    P = params['cnn_pool_stride']
    stride = params['cnn_conv_stride']
    fszs = params['cnn_filter_sizes']
    Ls = [out_size(S, f, stride=stride) for f in fszs]
    n_wins = [int(L * C / P) for L in Ls]
    NW = sum(n_wins)                              # total pooled features
    PADW = ((NW + 127) // 128) * 128              # lane-dense padding
    H = int(np.asarray(weights['w1']).shape[1])

    wtoep = np.zeros((S * E, P * PADW), np.float32)
    bflat = np.zeros((1, P * PADW), np.float32)
    feat_off = 0
    for i, (fsz, L, n_win) in enumerate(zip(fszs, Ls, n_wins)):
        w = np.asarray(weights[f'conv{i}_w'])     # [fsz, E, C]  (= torch [C,E,fsz].T)
        b = np.asarray(weights[f'conv{i}_b']).reshape(-1)  # [C]
        for jj in range(n_win):                   # local pool-window index
            j = feat_off + jj                     # global feature index
            for r in range(P):                    # element within the window
                p = jj * P + r                    # C-major flat index (torch .view)
                c, l = p // L, p % L
                col = r * PADW + j
                bflat[0, col] = b[c]
                for k in range(fsz):
                    s = l * stride + k
                    wtoep[s * E:(s + 1) * E, col] = w[k, :, c]
        feat_off += n_win

    w1p = np.zeros((PADW, H), np.float32)
    w1p[:NW] = np.asarray(weights['w1'])

    return {
        'wtoep': jnp.asarray(wtoep), 'bflat': jnp.asarray(bflat),
        'w1p': jnp.asarray(w1p), 'b1': weights['b1'],
        'w2': weights['w2'], 'b2': weights['b2'],
        'P': P, 'PADW': PADW,
    }


# ----------------------------------------------------------------------------
# Single fused kernel: conv (Toeplitz matmul) -> maxpool+relu (lane-aligned
# elementwise max) -> linear1 -> relu -> linear2.
# ----------------------------------------------------------------------------
def fused_cnn_kernel(x_ref, wt_ref, bc_ref, w1_ref, b1_ref, w2_ref, b2_ref,
                     o_ref, *, pool, padw):
    hi = jax.lax.Precision.HIGHEST
    # (1) All convs for all batch rows in one MXU matmul; output columns are
    #     already in torch's channel-major flatten order, grouped per pool slot.
    y = jnp.dot(x_ref[...], wt_ref[...],
                preferred_element_type=jnp.float32, precision=hi)
    y = y + bc_ref[...]                                        # [B, pool*padw]

    # (2) MaxPool1d(pool, stride=pool) + ReLU: elementwise max of `pool`
    #     lane-aligned 128-wide slabs (pure VPU work, lane-dense).
    m = y[:, 0:padw]
    for r in range(1, pool):
        m = jnp.maximum(m, y[:, r * padw:(r + 1) * padw])
    m = jnp.maximum(m, 0.0)                                    # [B, padw]

    # (3) MLP head: linear1 -> ReLU -> linear2.
    h = jnp.dot(m, w1_ref[...],
                preferred_element_type=jnp.float32, precision=hi) + b1_ref[...]
    h = jnp.maximum(h, 0.0)
    o_ref[...] = jnp.dot(h, w2_ref[...],
                         preferred_element_type=jnp.float32,
                         precision=hi) + b2_ref[...]


def cnn_forward(x, fused):
    B, S, E = x.shape
    x_flat = x.reshape(B, S * E)          # contiguous metadata reshape, no copy
    NC = fused['w2'].shape[1]
    kernel = functools.partial(fused_cnn_kernel,
                               pool=fused['P'], padw=fused['PADW'])
    vmem = pl.BlockSpec(memory_space=pltpu.MemorySpace.VMEM)
    return pl.pallas_call(
        kernel,
        out_shape=jax.ShapeDtypeStruct((B, NC), jnp.float32),
        in_specs=[vmem] * 7,
        out_specs=vmem,
    )(x_flat, fused['wtoep'], fused['bflat'], fused['w1p'],
      fused['b1'], fused['w2'], fused['b2'])


# ----------------------------------------------------------------------------
# Pure-jnp reference with the original (per-tap conv, flatten, pool) math.
# ----------------------------------------------------------------------------
def ref_forward(x, weights, params):
    B, S, E = x.shape
    C = params['cnn_out_channels']
    P = params['cnn_pool_stride']
    hi = jax.lax.Precision.HIGHEST
    conv_out = []
    for i, fsz in enumerate(params['cnn_filter_sizes']):
        L = out_size(S, fsz, stride=params['cnn_conv_stride'])
        w, b = weights[f'conv{i}_w'], weights[f'conv{i}_b']
        acc = jnp.zeros((B, L, C), jnp.float32)
        for k in range(fsz):
            acc = acc + jnp.einsum('bse,ec->bsc', x[:, k:k + L, :], w[k],
                                   precision=hi)
        y = acc + b[None]
        flat = jnp.transpose(y, (0, 2, 1)).reshape(B, C * L)   # torch NCL .view
        n_win = int(L * C / P)
        pooled = jnp.max(flat[:, :n_win * P].reshape(B, n_win, P), axis=-1)
        conv_out.append(jnp.maximum(pooled, 0.0))
    feats = jnp.concatenate(conv_out, axis=1) if len(conv_out) > 1 else conv_out[0]
    h = jnp.maximum(jnp.dot(feats, weights['w1'], precision=hi) + weights['b1'], 0.0)
    return jnp.dot(h, weights['w2'], precision=hi) + weights['b2']


def xavier_uniform(key, shape, fan_in, fan_out):
    bound = (6.0 / (fan_in + fan_out)) ** 0.5
    return jax.random.uniform(key, shape, jnp.float32, -bound, bound)


if __name__ == "__main__":
    params = {
        'embedding_dim': 32,
        'cnn_out_channels': 8,
        'cnn_filter_sizes': [3, 4],
        'cnn_conv_stride': 1,
        'cnn_pool_stride': 2,
        'sequence_length': 16,
        'cnn_hidden_dim1': 16,
        'classes': 4,
        'cnn_dropout': (0.0, 0.0),   # dropout branches disabled, as in eval
    }
    B, S, E = 2, params['sequence_length'], params['embedding_dim']
    C = params['cnn_out_channels']

    key = jax.random.PRNGKey(0)
    keys = jax.random.split(key, 16)

    # Deterministic parameters (shapes per the module's __init__).
    weights = {}
    pool_total = 0
    for i, fsz in enumerate(params['cnn_filter_sizes']):
        L = out_size(S, fsz, stride=params['cnn_conv_stride'])
        pool_total += int(L * C / params['cnn_pool_stride'])
        # torch Conv1d weight [C, E, fsz] -> stored as [fsz, E, C]
        weights[f'conv{i}_w'] = xavier_uniform(keys[2 * i], (fsz, E, C),
                                               fan_in=E * fsz, fan_out=C * fsz)
        weights[f'conv{i}_b'] = 0.01 * jax.random.normal(keys[2 * i + 1], (1, C),
                                                         jnp.float32)
    H, NC = params['cnn_hidden_dim1'], params['classes']
    # torch Linear weight [out, in] -> stored transposed as [in, out]
    weights['w1'] = xavier_uniform(keys[10], (pool_total, H), pool_total, H)
    weights['b1'] = 0.01 * jax.random.normal(keys[11], (1, H), jnp.float32)
    weights['w2'] = xavier_uniform(keys[12], (H, NC), H, NC)
    weights['b2'] = 0.01 * jax.random.normal(keys[13], (1, NC), jnp.float32)

    # Stand-in for BERT hidden states: [B, S, E]
    x = jax.random.normal(keys[15], (B, S, E), jnp.float32)

    # One-time host-side packing (Toeplitz conv weights, lane-dense pool layout).
    fused = prepare_fused_weights(weights, params, S, E)

    out = cnn_forward(x, fused)
    out = jax.block_until_ready(out)
    ref = ref_forward(x, weights, params)

    assert out.shape == (B, NC), out.shape
    assert jnp.allclose(out, ref, rtol=1e-4, atol=1e-4), "mismatch vs reference"
    print("KERNEL_OK")
</pallas_src>

<mosaic_0001>
module attributes {stable_mosaic.version = 11 : i64} {
  func.func @fused_cnn_kernel(%arg0: memref<2x512xf32, #tpu.memory_space<vmem>>, %arg1: memref<512x256xf32, #tpu.memory_space<vmem>>, %arg2: memref<1x256xf32, #tpu.memory_space<vmem>>, %arg3: memref<128x16xf32, #tpu.memory_space<vmem>>, %arg4: memref<1x16xf32, #tpu.memory_space<vmem>>, %arg5: memref<16x4xf32, #tpu.memory_space<vmem>>, %arg6: memref<1x4xf32, #tpu.memory_space<vmem>>, %arg7: memref<2x4xf32, #tpu.memory_space<vmem>>) attributes {dimension_semantics = [], scalar_prefetch = 0 : i64, scratch_operands = 0 : i64, tpu.core_type = #tpu.core_type<tc>} {
    %c0 = arith.constant 0 : index
    %c0_0 = arith.constant 0 : index
    %0 = vector.load %arg0[%c0, %c0_0] : memref<2x512xf32, #tpu.memory_space<vmem>>, vector<2x512xf32>
    %c0_1 = arith.constant 0 : index
    %c0_2 = arith.constant 0 : index
    %1 = vector.load %arg1[%c0_1, %c0_2] : memref<512x256xf32, #tpu.memory_space<vmem>>, vector<512x256xf32>
    %cst = arith.constant dense<0.000000e+00> : vector<2x256xf32>
    %2 = tpu.matmul %0, %1, %cst {dimension_numbers = #tpu.dot_dimension_numbers<[1], [0], [0], [1], [0, 0, 1, 1], [], []>, precision = #tpu.contract_precision<fp32>} : vector<2x512xf32>, vector<512x256xf32>, vector<2x256xf32> -> vector<2x256xf32>
    %c0_3 = arith.constant 0 : index
    %c0_4 = arith.constant 0 : index
    %3 = vector.load %arg2[%c0_3, %c0_4] : memref<1x256xf32, #tpu.memory_space<vmem>>, vector<1x256xf32>
    %4 = vector.broadcast %3 : vector<1x256xf32> to vector<2x256xf32>
    %5 = arith.addf %2, %4 : vector<2x256xf32>
    %6 = vector.extract_strided_slice %5 {offsets = [0, 0], sizes = [2, 128], strides = [1, 1]} : vector<2x256xf32> to vector<2x128xf32>
    %7 = vector.extract_strided_slice %5 {offsets = [0, 128], sizes = [2, 128], strides = [1, 1]} : vector<2x256xf32> to vector<2x128xf32>
    %8 = arith.maximumf %6, %7 : vector<2x128xf32>
    %cst_5 = arith.constant 0.000000e+00 : f32
    %9 = vector.broadcast %cst_5 : f32 to vector<2x128xf32>
    %10 = arith.maximumf %8, %9 : vector<2x128xf32>
    %c0_6 = arith.constant 0 : index
    %c0_7 = arith.constant 0 : index
    %11 = vector.load %arg3[%c0_6, %c0_7] : memref<128x16xf32, #tpu.memory_space<vmem>>, vector<128x16xf32>
    %cst_8 = arith.constant dense<0.000000e+00> : vector<2x16xf32>
    %12 = tpu.matmul %10, %11, %cst_8 {dimension_numbers = #tpu.dot_dimension_numbers<[1], [0], [0], [1], [0, 0, 1, 1], [], []>, precision = #tpu.contract_precision<fp32>} : vector<2x128xf32>, vector<128x16xf32>, vector<2x16xf32> -> vector<2x16xf32>
    %c0_9 = arith.constant 0 : index
    %c0_10 = arith.constant 0 : index
    %13 = vector.load %arg4[%c0_9, %c0_10] : memref<1x16xf32, #tpu.memory_space<vmem>>, vector<1x16xf32>
    %14 = vector.broadcast %13 : vector<1x16xf32> to vector<2x16xf32>
    %15 = arith.addf %12, %14 : vector<2x16xf32>
    %cst_11 = arith.constant 0.000000e+00 : f32
    %16 = vector.broadcast %cst_11 : f32 to vector<2x16xf32>
    %17 = arith.maximumf %15, %16 : vector<2x16xf32>
    %c0_12 = arith.constant 0 : index
    %c0_13 = arith.constant 0 : index
    %18 = vector.load %arg5[%c0_12, %c0_13] : memref<16x4xf32, #tpu.memory_space<vmem>>, vector<16x4xf32>
    %cst_14 = arith.constant dense<0.000000e+00> : vector<2x4xf32>
    %19 = tpu.matmul %17, %18, %cst_14 {dimension_numbers = #tpu.dot_dimension_numbers<[1], [0], [0], [1], [0, 0, 1, 1], [], []>, precision = #tpu.contract_precision<fp32>} : vector<2x16xf32>, vector<16x4xf32>, vector<2x4xf32> -> vector<2x4xf32>
    %c0_15 = arith.constant 0 : index
    %c0_16 = arith.constant 0 : index
    %20 = vector.load %arg6[%c0_15, %c0_16] : memref<1x4xf32, #tpu.memory_space<vmem>>, vector<1x4xf32>
    %21 = vector.broadcast %20 : vector<1x4xf32> to vector<2x4xf32>
    %22 = arith.addf %19, %21 : vector<2x4xf32>
    %c0_17 = arith.constant 0 : index
    %c0_18 = arith.constant 0 : index
    %23 = vector.load %arg7[%c0_17, %c0_18] : memref<2x4xf32, #tpu.memory_space<vmem>>, vector<2x4xf32>
    tpu.vector_store %arg7[%c0_17, %c0_18], %22 {strides = array<i32>} : memref<2x4xf32, #tpu.memory_space<vmem>>, vector<2x4xf32>,
    return
  }
}

</mosaic_0001>

<llo_original>
// kernel: tpu_custom_call.1
$region0: #{tpu_custom_call.1}
  #allocation0 [shape = 'u32[]', space=smem, size = 0x4, offset = 0x4, fixed_abs, tag = 'smem constant byte address 0x4 - core index']
  #allocation1 [shape = 'u32[144,128]{1,0:T(1,128)}', space=vmem, size = 0x12000, scoped, tag = 'internal scratch']
  %s0 = inlined_call_operand.vmem [shape: f32[2,512], index: 0, kind: input, shape index: {}]
  %s1 = inlined_call_operand.hbm [shape: f32[512,256], index: 1, kind: input, shape index: {}]
  %s2 = inlined_call_operand.vmem [shape: f32[1,256], index: 2, kind: input, shape index: {}]
  %s3 = inlined_call_operand.vmem [shape: f32[128,16], index: 3, kind: input, shape index: {}]
  %s4 = inlined_call_operand.vmem [shape: f32[1,16], index: 4, kind: input, shape index: {}]
  %s5 = inlined_call_operand.vmem [shape: f32[16,4], index: 5, kind: input, shape index: {}]
  %s6 = inlined_call_operand.vmem [shape: f32[1,4], index: 6, kind: input, shape index: {}]
  %s7 = inlined_call_operand.hbm [shape: f32[2,4], index: 7, kind: output, shape index: {}]
  %s8 = sld [smem:[#allocation0]]
  $region42: #{tpu_custom_call.1} parent=0
    _
  %s10 = ssub.s32 1, %s8
  %s11 = scalar_select 0, %s10, %s8
  $region1: #{tpu_custom_call.1} parent=0
    #allocation2 [shape = 'u8[524288]{0}', space=vmem, size = 0x80000, scoped, tag = 'input window, operand 1, single buffered']
    #allocation3 [shape = 's32[1]{0}', space=sflag, size = 0x4, scoped, tag = 'scoped memory for tpu_custom_call.1']
    #allocation4 [shape = 's32[1]{0}', space=sflag, size = 0x4, scoped, tag = 'scoped memory for tpu_custom_call.1']
    #allocation5 [shape = 'u8[1024]{0}', space=vmem, size = 0x400, scoped, tag = 'output window, operand 0, single buffered']
    %12 = vsyncpa [#allocation3], 0
    %13 = vsyncpa [#allocation4], 0
    // Predicated region
    $region2: #{tpu_custom_call.1} parent=1 // pred_check
      _
    $region3: #{tpu_custom_call.1} parent=1 // pred_check_branch
      %15 = sbr.rel (0) target = $region5
    $region4: #{tpu_custom_call.1} parent=1 // pred_region
      _
    $region5: #{tpu_custom_call.1} parent=1 // pred_fallthru
      _
    // Predicated region
    $region6: #{tpu_custom_call.1} parent=1 // pred_check
      _
    $region7: #{tpu_custom_call.1} parent=1 // pred_check_branch
      %17 = sbr.rel (0) target = $region9
    $region8: #{tpu_custom_call.1} parent=1 // pred_region
      %s19 = ssub.s32 16384, 16384
      %20 = vsyncadd [#allocation3], %s19
      %s21 = sshll.u32 [#allocation2], 4
      %s22 = int_to_ptr.vmem [resolvable:$true] %s21
      %27 = dma.hbm_to_vmem [thread:$0]  %s1, 16384, %s22, [#allocation3], 256, 256, 16
    $region9: #{tpu_custom_call.1} parent=1 // pred_fallthru
      _
    // Predicated region
    $region10: #{tpu_custom_call.1} parent=1 // pred_check
      _
    $region11: #{tpu_custom_call.1} parent=1 // pred_check_branch
      %29 = sbr.rel (0) target = $region13
    $region12: #{tpu_custom_call.1} parent=1 // pred_region
      _
    $region13: #{tpu_custom_call.1} parent=1 // pred_fallthru
      _
    // Predicated region
    $region14: #{tpu_custom_call.1} parent=1 // pred_check
      _
    $region15: #{tpu_custom_call.1} parent=1 // pred_check_branch
      %31 = sbr.rel (0) target = $region17
    $region16: #{tpu_custom_call.1} parent=1 // pred_region
      _
    $region17: #{tpu_custom_call.1} parent=1 // pred_fallthru
      _
    // Predicated region
    $region18: #{tpu_custom_call.1} parent=1 // pred_check
      _
    $region19: #{tpu_custom_call.1} parent=1 // pred_check_branch
      %33 = sbr.rel (0) target = $region21
    $region20: #{tpu_custom_call.1} parent=1 // pred_region
      _
    $region21: #{tpu_custom_call.1} parent=1 // pred_fallthru
      _
    // Predicated region
    $region22: #{tpu_custom_call.1} parent=1 // pred_check
      _
    $region23: #{tpu_custom_call.1} parent=1 // pred_check_branch
      %35 = sbr.rel (0) target = $region25
    $region24: #{tpu_custom_call.1} parent=1 // pred_region
      _
    $region25: #{tpu_custom_call.1} parent=1 // pred_fallthru
      _
    // Predicated region
    $region26: #{tpu_custom_call.1} parent=1 // pred_check
      _
    $region27: #{tpu_custom_call.1} parent=1 // pred_check_branch
      %37 = sbr.rel (0) target = $region29
    $region28: #{tpu_custom_call.1} parent=1 // pred_region
      _
    $region29: #{tpu_custom_call.1} parent=1 // pred_fallthru
      _
    // Predicated region
    $region30: #{tpu_custom_call.1} parent=1 // pred_check
      _
    $region31: #{tpu_custom_call.1} parent=1 // pred_check_branch
      %39 = sbr.rel (0) target = $region33
    $region32: #{tpu_custom_call.1} parent=1 // pred_region
      %40 = dma.done [#allocation3], 16384
    $region33: #{tpu_custom_call.1} parent=1 // pred_fallthru
      _
    %v41 = vld [vmem:[%s0] sm:$0xff]
    %v42 = vld [vmem:[#allocation2] sm:$0xff]
    %v43 = vld [vmem:[#allocation2 + $0x8] sm:$0xff]
    %v44 = vld [vmem:[#allocation2 + $0x10] sm:$0xff]
    %v45 = vld [vmem:[#allocation2 + $0x18] sm:$0xff]
    %v46 = vld [vmem:[#allocation2 + $0x20] sm:$0xff]
    %v47 = vld [vmem:[#allocation2 + $0x28] sm:$0xff]
    %v48 = vld [vmem:[#allocation2 + $0x30] sm:$0xff]
    %v49 = vld [vmem:[#allocation2 + $0x38] sm:$0xff]
    %v50 = vld [vmem:[#allocation2 + $0x40] sm:$0xff]
    %v51 = vld [vmem:[#allocation2 + $0x48] sm:$0xff]
    %v52 = vld [vmem:[#allocation2 + $0x50] sm:$0xff]
    %v53 = vld [vmem:[#allocation2 + $0x58] sm:$0xff]
    %v54 = vld [vmem:[#allocation2 + $0x60] sm:$0xff]
    %v55 = vld [vmem:[#allocation2 + $0x68] sm:$0xff]
    %v56 = vld [vmem:[#allocation2 + $0x70] sm:$0xff]
    %v57 = vld [vmem:[#allocation2 + $0x78] sm:$0xff]
    %v58 = vld [vmem:[#allocation2 + $0x80] sm:$0xff]
    %v59 = vld [vmem:[#allocation2 + $0x88] sm:$0xff]
    %v60 = vld [vmem:[#allocation2 + $0x90] sm:$0xff]
    %v61 = vld [vmem:[#allocation2 + $0x98] sm:$0xff]
    %v62 = vld [vmem:[#allocation2 + $0xa0] sm:$0xff]
    %v63 = vld [vmem:[#allocation2 + $0xa8] sm:$0xff]
    %v64 = vld [vmem:[#allocation2 + $0xb0] sm:$0xff]
    %v65 = vld [vmem:[#allocation2 + $0xb8] sm:$0xff]
    %v66 = vld [vmem:[#allocation2 + $0xc0] sm:$0xff]
    %v67 = vld [vmem:[#allocation2 + $0xc8] sm:$0xff]
    %v68 = vld [vmem:[#allocation2 + $0xd0] sm:$0xff]
    %v69 = vld [vmem:[#allocation2 + $0xd8] sm:$0xff]
    %v70 = vld [vmem:[#allocation2 + $0xe0] sm:$0xff]
    %v71 = vld [vmem:[#allocation2 + $0xe8] sm:$0xff]
    %v72 = vld [vmem:[#allocation2 + $0xf0] sm:$0xff]
    %v73 = vld [vmem:[#allocation2 + $0xf8] sm:$0xff]
    %v74 = vld [vmem:[#allocation2 + $0x100] sm:$0xff]
    %v75 = vld [vmem:[#allocation2 + $0x108] sm:$0xff]
    %v76 = vld [vmem:[#allocation2 + $0x110] sm:$0xff]
    %v77 = vld [vmem:[#allocation2 + $0x118] sm:$0xff]
    %v78 = vld [vmem:[#allocation2 + $0x120] sm:$0xff]
    %v79 = vld [vmem:[#allocation2 + $0x128] sm:$0xff]
    %v80 = vld [vmem:[#allocation2 + $0x130] sm:$0xff]
    %v81 = vld [vmem:[#allocation2 + $0x138] sm:$0xff]
    %v82 = vld [vmem:[#allocation2 + $0x140] sm:$0xff]
    %v83 = vld [vmem:[#allocation2 + $0x148] sm:$0xff]
    %v84 = vld [vmem:[#allocation2 + $0x150] sm:$0xff]
    %v85 = vld [vmem:[#allocation2 + $0x158] sm:$0xff]
    %v86 = vld [vmem:[#allocation2 + $0x160] sm:$0xff]
    %v87 = vld [vmem:[#allocation2 + $0x168] sm:$0xff]
    %v88 = vld [vmem:[#allocation2 + $0x170] sm:$0xff]
    %v89 = vld [vmem:[#allocation2 + $0x178] sm:$0xff]
    %v90 = vld [vmem:[#allocation2 + $0x180] sm:$0xff]
    %v91 = vld [vmem:[#allocation2 + $0x188] sm:$0xff]
    %v92 = vld [vmem:[#allocation2 + $0x190] sm:$0xff]
    %v93 = vld [vmem:[#allocation2 + $0x198] sm:$0xff]
    %v94 = vld [vmem:[#allocation2 + $0x1a0] sm:$0xff]
    %v95 = vld [vmem:[#allocation2 + $0x1a8] sm:$0xff]
    %v96 = vld [vmem:[#allocation2 + $0x1b0] sm:$0xff]
    %v97 = vld [vmem:[#allocation2 + $0x1b8] sm:$0xff]
    %v98 = vld [vmem:[#allocation2 + $0x1c0] sm:$0xff]
    %v99 = vld [vmem:[#allocation2 + $0x1c8] sm:$0xff]
    %v100 = vld [vmem:[#allocation2 + $0x1d0] sm:$0xff]
    %v101 = vld [vmem:[#allocation2 + $0x1d8] sm:$0xff]
    %v102 = vld [vmem:[#allocation2 + $0x1e0] sm:$0xff]
    %v103 = vld [vmem:[#allocation2 + $0x1e8] sm:$0xff]
    %v104 = vld [vmem:[#allocation2 + $0x1f0] sm:$0xff]
    %v105 = vld [vmem:[#allocation2 + $0x1f8] sm:$0xff]
    %v106 = vld [vmem:[#allocation2 + $0x200] sm:$0xff]
    %v107 = vld [vmem:[#allocation2 + $0x208] sm:$0xff]
    %v108 = vld [vmem:[#allocation2 + $0x210] sm:$0xff]
    %v109 = vld [vmem:[#allocation2 + $0x218] sm:$0xff]
    %v110 = vld [vmem:[#allocation2 + $0x220] sm:$0xff]
    %v111 = vld [vmem:[#allocation2 + $0x228] sm:$0xff]
    %v112 = vld [vmem:[#allocation2 + $0x230] sm:$0xff]
    %v113 = vld [vmem:[#allocation2 + $0x238] sm:$0xff]
    %v114 = vld [vmem:[#allocation2 + $0x240] sm:$0xff]
    %v115 = vld [vmem:[#allocation2 + $0x248] sm:$0xff]
    %v116 = vld [vmem:[#allocation2 + $0x250] sm:$0xff]
    %v117 = vld [vmem:[#allocation2 + $0x258] sm:$0xff]
    %v118 = vld [vmem:[#allocation2 + $0x260] sm:$0xff]
    %v119 = vld [vmem:[#allocation2 + $0x268] sm:$0xff]
    %v120 = vld [vmem:[#allocation2 + $0x270] sm:$0xff]
    %v121 = vld [vmem:[#allocation2 + $0x278] sm:$0xff]
    %v122 = vld [vmem:[#allocation2 + $0x280] sm:$0xff]
    %v123 = vld [vmem:[#allocation2 + $0x288] sm:$0xff]
    %v124 = vld [vmem:[#allocation2 + $0x290] sm:$0xff]
    %v125 = vld [vmem:[#allocation2 + $0x298] sm:$0xff]
    %v126 = vld [vmem:[#allocation2 + $0x2a0] sm:$0xff]
    %v127 = vld [vmem:[#allocation2 + $0x2a8] sm:$0xff]
    %v128 = vld [vmem:[#allocation2 + $0x2b0] sm:$0xff]
    %v129 = vld [vmem:[#allocation2 + $0x2b8] sm:$0xff]
    %v130 = vld [vmem:[#allocation2 + $0x2c0] sm:$0xff]
    %v131 = vld [vmem:[#allocation2 + $0x2c8] sm:$0xff]
    %v132 = vld [vmem:[#allocation2 + $0x2d0] sm:$0xff]
    %v133 = vld [vmem:[#allocation2 + $0x2d8] sm:$0xff]
    %v134 = vld [vmem:[#allocation2 + $0x2e0] sm:$0xff]
    %v135 = vld [vmem:[#allocation2 + $0x2e8] sm:$0xff]
    %v136 = vld [vmem:[#allocation2 + $0x2f0] sm:$0xff]
    %v137 = vld [vmem:[#allocation2 + $0x2f8] sm:$0xff]
    %v138 = vld [vmem:[#allocation2 + $0x300] sm:$0xff]
    %v139 = vld [vmem:[#allocation2 + $0x308] sm:$0xff]
    %v140 = vld [vmem:[#allocation2 + $0x310] sm:$0xff]
    %v141 = vld [vmem:[#allocation2 + $0x318] sm:$0xff]
    %v142 = vld [vmem:[#allocation2 + $0x320] sm:$0xff]
    %v143 = vld [vmem:[#allocation2 + $0x328] sm:$0xff]
    %v144 = vld [vmem:[#allocation2 + $0x330] sm:$0xff]
    %v145 = vld [vmem:[#allocation2 + $0x338] sm:$0xff]
    %v146 = vld [vmem:[#allocation2 + $0x340] sm:$0xff]
    %v147 = vld [vmem:[#allocation2 + $0x348] sm:$0xff]
    %v148 = vld [vmem:[#allocation2 + $0x350] sm:$0xff]
    %v149 = vld [vmem:[#allocation2 + $0x358] sm:$0xff]
    %v150 = vld [vmem:[#allocation2 + $0x360] sm:$0xff]
    %v151 = vld [vmem:[#allocation2 + $0x368] sm:$0xff]
    %v152 = vld [vmem:[#allocation2 + $0x370] sm:$0xff]
    %v153 = vld [vmem:[#allocation2 + $0x378] sm:$0xff]
    %v154 = vld [vmem:[#allocation2 + $0x380] sm:$0xff]
    %v155 = vld [vmem:[#allocation2 + $0x388] sm:$0xff]
    %v156 = vld [vmem:[#allocation2 + $0x390] sm:$0xff]
    %v157 = vld [vmem:[#allocation2 + $0x398] sm:$0xff]
    %v158 = vld [vmem:[#allocation2 + $0x3a0] sm:$0xff]
    %v159 = vld [vmem:[#allocation2 + $0x3a8] sm:$0xff]
    %v160 = vld [vmem:[#allocation2 + $0x3b0] sm:$0xff]
    %v161 = vld [vmem:[#allocation2 + $0x3b8] sm:$0xff]
    %v162 = vld [vmem:[#allocation2 + $0x3c0] sm:$0xff]
    %v163 = vld [vmem:[#allocation2 + $0x3c8] sm:$0xff]
    %v164 = vld [vmem:[#allocation2 + $0x3d0] sm:$0xff]
    %v165 = vld [vmem:[#allocation2 + $0x3d8] sm:$0xff]
    %v166 = vld [vmem:[#allocation2 + $0x3e0] sm:$0xff]
    %v167 = vld [vmem:[#allocation2 + $0x3e8] sm:$0xff]
    %v168 = vld [vmem:[#allocation2 + $0x3f0] sm:$0xff]
    %v169 = vld [vmem:[#allocation2 + $0x3f8] sm:$0xff]
    %v170 = vld [vmem:[%s2] sm:$0x3]
    %v172 = vlaneseq
    %v173 = vshrl.u32 %v172, 7
    %v174 = vsub.s32 0, %v173
    %v175 = vrot.slane %v170, %v174
    %v176 = vlaneseq
    %v177 = vshrl.u32 %v176, 7
    %v178 = vsub.s32 1, %v177
    %v179 = vrot.slane %v170, %v178
    %v183 = vcombine.high %v41, %v41
    %v185 = vunpack.c.l.s4 1983009808
    %v186 = vunpack.c.0.s8 %v185
    %v187 = vlaneseq
    %v188 = vshrl.u32 %v187, 7
    %v189 = vsub.s32 %v186, %v188
    %v190 = vrot.slane %v41, %v189
    %v192 = vunpack.c.l.s4 1983009808
    %v193 = vunpack.c.0.s8 %v192
    %v194 = vlaneseq
    %v195 = vshrl.u32 %v194, 7
    %v196 = vsub.s32 %v193, %v195
    %v197 = vrot.slane %v183, %v196
    %v198 = vcombine.high %v190, %v190
    %v199 = vcombine.high %v197, %v197
    %v204 = vand.u32 %v43, 4294901760
    %205 = vmatprep.subr.mxu0 %v204
    %v206 = vand.u32 %v42, 4294901760
    %207 = vmatpush1.msra.mxu0 %v206
    %v208 = vand.u32 %v45, 4294901760
    %209 = vmatprep.subr.mxu0 %v208
    %v210 = vand.u32 %v44, 4294901760
    %211 = vmatpush1.msra.mxu0 %v210
    %v212 = vand.u32 %v47, 4294901760
    %213 = vmatprep.subr.mxu0 %v212
    %v214 = vand.u32 %v46, 4294901760
    %215 = vmatpush1.msra.mxu0 %v214
    %v216 = vand.u32 %v49, 4294901760
    %217 = vmatprep.subr.mxu0 %v216
    %v218 = vand.u32 %v48, 4294901760
    %219 = vmatpush1.msra.mxu0 %v218
    %v220 = vand.u32 %v51, 4294901760
    %221 = vmatprep.subr.mxu0 %v220
    %v222 = vand.u32 %v50, 4294901760
    %223 = vmatpush1.msra.mxu0 %v222
    %v224 = vand.u32 %v53, 4294901760
    %225 = vmatprep.subr.mxu0 %v224
    %v226 = vand.u32 %v52, 4294901760
    %227 = vmatpush1.msra.mxu0 %v226
    %v228 = vand.u32 %v55, 4294901760
    %229 = vmatprep.subr.mxu0 %v228
    %v230 = vand.u32 %v54, 4294901760
    %231 = vmatpush1.msra.mxu0 %v230
    %v232 = vand.u32 %v57, 4294901760
    %233 = vmatprep.subr.mxu0 %v232
    %v234 = vand.u32 %v56, 4294901760
    %235 = vmatpush1.msra.mxu0 %v234
    %v236 = vand.u32 %v59, 4294901760
    %237 = vmatprep.subr.mxu0 %v236
    %v238 = vand.u32 %v58, 4294901760
    %239 = vmatpush1.msra.mxu0 %v238
    %v240 = vand.u32 %v61, 4294901760
    %241 = vmatprep.subr.mxu0 %v240
    %v242 = vand.u32 %v60, 4294901760
    %243 = vmatpush1.msra.mxu0 %v242
    %v244 = vand.u32 %v63, 4294901760
    %245 = vmatprep.subr.mxu0 %v244
    %v246 = vand.u32 %v62, 4294901760
    %247 = vmatpush1.msra.mxu0 %v246
    %v248 = vand.u32 %v65, 4294901760
    %249 = vmatprep.subr.mxu0 %v248
    %v250 = vand.u32 %v64, 4294901760
    %251 = vmatpush1.msra.mxu0 %v250
    %v252 = vand.u32 %v67, 4294901760
    %253 = vmatprep.subr.mxu0 %v252
    %v254 = vand.u32 %v66, 4294901760
    %255 = vmatpush1.msra.mxu0 %v254
    %v256 = vand.u32 %v69, 4294901760
    %257 = vmatprep.subr.mxu0 %v256
    %v258 = vand.u32 %v68, 4294901760
    %259 = vmatpush1.msra.mxu0 %v258
    %v260 = vand.u32 %v71, 4294901760
    %261 = vmatprep.subr.mxu0 %v260
    %v262 = vand.u32 %v70, 4294901760
    %263 = vmatpush1.msra.mxu0 %v262
    %v264 = vand.u32 %v73, 4294901760
    %265 = vmatprep.subr.mxu0 %v264
    %v266 = vand.u32 %v72, 4294901760
    %267 = vmatpush1.msra.mxu0 %v266
    %v268 = vand.u32 %v75, 4294901760
    %269 = vmatprep.subr.mxu0 %v268
    %v270 = vand.u32 %v74, 4294901760
    %271 = vmatpush1.msra.mxu0 %v270
    %v272 = vand.u32 %v77, 4294901760
    %273 = vmatprep.subr.mxu0 %v272
    %v274 = vand.u32 %v76, 4294901760
    %275 = vmatpush1.msra.mxu0 %v274
    %v276 = vand.u32 %v79, 4294901760
    %277 = vmatprep.subr.mxu0 %v276
    %v278 = vand.u32 %v78, 4294901760
    %279 = vmatpush1.msra.mxu0 %v278
    %v280 = vand.u32 %v81, 4294901760
    %281 = vmatprep.subr.mxu0 %v280
    %v282 = vand.u32 %v80, 4294901760
    %283 = vmatpush1.msra.mxu0 %v282
    %v284 = vand.u32 %v83, 4294901760
    %285 = vmatprep.subr.mxu0 %v284
    %v286 = vand.u32 %v82, 4294901760
    %287 = vmatpush1.msra.mxu0 %v286
    %v288 = vand.u32 %v85, 4294901760
    %289 = vmatprep.subr.mxu0 %v288
    %v290 = vand.u32 %v84, 4294901760
    %291 = vmatpush1.msra.mxu0 %v290
    %v292 = vand.u32 %v87, 4294901760
    %293 = vmatprep.subr.mxu0 %v292
    %v294 = vand.u32 %v86, 4294901760
    %295 = vmatpush1.msra.mxu0 %v294
    %v296 = vand.u32 %v89, 4294901760
    %297 = vmatprep.subr.mxu0 %v296
    %v298 = vand.u32 %v88, 4294901760
    %299 = vmatpush1.msra.mxu0 %v298
    %v300 = vand.u32 %v91, 4294901760
    %301 = vmatprep.subr.mxu0 %v300
    %v302 = vand.u32 %v90, 4294901760
    %303 = vmatpush1.msra.mxu0 %v302
    %v304 = vand.u32 %v93, 4294901760
    %305 = vmatprep.subr.mxu0 %v304
    %v306 = vand.u32 %v92, 4294901760
    %307 = vmatpush1.msra.mxu0 %v306
    %v308 = vand.u32 %v95, 4294901760
    %309 = vmatprep.subr.mxu0 %v308
    %v310 = vand.u32 %v94, 4294901760
    %311 = vmatpush1.msra.mxu0 %v310
    %v312 = vand.u32 %v97, 4294901760
    %313 = vmatprep.subr.mxu0 %v312
    %v314 = vand.u32 %v96, 4294901760
    %315 = vmatpush1.msra.mxu0 %v314
    %v316 = vand.u32 %v99, 4294901760
    %317 = vmatprep.subr.mxu0 %v316
    %v318 = vand.u32 %v98, 4294901760
    %319 = vmatpush1.msra.mxu0 %v318
    %v320 = vand.u32 %v101, 4294901760
    %321 = vmatprep.subr.mxu0 %v320
    %v322 = vand.u32 %v100, 4294901760
    %323 = vmatpush1.msra.mxu0 %v322
    %v324 = vand.u32 %v103, 4294901760
    %325 = vmatprep.subr.mxu0 %v324
    %v326 = vand.u32 %v102, 4294901760
    %327 = vmatpush1.msra.mxu0 %v326
    %v328 = vand.u32 %v105, 4294901760
    %329 = vmatprep.subr.mxu0 %v328
    %v330 = vand.u32 %v104, 4294901760
    %331 = vmatpush1.msra.mxu0 %v330
    %v332 = vand.u32 %v198, 4294901760
    %v333 = vsub.f32 %v198, %v332
    %v334 = vand.u32 %v333, 4294901760
    %v335 = vsub.f32 %v333, %v334
    %v336 = vand.u32 %v335, 4294901760
    %337 = vmatprep.mubr.f32.mxu0 %v336
    %v338 = vand.u32 %v190, 4294901760
    %v339 = vsub.f32 %v190, %v338
    %v340 = vand.u32 %v339, 4294901760
    %v341 = vsub.f32 %v339, %v340
    %v342 = vand.u32 %v341, 4294901760
    %343 = vmatmul.mubr.f32.gmra.mrb[0].mxu0 %v342
    %v344 = vpop.f32.mrb[0].mxu0
    %v345 = vadd.f32 %v175, %v344
    %v346 = vpop.f32.mrb[0].mxu0
    %v347 = vadd.f32 %v179, %v346
    %348 = vdwg.mxu0
    %v349 = vand.u32 %v43, 4294901760
    %v350 = vsub.f32 %v43, %v349
    %v351 = vand.u32 %v350, 4294901760
    %v352 = vsub.f32 %v350, %v351
    %v353 = vand.u32 %v352, 4294901760
    %354 = vmatprep.subr.mxu0 %v353
    %v355 = vand.u32 %v42, 4294901760
    %v356 = vsub.f32 %v42, %v355
    %v357 = vand.u32 %v356, 4294901760
    %v358 = vsub.f32 %v356, %v357
    %v359 = vand.u32 %v358, 4294901760
    %360 = vmatpush1.msra.mxu0 %v359
    %v361 = vand.u32 %v45, 4294901760
    %v362 = vsub.f32 %v45, %v361
    %v363 = vand.u32 %v362, 4294901760
    %v364 = vsub.f32 %v362, %v363
    %v365 = vand.u32 %v364, 4294901760
    %366 = vmatprep.subr.mxu0 %v365
    %v367 = vand.u32 %v44, 4294901760
    %v368 = vsub.f32 %v44, %v367
    %v369 = vand.u32 %v368, 4294901760
    %v370 = vsub.f32 %v368, %v369
    %v371 = vand.u32 %v370, 4294901760
    %372 = vmatpush1.msra.mxu0 %v371
    %v373 = vand.u32 %v47, 4294901760
    %v374 = vsub.f32 %v47, %v373
    %v375 = vand.u32 %v374, 4294901760
    %v376 = vsub.f32 %v374, %v375
    %v377 = vand.u32 %v376, 4294901760
    %378 = vmatprep.subr.mxu0 %v377
    %v379 = vand.u32 %v46, 4294901760
    %v380 = vsub.f32 %v46, %v379
    %v381 = vand.u32 %v380, 4294901760
    %v382 = vsub.f32 %v380, %v381
    %v383 = vand.u32 %v382, 4294901760
    %384 = vmatpush1.msra.mxu0 %v383
    %v385 = vand.u32 %v49, 4294901760
    %v386 = vsub.f32 %v49, %v385
    %v387 = vand.u32 %v386, 4294901760
    %v388 = vsub.f32 %v386, %v387
    %v389 = vand.u32 %v388, 4294901760
    %390 = vmatprep.subr.mxu0 %v389
    %v391 = vand.u32 %v48, 4294901760
    %v392 = vsub.f32 %v48, %v391
    %v393 = vand.u32 %v392, 4294901760
    %v394 = vsub.f32 %v392, %v393
    %v395 = vand.u32 %v394, 4294901760
    %396 = vmatpush1.msra.mxu0 %v395
    %v397 = vand.u32 %v51, 4294901760
    %v398 = vsub.f32 %v51, %v397
    %v399 = vand.u32 %v398, 4294901760
    %v400 = vsub.f32 %v398, %v399
    %v401 = vand.u32 %v400, 4294901760
    %402 = vmatprep.subr.mxu0 %v401
    %v403 = vand.u32 %v50, 4294901760
    %v404 = vsub.f32 %v50, %v403
    %v405 = vand.u32 %v404, 4294901760
    %v406 = vsub.f32 %v404, %v405
    %v407 = vand.u32 %v406, 4294901760
    %408 = vmatpush1.msra.mxu0 %v407
    %v409 = vand.u32 %v53, 4294901760
    %v410 = vsub.f32 %v53, %v409
    %v411 = vand.u32 %v410, 4294901760
    %v412 = vsub.f32 %v410, %v411
    %v413 = vand.u32 %v412, 4294901760
    %414 = vmatprep.subr.mxu0 %v413
    %v415 = vand.u32 %v52, 4294901760
    %v416 = vsub.f32 %v52, %v415
    %v417 = vand.u32 %v416, 4294901760
    %v418 = vsub.f32 %v416, %v417
    %v419 = vand.u32 %v418, 4294901760
    %420 = vmatpush1.msra.mxu0 %v419
    %v421 = vand.u32 %v55, 4294901760
    %v422 = vsub.f32 %v55, %v421
    %v423 = vand.u32 %v422, 4294901760
    %v424 = vsub.f32 %v422, %v423
    %v425 = vand.u32 %v424, 4294901760
    %426 = vmatprep.subr.mxu0 %v425
    %v427 = vand.u32 %v54, 4294901760
    %v428 = vsub.f32 %v54, %v427
    %v429 = vand.u32 %v428, 4294901760
    %v430 = vsub.f32 %v428, %v429
    %v431 = vand.u32 %v430, 4294901760
    %432 = vmatpush1.msra.mxu0 %v431
    %v433 = vand.u32 %v57, 4294901760
    %v434 = vsub.f32 %v57, %v433
    %v435 = vand.u32 %v434, 4294901760
    %v436 = vsub.f32 %v434, %v435
    %v437 = vand.u32 %v436, 4294901760
    %438 = vmatprep.subr.mxu0 %v437
    %v439 = vand.u32 %v56, 4294901760
    %v440 = vsub.f32 %v56, %v439
    %v441 = vand.u32 %v440, 4294901760
    %v442 = vsub.f32 %v440, %v441
    %v443 = vand.u32 %v442, 4294901760
    %444 = vmatpush1.msra.mxu0 %v443
    %v445 = vand.u32 %v59, 4294901760
    %v446 = vsub.f32 %v59, %v445
    %v447 = vand.u32 %v446, 4294901760
    %v448 = vsub.f32 %v446, %v447
    %v449 = vand.u32 %v448, 4294901760
    %450 = vmatprep.subr.mxu0 %v449
    %v451 = vand.u32 %v58, 4294901760
    %v452 = vsub.f32 %v58, %v451
    %v453 = vand.u32 %v452, 4294901760
    %v454 = vsub.f32 %v452, %v453
    %v455 = vand.u32 %v454, 4294901760
    %456 = vmatpush1.msra.mxu0 %v455
    %v457 = vand.u32 %v61, 4294901760
    %v458 = vsub.f32 %v61, %v457
    %v459 = vand.u32 %v458, 4294901760
    %v460 = vsub.f32 %v458, %v459
    %v461 = vand.u32 %v460, 4294901760
    %462 = vmatprep.subr.mxu0 %v461
    %v463 = vand.u32 %v60, 4294901760
    %v464 = vsub.f32 %v60, %v463
    %v465 = vand.u32 %v464, 4294901760
    %v466 = vsub.f32 %v464, %v465
    %v467 = vand.u32 %v466, 4294901760
    %468 = vmatpush1.msra.mxu0 %v467
    %v469 = vand.u32 %v63, 4294901760
    %v470 = vsub.f32 %v63, %v469
    %v471 = vand.u32 %v470, 4294901760
    %v472 = vsub.f32 %v470, %v471
    %v473 = vand.u32 %v472, 4294901760
    %474 = vmatprep.subr.mxu0 %v473
    %v475 = vand.u32 %v62, 4294901760
    %v476 = vsub.f32 %v62, %v475
    %v477 = vand.u32 %v476, 4294901760
    %v478 = vsub.f32 %v476, %v477
    %v479 = vand.u32 %v478, 4294901760
    %480 = vmatpush1.msra.mxu0 %v479
    %v481 = vand.u32 %v65, 4294901760
    %v482 = vsub.f32 %v65, %v481
    %v483 = vand.u32 %v482, 4294901760
    %v484 = vsub.f32 %v482, %v483
    %v485 = vand.u32 %v484, 4294901760
    %486 = vmatprep.subr.mxu0 %v485
    %v487 = vand.u32 %v64, 4294901760
    %v488 = vsub.f32 %v64, %v487
    %v489 = vand.u32 %v488, 4294901760
    %v490 = vsub.f32 %v488, %v489
    %v491 = vand.u32 %v490, 4294901760
    %492 = vmatpush1.msra.mxu0 %v491
    %v493 = vand.u32 %v67, 4294901760
    %v494 = vsub.f32 %v67, %v493
    %v495 = vand.u32 %v494, 4294901760
    %v496 = vsub.f32 %v494, %v495
    %v497 = vand.u32 %v496, 4294901760
    %498 = vmatprep.subr.mxu0 %v497
    %v499 = vand.u32 %v66, 4294901760
    %v500 = vsub.f32 %v66, %v499
    %v501 = vand.u32 %v500, 4294901760
    %v502 = vsub.f32 %v500, %v501
    %v503 = vand.u32 %v502, 4294901760
    %504 = vmatpush1.msra.mxu0 %v503
    %v505 = vand.u32 %v69, 4294901760
    %v506 = vsub.f32 %v69, %v505
    %v507 = vand.u32 %v506, 4294901760
    %v508 = vsub.f32 %v506, %v507
    %v509 = vand.u32 %v508, 4294901760
    %510 = vmatprep.subr.mxu0 %v509
    %v511 = vand.u32 %v68, 4294901760
    %v512 = vsub.f32 %v68, %v511
    %v513 = vand.u32 %v512, 4294901760
    %v514 = vsub.f32 %v512, %v513
    %v515 = vand.u32 %v514, 4294901760
    %516 = vmatpush1.msra.mxu0 %v515
    %v517 = vand.u32 %v71, 4294901760
    %v518 = vsub.f32 %v71, %v517
    %v519 = vand.u32 %v518, 4294901760
    %v520 = vsub.f32 %v518, %v519
    %v521 = vand.u32 %v520, 4294901760
    %522 = vmatprep.subr.mxu0 %v521
    %v523 = vand.u32 %v70, 4294901760
    %v524 = vsub.f32 %v70, %v523
    %v525 = vand.u32 %v524, 4294901760
    %v526 = vsub.f32 %v524, %v525
    %v527 = vand.u32 %v526, 4294901760
    %528 = vmatpush1.msra.mxu0 %v527
    %v529 = vand.u32 %v73, 4294901760
    %v530 = vsub.f32 %v73, %v529
    %v531 = vand.u32 %v530, 4294901760
    %v532 = vsub.f32 %v530, %v531
    %v533 = vand.u32 %v532, 4294901760
    %534 = vmatprep.subr.mxu0 %v533
    %v535 = vand.u32 %v72, 4294901760
    %v536 = vsub.f32 %v72, %v535
    %v537 = vand.u32 %v536, 4294901760
    %v538 = vsub.f32 %v536, %v537
    %v539 = vand.u32 %v538, 4294901760
    %540 = vmatpush1.msra.mxu0 %v539
    %v541 = vand.u32 %v75, 4294901760
    %v542 = vsub.f32 %v75, %v541
    %v543 = vand.u32 %v542, 4294901760
    %v544 = vsub.f32 %v542, %v543
    %v545 = vand.u32 %v544, 4294901760
    %546 = vmatprep.subr.mxu0 %v545
    %v547 = vand.u32 %v74, 4294901760
    %v548 = vsub.f32 %v74, %v547
    %v549 = vand.u32 %v548, 4294901760
    %v550 = vsub.f32 %v548, %v549
    %v551 = vand.u32 %v550, 4294901760
    %552 = vmatpush1.msra.mxu0 %v551
    %v553 = vand.u32 %v77, 4294901760
    %v554 = vsub.f32 %v77, %v553
    %v555 = vand.u32 %v554, 4294901760
    %v556 = vsub.f32 %v554, %v555
    %v557 = vand.u32 %v556, 4294901760
    %558 = vmatprep.subr.mxu0 %v557
    %v559 = vand.u32 %v76, 4294901760
    %v560 = vsub.f32 %v76, %v559
    %v561 = vand.u32 %v560, 4294901760
    %v562 = vsub.f32 %v560, %v561
    %v563 = vand.u32 %v562, 4294901760
    %564 = vmatpush1.msra.mxu0 %v563
    %v565 = vand.u32 %v79, 4294901760
    %v566 = vsub.f32 %v79, %v565
    %v567 = vand.u32 %v566, 4294901760
    %v568 = vsub.f32 %v566, %v567
    %v569 = vand.u32 %v568, 4294901760
    %570 = vmatprep.subr.mxu0 %v569
    %v571 = vand.u32 %v78, 4294901760
    %v572 = vsub.f32 %v78, %v571
    %v573 = vand.u32 %v572, 4294901760
    %v574 = vsub.f32 %v572, %v573
    %v575 = vand.u32 %v574, 4294901760
    %576 = vmatpush1.msra.mxu0 %v575
    %v577 = vand.u32 %v81, 4294901760
    %v578 = vsub.f32 %v81, %v577
    %v579 = vand.u32 %v578, 4294901760
    %v580 = vsub.f32 %v578, %v579
    %v581 = vand.u32 %v580, 4294901760
    %582 = vmatprep.subr.mxu0 %v581
    %v583 = vand.u32 %v80, 4294901760
    %v584 = vsub.f32 %v80, %v583
    %v585 = vand.u32 %v584, 4294901760
    %v586 = vsub.f32 %v584, %v585
    %v587 = vand.u32 %v586, 4294901760
    %588 = vmatpush1.msra.mxu0 %v587
    %v589 = vand.u32 %v83, 4294901760
    %v590 = vsub.f32 %v83, %v589
    %v591 = vand.u32 %v590, 4294901760
    %v592 = vsub.f32 %v590, %v591
    %v593 = vand.u32 %v592, 4294901760
    %594 = vmatprep.subr.mxu0 %v593
    %v595 = vand.u32 %v82, 4294901760
    %v596 = vsub.f32 %v82, %v595
    %v597 = vand.u32 %v596, 4294901760
    %v598 = vsub.f32 %v596, %v597
    %v599 = vand.u32 %v598, 4294901760
    %600 = vmatpush1.msra.mxu0 %v599
    %v601 = vand.u32 %v85, 4294901760
    %v602 = vsub.f32 %v85, %v601
    %v603 = vand.u32 %v602, 4294901760
    %v604 = vsub.f32 %v602, %v603
    %v605 = vand.u32 %v604, 4294901760
    %606 = vmatprep.subr.mxu0 %v605
    %v607 = vand.u32 %v84, 4294901760
    %v608 = vsub.f32 %v84, %v607
    %v609 = vand.u32 %v608, 4294901760
    %v610 = vsub.f32 %v608, %v609
    %v611 = vand.u32 %v610, 4294901760
    %612 = vmatpush1.msra.mxu0 %v611
    %v613 = vand.u32 %v87, 4294901760
    %v614 = vsub.f32 %v87, %v613
    %v615 = vand.u32 %v614, 4294901760
    %v616 = vsub.f32 %v614, %v615
    %v617 = vand.u32 %v616, 4294901760
    %618 = vmatprep.subr.mxu0 %v617
    %v619 = vand.u32 %v86, 4294901760
    %v620 = vsub.f32 %v86, %v619
    %v621 = vand.u32 %v620, 4294901760
    %v622 = vsub.f32 %v620, %v621
    %v623 = vand.u32 %v622, 4294901760
    %624 = vmatpush1.msra.mxu0 %v623
    %v625 = vand.u32 %v89, 4294901760
    %v626 = vsub.f32 %v89, %v625
    %v627 = vand.u32 %v626, 4294901760
    %v628 = vsub.f32 %v626, %v627
    %v629 = vand.u32 %v628, 4294901760
    %630 = vmatprep.subr.mxu0 %v629
    %v631 = vand.u32 %v88, 4294901760
    %v632 = vsub.f32 %v88, %v631
    %v633 = vand.u32 %v632, 4294901760
    %v634 = vsub.f32 %v632, %v633
    %v635 = vand.u32 %v634, 4294901760
    %636 = vmatpush1.msra.mxu0 %v635
    %v637 = vand.u32 %v91, 4294901760
    %v638 = vsub.f32 %v91, %v637
    %v639 = vand.u32 %v638, 4294901760
    %v640 = vsub.f32 %v638, %v639
    %v641 = vand.u32 %v640, 4294901760
    %642 = vmatprep.subr.mxu0 %v641
    %v643 = vand.u32 %v90, 4294901760
    %v644 = vsub.f32 %v90, %v643
    %v645 = vand.u32 %v644, 4294901760
    %v646 = vsub.f32 %v644, %v645
    %v647 = vand.u32 %v646, 4294901760
    %648 = vmatpush1.msra.mxu0 %v647
    %v649 = vand.u32 %v93, 4294901760
    %v650 = vsub.f32 %v93, %v649
    %v651 = vand.u32 %v650, 4294901760
    %v652 = vsub.f32 %v650, %v651
    %v653 = vand.u32 %v652, 4294901760
    %654 = vmatprep.subr.mxu0 %v653
    %v655 = vand.u32 %v92, 4294901760
    %v656 = vsub.f32 %v92, %v655
    %v657 = vand.u32 %v656, 4294901760
    %v658 = vsub.f32 %v656, %v657
    %v659 = vand.u32 %v658, 4294901760
    %660 = vmatpush1.msra.mxu0 %v659
    %v661 = vand.u32 %v95, 4294901760
    %v662 = vsub.f32 %v95, %v661
    %v663 = vand.u32 %v662, 4294901760
    %v664 = vsub.f32 %v662, %v663
    %v665 = vand.u32 %v664, 4294901760
    %666 = vmatprep.subr.mxu0 %v665
    %v667 = vand.u32 %v94, 4294901760
    %v668 = vsub.f32 %v94, %v667
    %v669 = vand.u32 %v668, 4294901760
    %v670 = vsub.f32 %v668, %v669
    %v671 = vand.u32 %v670, 4294901760
    %672 = vmatpush1.msra.mxu0 %v671
    %v673 = vand.u32 %v97, 4294901760
    %v674 = vsub.f32 %v97, %v673
    %v675 = vand.u32 %v674, 4294901760
    %v676 = vsub.f32 %v674, %v675
    %v677 = vand.u32 %v676, 4294901760
    %678 = vmatprep.subr.mxu0 %v677
    %v679 = vand.u32 %v96, 4294901760
    %v680 = vsub.f32 %v96, %v679
    %v681 = vand.u32 %v680, 4294901760
    %v682 = vsub.f32 %v680, %v681
    %v683 = vand.u32 %v682, 4294901760
    %684 = vmatpush1.msra.mxu0 %v683
    %v685 = vand.u32 %v99, 4294901760
    %v686 = vsub.f32 %v99, %v685
    %v687 = vand.u32 %v686, 4294901760
    %v688 = vsub.f32 %v686, %v687
    %v689 = vand.u32 %v688, 4294901760
    %690 = vmatprep.subr.mxu0 %v689
    %v691 = vand.u32 %v98, 4294901760
    %v692 = vsub.f32 %v98, %v691
    %v693 = vand.u32 %v692, 4294901760
    %v694 = vsub.f32 %v692, %v693
    %v695 = vand.u32 %v694, 4294901760
    %696 = vmatpush1.msra.mxu0 %v695
    %v697 = vand.u32 %v101, 4294901760
    %v698 = vsub.f32 %v101, %v697
    %v699 = vand.u32 %v698, 4294901760
    %v700 = vsub.f32 %v698, %v699
    %v701 = vand.u32 %v700, 4294901760
    %702 = vmatprep.subr.mxu0 %v701
    %v703 = vand.u32 %v100, 4294901760
    %v704 = vsub.f32 %v100, %v703
    %v705 = vand.u32 %v704, 4294901760
    %v706 = vsub.f32 %v704, %v705
    %v707 = vand.u32 %v706, 4294901760
    %708 = vmatpush1.msra.mxu0 %v707
    %v709 = vand.u32 %v103, 4294901760
    %v710 = vsub.f32 %v103, %v709
    %v711 = vand.u32 %v710, 4294901760
    %v712 = vsub.f32 %v710, %v711
    %v713 = vand.u32 %v712, 4294901760
    %714 = vmatprep.subr.mxu0 %v713
    %v715 = vand.u32 %v102, 4294901760
    %v716 = vsub.f32 %v102, %v715
    %v717 = vand.u32 %v716, 4294901760
    %v718 = vsub.f32 %v716, %v717
    %v719 = vand.u32 %v718, 4294901760
    %720 = vmatpush1.msra.mxu0 %v719
    %v721 = vand.u32 %v105, 4294901760
    %v722 = vsub.f32 %v105, %v721
    %v723 = vand.u32 %v722, 4294901760
    %v724 = vsub.f32 %v722, %v723
    %v725 = vand.u32 %v724, 4294901760
    %726 = vmatprep.subr.mxu0 %v725
    %v727 = vand.u32 %v104, 4294901760
    %v728 = vsub.f32 %v104, %v727
    %v729 = vand.u32 %v728, 4294901760
    %v730 = vsub.f32 %v728, %v729
    %v731 = vand.u32 %v730, 4294901760
    %732 = vmatpush1.msra.mxu0 %v731
    %v733 = vand.u32 %v198, 4294901760
    %734 = vmatprep.mubr.f32.mxu0 %v733
    %v735 = vand.u32 %v190, 4294901760
    %736 = vmatmul.mubr.f32.gmra.mrb[0].mxu0 %v735
    %v737 = vpop.f32.mrb[0].mxu0
    %v738 = vadd.f32 %v345, %v737
    %v739 = vpop.f32.mrb[0].mxu0
    %v740 = vadd.f32 %v347, %v739
    %741 = vdwg.mxu0
    %v742 = vand.u32 %v43, 4294901760
    %v743 = vsub.f32 %v43, %v742
    %744 = vmatprep.subr.mxu0 %v743
    %v745 = vand.u32 %v42, 4294901760
    %v746 = vsub.f32 %v42, %v745
    %747 = vmatpush1.msra.mxu0 %v746
    %v748 = vand.u32 %v45, 4294901760
    %v749 = vsub.f32 %v45, %v748
    %750 = vmatprep.subr.mxu0 %v749
    %v751 = vand.u32 %v44, 4294901760
    %v752 = vsub.f32 %v44, %v751
    %753 = vmatpush1.msra.mxu0 %v752
    %v754 = vand.u32 %v47, 4294901760
    %v755 = vsub.f32 %v47, %v754
    %756 = vmatprep.subr.mxu0 %v755
    %v757 = vand.u32 %v46, 4294901760
    %v758 = vsub.f32 %v46, %v757
    %759 = vmatpush1.msra.mxu0 %v758
    %v760 = vand.u32 %v49, 4294901760
    %v761 = vsub.f32 %v49, %v760
    %762 = vmatprep.subr.mxu0 %v761
    %v763 = vand.u32 %v48, 4294901760
    %v764 = vsub.f32 %v48, %v763
    %765 = vmatpush1.msra.mxu0 %v764
    %v766 = vand.u32 %v51, 4294901760
    %v767 = vsub.f32 %v51, %v766
    %768 = vmatprep.subr.mxu0 %v767
    %v769 = vand.u32 %v50, 4294901760
    %v770 = vsub.f32 %v50, %v769
    %771 = vmatpush1.msra.mxu0 %v770
    %v772 = vand.u32 %v53, 4294901760
    %v773 = vsub.f32 %v53, %v772
    %774 = vmatprep.subr.mxu0 %v773
    %v775 = vand.u32 %v52, 4294901760
    %v776 = vsub.f32 %v52, %v775
    %777 = vmatpush1.msra.mxu0 %v776
    %v778 = vand.u32 %v55, 4294901760
    %v779 = vsub.f32 %v55, %v778
    %780 = vmatprep.subr.mxu0 %v779
    %v781 = vand.u32 %v54, 4294901760
    %v782 = vsub.f32 %v54, %v781
    %783 = vmatpush1.msra.mxu0 %v782
    %v784 = vand.u32 %v57, 4294901760
    %v785 = vsub.f32 %v57, %v784
    %786 = vmatprep.subr.mxu0 %v785
    %v787 = vand.u32 %v56, 4294901760
    %v788 = vsub.f32 %v56, %v787
    %789 = vmatpush1.msra.mxu0 %v788
    %v790 = vand.u32 %v59, 4294901760
    %v791 = vsub.f32 %v59, %v790
    %792 = vmatprep.subr.mxu0 %v791
    %v793 = vand.u32 %v58, 4294901760
    %v794 = vsub.f32 %v58, %v793
    %795 = vmatpush1.msra.mxu0 %v794
    %v796 = vand.u32 %v61, 4294901760
    %v797 = vsub.f32 %v61, %v796
    %798 = vmatprep.subr.mxu0 %v797
    %v799 = vand.u32 %v60, 4294901760
    %v800 = vsub.f32 %v60, %v799
    %801 = vmatpush1.msra.mxu0 %v800
    %v802 = vand.u32 %v63, 4294901760
    %v803 = vsub.f32 %v63, %v802
    %804 = vmatprep.subr.mxu0 %v803
    %v805 = vand.u32 %v62, 4294901760
    %v806 = vsub.f32 %v62, %v805
    %807 = vmatpush1.msra.mxu0 %v806
    %v808 = vand.u32 %v65, 4294901760
    %v809 = vsub.f32 %v65, %v808
    %810 = vmatprep.subr.mxu0 %v809
    %v811 = vand.u32 %v64, 4294901760
    %v812 = vsub.f32 %v64, %v811
    %813 = vmatpush1.msra.mxu0 %v812
    %v814 = vand.u32 %v67, 4294901760
    %v815 = vsub.f32 %v67, %v814
    %816 = vmatprep.subr.mxu0 %v815
    %v817 = vand.u32 %v66, 4294901760
    %v818 = vsub.f32 %v66, %v817
    %819 = vmatpush1.msra.mxu0 %v818
    %v820 = vand.u32 %v69, 4294901760
    %v821 = vsub.f32 %v69, %v820
    %822 = vmatprep.subr.mxu0 %v821
    %v823 = vand.u32 %v68, 4294901760
    %v824 = vsub.f32 %v68, %v823
    %825 = vmatpush1.msra.mxu0 %v824
    %v826 = vand.u32 %v71, 4294901760
    %v827 = vsub.f32 %v71, %v826
    %828 = vmatprep.subr.mxu0 %v827
    %v829 = vand.u32 %v70, 4294901760
    %v830 = vsub.f32 %v70, %v829
    %831 = vmatpush1.msra.mxu0 %v830
    %v832 = vand.u32 %v73, 4294901760
    %v833 = vsub.f32 %v73, %v832
    %834 = vmatprep.subr.mxu0 %v833
    %v835 = vand.u32 %v72, 4294901760
    %v836 = vsub.f32 %v72, %v835
    %837 = vmatpush1.msra.mxu0 %v836
    %v838 = vand.u32 %v75, 4294901760
    %v839 = vsub.f32 %v75, %v838
    %840 = vmatprep.subr.mxu0 %v839
    %v841 = vand.u32 %v74, 4294901760
    %v842 = vsub.f32 %v74, %v841
    %843 = vmatpush1.msra.mxu0 %v842
    %v844 = vand.u32 %v77, 4294901760
    %v845 = vsub.f32 %v77, %v844
    %846 = vmatprep.subr.mxu0 %v845
    %v847 = vand.u32 %v76, 4294901760
    %v848 = vsub.f32 %v76, %v847
    %849 = vmatpush1.msra.mxu0 %v848
    %v850 = vand.u32 %v79, 4294901760
    %v851 = vsub.f32 %v79, %v850
    %852 = vmatprep.subr.mxu0 %v851
    %v853 = vand.u32 %v78, 4294901760
    %v854 = vsub.f32 %v78, %v853
    %855 = vmatpush1.msra.mxu0 %v854
    %v856 = vand.u32 %v81, 4294901760
    %v857 = vsub.f32 %v81, %v856
    %858 = vmatprep.subr.mxu0 %v857
    %v859 = vand.u32 %v80, 4294901760
    %v860 = vsub.f32 %v80, %v859
    %861 = vmatpush1.msra.mxu0 %v860
    %v862 = vand.u32 %v83, 4294901760
    %v863 = vsub.f32 %v83, %v862
    %864 = vmatprep.subr.mxu0 %v863
    %v865 = vand.u32 %v82, 4294901760
    %v866 = vsub.f32 %v82, %v865
    %867 = vmatpush1.msra.mxu0 %v866
    %v868 = vand.u32 %v85, 4294901760
    %v869 = vsub.f32 %v85, %v868
    %870 = vmatprep.subr.mxu0 %v869
    %v871 = vand.u32 %v84, 4294901760
    %v872 = vsub.f32 %v84, %v871
    %873 = vmatpush1.msra.mxu0 %v872
    %v874 = vand.u32 %v87, 4294901760
    %v875 = vsub.f32 %v87, %v874
    %876 = vmatprep.subr.mxu0 %v875
    %v877 = vand.u32 %v86, 4294901760
    %v878 = vsub.f32 %v86, %v877
    %879 = vmatpush1.msra.mxu0 %v878
    %v880 = vand.u32 %v89, 4294901760
    %v881 = vsub.f32 %v89, %v880
    %882 = vmatprep.subr.mxu0 %v881
    %v883 = vand.u32 %v88, 4294901760
    %v884 = vsub.f32 %v88, %v883
    %885 = vmatpush1.msra.mxu0 %v884
    %v886 = vand.u32 %v91, 4294901760
    %v887 = vsub.f32 %v91, %v886
    %888 = vmatprep.subr.mxu0 %v887
    %v889 = vand.u32 %v90, 4294901760
    %v890 = vsub.f32 %v90, %v889
    %891 = vmatpush1.msra.mxu0 %v890
    %v892 = vand.u32 %v93, 4294901760
    %v893 = vsub.f32 %v93, %v892
    %894 = vmatprep.subr.mxu0 %v893
    %v895 = vand.u32 %v92, 4294901760
    %v896 = vsub.f32 %v92, %v895
    %897 = vmatpush1.msra.mxu0 %v896
    %v898 = vand.u32 %v95, 4294901760
    %v899 = vsub.f32 %v95, %v898
    %900 = vmatprep.subr.mxu0 %v899
    %v901 = vand.u32 %v94, 4294901760
    %v902 = vsub.f32 %v94, %v901
    %903 = vmatpush1.msra.mxu0 %v902
    %v904 = vand.u32 %v97, 4294901760
    %v905 = vsub.f32 %v97, %v904
    %906 = vmatprep.subr.mxu0 %v905
    %v907 = vand.u32 %v96, 4294901760
    %v908 = vsub.f32 %v96, %v907
    %909 = vmatpush1.msra.mxu0 %v908
    %v910 = vand.u32 %v99, 4294901760
    %v911 = vsub.f32 %v99, %v910
    %912 = vmatprep.subr.mxu0 %v911
    %v913 = vand.u32 %v98, 4294901760
    %v914 = vsub.f32 %v98, %v913
    %915 = vmatpush1.msra.mxu0 %v914
    %v916 = vand.u32 %v101, 4294901760
    %v917 = vsub.f32 %v101, %v916
    %918 = vmatprep.subr.mxu0 %v917
    %v919 = vand.u32 %v100, 4294901760
    %v920 = vsub.f32 %v100, %v919
    %921 = vmatpush1.msra.mxu0 %v920
    %v922 = vand.u32 %v103, 4294901760
    %v923 = vsub.f32 %v103, %v922
    %924 = vmatprep.subr.mxu0 %v923
    %v925 = vand.u32 %v102, 4294901760
    %v926 = vsub.f32 %v102, %v925
    %927 = vmatpush1.msra.mxu0 %v926
    %v928 = vand.u32 %v105, 4294901760
    %v929 = vsub.f32 %v105, %v928
    %930 = vmatprep.subr.mxu0 %v929
    %v931 = vand.u32 %v104, 4294901760
    %v932 = vsub.f32 %v104, %v931
    %933 = vmatpush1.msra.mxu0 %v932
    %v934 = vand.u32 %v198, 4294901760
    %v935 = vsub.f32 %v198, %v934
    %936 = vmatprep.mubr.f32.mxu0 %v935
    %v937 = vand.u32 %v190, 4294901760
    %v938 = vsub.f32 %v190, %v937
    %939 = vmatmul.mubr.f32.gmra.mrb[0].mxu0 %v938
    %v940 = vpop.f32.mrb[0].mxu0
    %v941 = vadd.f32 %v738, %v940
    %v942 = vpop.f32.mrb[0].mxu0
    %v943 = vadd.f32 %v740, %v942
    %944 = vdwg.mxu0
    %v945 = vand.u32 %v43, 4294901760
    %946 = vmatprep.subr.mxu0 %v945
    %v947 = vand.u32 %v42, 4294901760
    %948 = vmatpush1.msra.mxu0 %v947
    %v949 = vand.u32 %v45, 4294901760
    %950 = vmatprep.subr.mxu0 %v949
    %v951 = vand.u32 %v44, 4294901760
    %952 = vmatpush1.msra.mxu0 %v951
    %v953 = vand.u32 %v47, 4294901760
    %954 = vmatprep.subr.mxu0 %v953
    %v955 = vand.u32 %v46, 4294901760
    %956 = vmatpush1.msra.mxu0 %v955
    %v957 = vand.u32 %v49, 4294901760
    %958 = vmatprep.subr.mxu0 %v957
    %v959 = vand.u32 %v48, 4294901760
    %960 = vmatpush1.msra.mxu0 %v959
    %v961 = vand.u32 %v51, 4294901760
    %962 = vmatprep.subr.mxu0 %v961
    %v963 = vand.u32 %v50, 4294901760
    %964 = vmatpush1.msra.mxu0 %v963
    %v965 = vand.u32 %v53, 4294901760
    %966 = vmatprep.subr.mxu0 %v965
    %v967 = vand.u32 %v52, 4294901760
    %968 = vmatpush1.msra.mxu0 %v967
    %v969 = vand.u32 %v55, 4294901760
    %970 = vmatprep.subr.mxu0 %v969
    %v971 = vand.u32 %v54, 4294901760
    %972 = vmatpush1.msra.mxu0 %v971
    %v973 = vand.u32 %v57, 4294901760
    %974 = vmatprep.subr.mxu0 %v973
    %v975 = vand.u32 %v56, 4294901760
    %976 = vmatpush1.msra.mxu0 %v975
    %v977 = vand.u32 %v59, 4294901760
    %978 = vmatprep.subr.mxu0 %v977
    %v979 = vand.u32 %v58, 4294901760
    %980 = vmatpush1.msra.mxu0 %v979
    %v981 = vand.u32 %v61, 4294901760
    %982 = vmatprep.subr.mxu0 %v981
    %v983 = vand.u32 %v60, 4294901760
    %984 = vmatpush1.msra.mxu0 %v983
    %v985 = vand.u32 %v63, 4294901760
    %986 = vmatprep.subr.mxu0 %v985
    %v987 = vand.u32 %v62, 4294901760
    %988 = vmatpush1.msra.mxu0 %v987
    %v989 = vand.u32 %v65, 4294901760
    %990 = vmatprep.subr.mxu0 %v989
    %v991 = vand.u32 %v64, 4294901760
    %992 = vmatpush1.msra.mxu0 %v991
    %v993 = vand.u32 %v67, 4294901760
    %994 = vmatprep.subr.mxu0 %v993
    %v995 = vand.u32 %v66, 4294901760
    %996 = vmatpush1.msra.mxu0 %v995
    %v997 = vand.u32 %v69, 4294901760
    %998 = vmatprep.subr.mxu0 %v997
    %v999 = vand.u32 %v68, 4294901760
    %1000 = vmatpush1.msra.mxu0 %v999
    %v1001 = vand.u32 %v71, 4294901760
    %1002 = vmatprep.subr.mxu0 %v1001
    %v1003 = vand.u32 %v70, 4294901760
    %1004 = vmatpush1.msra.mxu0 %v1003
    %v1005 = vand.u32 %v73, 4294901760
    %1006 = vmatprep.subr.mxu0 %v1005
    %v1007 = vand.u32 %v72, 4294901760
    %1008 = vmatpush1.msra.mxu0 %v1007
    %v1009 = vand.u32 %v75, 4294901760
    %1010 = vmatprep.subr.mxu0 %v1009
    %v1011 = vand.u32 %v74, 4294901760
    %1012 = vmatpush1.msra.mxu0 %v1011
    %v1013 = vand.u32 %v77, 4294901760
    %1014 = vmatprep.subr.mxu0 %v1013
    %v1015 = vand.u32 %v76, 4294901760
    %1016 = vmatpush1.msra.mxu0 %v1015
    %v1017 = vand.u32 %v79, 4294901760
    %1018 = vmatprep.subr.mxu0 %v1017
    %v1019 = vand.u32 %v78, 4294901760
    %1020 = vmatpush1.msra.mxu0 %v1019
    %v1021 = vand.u32 %v81, 4294901760
    %1022 = vmatprep.subr.mxu0 %v1021
    %v1023 = vand.u32 %v80, 4294901760
    %1024 = vmatpush1.msra.mxu0 %v1023
    %v1025 = vand.u32 %v83, 4294901760
    %1026 = vmatprep.subr.mxu0 %v1025
    %v1027 = vand.u32 %v82, 4294901760
    %1028 = vmatpush1.msra.mxu0 %v1027
    %v1029 = vand.u32 %v85, 4294901760
    %1030 = vmatprep.subr.mxu0 %v1029
    %v1031 = vand.u32 %v84, 4294901760
    %1032 = vmatpush1.msra.mxu0 %v1031
    %v1033 = vand.u32 %v87, 4294901760
    %1034 = vmatprep.subr.mxu0 %v1033
    %v1035 = vand.u32 %v86, 4294901760
    %1036 = vmatpush1.msra.mxu0 %v1035
    %v1037 = vand.u32 %v89, 4294901760
    %1038 = vmatprep.subr.mxu0 %v1037
    %v1039 = vand.u32 %v88, 4294901760
    %1040 = vmatpush1.msra.mxu0 %v1039
    %v1041 = vand.u32 %v91, 4294901760
    %1042 = vmatprep.subr.mxu0 %v1041
    %v1043 = vand.u32 %v90, 4294901760
    %1044 = vmatpush1.msra.mxu0 %v1043
    %v1045 = vand.u32 %v93, 4294901760
    %1046 = vmatprep.subr.mxu0 %v1045
    %v1047 = vand.u32 %v92, 4294901760
    %1048 = vmatpush1.msra.mxu0 %v1047
    %v1049 = vand.u32 %v95, 4294901760
    %1050 = vmatprep.subr.mxu0 %v1049
    %v1051 = vand.u32 %v94, 4294901760
    %1052 = vmatpush1.msra.mxu0 %v1051
    %v1053 = vand.u32 %v97, 4294901760
    %1054 = vmatprep.subr.mxu0 %v1053
    %v1055 = vand.u32 %v96, 4294901760
    %1056 = vmatpush1.msra.mxu0 %v1055
    %v1057 = vand.u32 %v99, 4294901760
    %1058 = vmatprep.subr.mxu0 %v1057
    %v1059 = vand.u32 %v98, 4294901760
    %1060 = vmatpush1.msra.mxu0 %v1059
    %v1061 = vand.u32 %v101, 4294901760
    %1062 = vmatprep.subr.mxu0 %v1061
    %v1063 = vand.u32 %v100, 4294901760
    %1064 = vmatpush1.msra.mxu0 %v1063
    %v1065 = vand.u32 %v103, 4294901760
    %1066 = vmatprep.subr.mxu0 %v1065
    %v1067 = vand.u32 %v102, 4294901760
    %1068 = vmatpush1.msra.mxu0 %v1067
    %v1069 = vand.u32 %v105, 4294901760
    %1070 = vmatprep.subr.mxu0 %v1069
    %v1071 = vand.u32 %v104, 4294901760
    %1072 = vmatpush1.msra.mxu0 %v1071
    %v1073 = vand.u32 %v198, 4294901760
    %v1074 = vsub.f32 %v198, %v1073
    %v1075 = vand.u32 %v1074, 4294901760
    %1076 = vmatprep.mubr.f32.mxu0 %v1075
    %v1077 = vand.u32 %v190, 4294901760
    %v1078 = vsub.f32 %v190, %v1077
    %v1079 = vand.u32 %v1078, 4294901760
    %1080 = vmatmul.mubr.f32.gmra.mrb[0].mxu0 %v1079
    %v1081 = vpop.f32.mrb[0].mxu0
    %v1082 = vadd.f32 %v941, %v1081
    %v1083 = vpop.f32.mrb[0].mxu0
    %v1084 = vadd.f32 %v943, %v1083
    %1085 = vdwg.mxu0
    %v1086 = vand.u32 %v43, 4294901760
    %v1087 = vsub.f32 %v43, %v1086
    %v1088 = vand.u32 %v1087, 4294901760
    %1089 = vmatprep.subr.mxu0 %v1088
    %v1090 = vand.u32 %v42, 4294901760
    %v1091 = vsub.f32 %v42, %v1090
    %v1092 = vand.u32 %v1091, 4294901760
    %1093 = vmatpush1.msra.mxu0 %v1092
    %v1094 = vand.u32 %v45, 4294901760
    %v1095 = vsub.f32 %v45, %v1094
    %v1096 = vand.u32 %v1095, 4294901760
    %1097 = vmatprep.subr.mxu0 %v1096
    %v1098 = vand.u32 %v44, 4294901760
    %v1099 = vsub.f32 %v44, %v1098
    %v1100 = vand.u32 %v1099, 4294901760
    %1101 = vmatpush1.msra.mxu0 %v1100
    %v1102 = vand.u32 %v47, 4294901760
    %v1103 = vsub.f32 %v47, %v1102
    %v1104 = vand.u32 %v1103, 4294901760
    %1105 = vmatprep.subr.mxu0 %v1104
    %v1106 = vand.u32 %v46, 4294901760
    %v1107 = vsub.f32 %v46, %v1106
    %v1108 = vand.u32 %v1107, 4294901760
    %1109 = vmatpush1.msra.mxu0 %v1108
    %v1110 = vand.u32 %v49, 4294901760
    %v1111 = vsub.f32 %v49, %v1110
    %v1112 = vand.u32 %v1111, 4294901760
    %1113 = vmatprep.subr.mxu0 %v1112
    %v1114 = vand.u32 %v48, 4294901760
    %v1115 = vsub.f32 %v48, %v1114
    %v1116 = vand.u32 %v1115, 4294901760
    %1117 = vmatpush1.msra.mxu0 %v1116
    %v1118 = vand.u32 %v51, 4294901760
    %v1119 = vsub.f32 %v51, %v1118
    %v1120 = vand.u32 %v1119, 4294901760
    %1121 = vmatprep.subr.mxu0 %v1120
    %v1122 = vand.u32 %v50, 4294901760
    %v1123 = vsub.f32 %v50, %v1122
    %v1124 = vand.u32 %v1123, 4294901760
    %1125 = vmatpush1.msra.mxu0 %v1124
    %v1126 = vand.u32 %v53, 4294901760
    %v1127 = vsub.f32 %v53, %v1126
    %v1128 = vand.u32 %v1127, 4294901760
    %1129 = vmatprep.subr.mxu0 %v1128
    %v1130 = vand.u32 %v52, 4294901760
    %v1131 = vsub.f32 %v52, %v1130
    %v1132 = vand.u32 %v1131, 4294901760
    %1133 = vmatpush1.msra.mxu0 %v1132
    %v1134 = vand.u32 %v55, 4294901760
    %v1135 = vsub.f32 %v55, %v1134
    %v1136 = vand.u32 %v1135, 4294901760
    %1137 = vmatprep.subr.mxu0 %v1136
    %v1138 = vand.u32 %v54, 4294901760
    %v1139 = vsub.f32 %v54, %v1138
    %v1140 = vand.u32 %v1139, 4294901760
    %1141 = vmatpush1.msra.mxu0 %v1140
    %v1142 = vand.u32 %v57, 4294901760
    %v1143 = vsub.f32 %v57, %v1142
    %v1144 = vand.u32 %v1143, 4294901760
    %1145 = vmatprep.subr.mxu0 %v1144
    %v1146 = vand.u32 %v56, 4294901760
    %v1147 = vsub.f32 %v56, %v1146
    %v1148 = vand.u32 %v1147, 4294901760
    %1149 = vmatpush1.msra.mxu0 %v1148
    %v1150 = vand.u32 %v59, 4294901760
    %v1151 = vsub.f32 %v59, %v1150
    %v1152 = vand.u32 %v1151, 4294901760
    %1153 = vmatprep.subr.mxu0 %v1152
    %v1154 = vand.u32 %v58, 4294901760
    %v1155 = vsub.f32 %v58, %v1154
    %v1156 = vand.u32 %v1155, 4294901760
    %1157 = vmatpush1.msra.mxu0 %v1156
    %v1158 = vand.u32 %v61, 4294901760
    %v1159 = vsub.f32 %v61, %v1158
    %v1160 = vand.u32 %v1159, 4294901760
    %1161 = vmatprep.subr.mxu0 %v1160
    %v1162 = vand.u32 %v60, 4294901760
    %v1163 = vsub.f32 %v60, %v1162
    %v1164 = vand.u32 %v1163, 4294901760
    %1165 = vmatpush1.msra.mxu0 %v1164
    %v1166 = vand.u32 %v63, 4294901760
    %v1167 = vsub.f32 %v63, %v1166
    %v1168 = vand.u32 %v1167, 4294901760
    %1169 = vmatprep.subr.mxu0 %v1168
    %v1170 = vand.u32 %v62, 4294901760
    %v1171 = vsub.f32 %v62, %v1170
    %v1172 = vand.u32 %v1171, 4294901760
    %1173 = vmatpush1.msra.mxu0 %v1172
    %v1174 = vand.u32 %v65, 4294901760
    %v1175 = vsub.f32 %v65, %v1174
    %v1176 = vand.u32 %v1175, 4294901760
    %1177 = vmatprep.subr.mxu0 %v1176
    %v1178 = vand.u32 %v64, 4294901760
    %v1179 = vsub.f32 %v64, %v1178
    %v1180 = vand.u32 %v1179, 4294901760
    %1181 = vmatpush1.msra.mxu0 %v1180
    %v1182 = vand.u32 %v67, 4294901760
    %v1183 = vsub.f32 %v67, %v1182
    %v1184 = vand.u32 %v1183, 4294901760
    %1185 = vmatprep.subr.mxu0 %v1184
    %v1186 = vand.u32 %v66, 4294901760
    %v1187 = vsub.f32 %v66, %v1186
    %v1188 = vand.u32 %v1187, 4294901760
    %1189 = vmatpush1.msra.mxu0 %v1188
    %v1190 = vand.u32 %v69, 4294901760
    %v1191 = vsub.f32 %v69, %v1190
    %v1192 = vand.u32 %v1191, 4294901760
    %1193 = vmatprep.subr.mxu0 %v1192
    %v1194 = vand.u32 %v68, 4294901760
    %v1195 = vsub.f32 %v68, %v1194
    %v1196 = vand.u32 %v1195, 4294901760
    %1197 = vmatpush1.msra.mxu0 %v1196
    %v1198 = vand.u32 %v71, 4294901760
    %v1199 = vsub.f32 %v71, %v1198
    %v1200 = vand.u32 %v1199, 4294901760
    %1201 = vmatprep.subr.mxu0 %v1200
    %v1202 = vand.u32 %v70, 4294901760
    %v1203 = vsub.f32 %v70, %v1202
    %v1204 = vand.u32 %v1203, 4294901760
    %1205 = vmatpush1.msra.mxu0 %v1204
    %v1206 = vand.u32 %v73, 4294901760
    %v1207 = vsub.f32 %v73, %v1206
    %v1208 = vand.u32 %v1207, 4294901760
    %1209 = vmatprep.subr.mxu0 %v1208
    %v1210 = vand.u32 %v72, 4294901760
    %v1211 = vsub.f32 %v72, %v1210
    %v1212 = vand.u32 %v1211, 4294901760
    %1213 = vmatpush1.msra.mxu0 %v1212
    %v1214 = vand.u32 %v75, 4294901760
    %v1215 = vsub.f32 %v75, %v1214
    %v1216 = vand.u32 %v1215, 4294901760
    %1217 = vmatprep.subr.mxu0 %v1216
    %v1218 = vand.u32 %v74, 4294901760
    %v1219 = vsub.f32 %v74, %v1218
    %v1220 = vand.u32 %v1219, 4294901760
    %1221 = vmatpush1.msra.mxu0 %v1220
    %v1222 = vand.u32 %v77, 4294901760
    %v1223 = vsub.f32 %v77, %v1222
    %v1224 = vand.u32 %v1223, 4294901760
    %1225 = vmatprep.subr.mxu0 %v1224
    %v1226 = vand.u32 %v76, 4294901760
    %v1227 = vsub.f32 %v76, %v1226
    %v1228 = vand.u32 %v1227, 4294901760
    %1229 = vmatpush1.msra.mxu0 %v1228
    %v1230 = vand.u32 %v79, 4294901760
    %v1231 = vsub.f32 %v79, %v1230
    %v1232 = vand.u32 %v1231, 4294901760
    %1233 = vmatprep.subr.mxu0 %v1232
    %v1234 = vand.u32 %v78, 4294901760
    %v1235 = vsub.f32 %v78, %v1234
    %v1236 = vand.u32 %v1235, 4294901760
    %1237 = vmatpush1.msra.mxu0 %v1236
    %v1238 = vand.u32 %v81, 4294901760
    %v1239 = vsub.f32 %v81, %v1238
    %v1240 = vand.u32 %v1239, 4294901760
    %1241 = vmatprep.subr.mxu0 %v1240
    %v1242 = vand.u32 %v80, 4294901760
    %v1243 = vsub.f32 %v80, %v1242
    %v1244 = vand.u32 %v1243, 4294901760
    %1245 = vmatpush1.msra.mxu0 %v1244
    %v1246 = vand.u32 %v83, 4294901760
    %v1247 = vsub.f32 %v83, %v1246
    %v1248 = vand.u32 %v1247, 4294901760
    %1249 = vmatprep.subr.mxu0 %v1248
    %v1250 = vand.u32 %v82, 4294901760
    %v1251 = vsub.f32 %v82, %v1250
    %v1252 = vand.u32 %v1251, 4294901760
    %1253 = vmatpush1.msra.mxu0 %v1252
    %v1254 = vand.u32 %v85, 4294901760
    %v1255 = vsub.f32 %v85, %v1254
    %v1256 = vand.u32 %v1255, 4294901760
    %1257 = vmatprep.subr.mxu0 %v1256
    %v1258 = vand.u32 %v84, 4294901760
    %v1259 = vsub.f32 %v84, %v1258
    %v1260 = vand.u32 %v1259, 4294901760
    %1261 = vmatpush1.msra.mxu0 %v1260
    %v1262 = vand.u32 %v87, 4294901760
    %v1263 = vsub.f32 %v87, %v1262
    %v1264 = vand.u32 %v1263, 4294901760
    %1265 = vmatprep.subr.mxu0 %v1264
    %v1266 = vand.u32 %v86, 4294901760
    %v1267 = vsub.f32 %v86, %v1266
    %v1268 = vand.u32 %v1267, 4294901760
    %1269 = vmatpush1.msra.mxu0 %v1268
    %v1270 = vand.u32 %v89, 4294901760
    %v1271 = vsub.f32 %v89, %v1270
    %v1272 = vand.u32 %v1271, 4294901760
    %1273 = vmatprep.subr.mxu0 %v1272
    %v1274 = vand.u32 %v88, 4294901760
    %v1275 = vsub.f32 %v88, %v1274
    %v1276 = vand.u32 %v1275, 4294901760
    %1277 = vmatpush1.msra.mxu0 %v1276
    %v1278 = vand.u32 %v91, 4294901760
    %v1279 = vsub.f32 %v91, %v1278
    %v1280 = vand.u32 %v1279, 4294901760
    %1281 = vmatprep.subr.mxu0 %v1280
    %v1282 = vand.u32 %v90, 4294901760
    %v1283 = vsub.f32 %v90, %v1282
    %v1284 = vand.u32 %v1283, 4294901760
    %1285 = vmatpush1.msra.mxu0 %v1284
    %v1286 = vand.u32 %v93, 4294901760
    %v1287 = vsub.f32 %v93, %v1286
    %v1288 = vand.u32 %v1287, 4294901760
    %1289 = vmatprep.subr.mxu0 %v1288
    %v1290 = vand.u32 %v92, 4294901760
    %v1291 = vsub.f32 %v92, %v1290
    %v1292 = vand.u32 %v1291, 4294901760
    %1293 = vmatpush1.msra.mxu0 %v1292
    %v1294 = vand.u32 %v95, 4294901760
    %v1295 = vsub.f32 %v95, %v1294
    %v1296 = vand.u32 %v1295, 4294901760
    %1297 = vmatprep.subr.mxu0 %v1296
    %v1298 = vand.u32 %v94, 4294901760
    %v1299 = vsub.f32 %v94, %v1298
    %v1300 = vand.u32 %v1299, 4294901760
    %1301 = vmatpush1.msra.mxu0 %v1300
    %v1302 = vand.u32 %v97, 4294901760
    %v1303 = vsub.f32 %v97, %v1302
    %v1304 = vand.u32 %v1303, 4294901760
    %1305 = vmatprep.subr.mxu0 %v1304
    %v1306 = vand.u32 %v96, 4294901760
    %v1307 = vsub.f32 %v96, %v1306
    %v1308 = vand.u32 %v1307, 4294901760
    %1309 = vmatpush1.msra.mxu0 %v1308
    %v1310 = vand.u32 %v99, 4294901760
    %v1311 = vsub.f32 %v99, %v1310
    %v1312 = vand.u32 %v1311, 4294901760
    %1313 = vmatprep.subr.mxu0 %v1312
    %v1314 = vand.u32 %v98, 4294901760
    %v1315 = vsub.f32 %v98, %v1314
    %v1316 = vand.u32 %v1315, 4294901760
    %1317 = vmatpush1.msra.mxu0 %v1316
    %v1318 = vand.u32 %v101, 4294901760
    %v1319 = vsub.f32 %v101, %v1318
    %v1320 = vand.u32 %v1319, 4294901760
    %1321 = vmatprep.subr.mxu0 %v1320
    %v1322 = vand.u32 %v100, 4294901760
    %v1323 = vsub.f32 %v100, %v1322
    %v1324 = vand.u32 %v1323, 4294901760
    %1325 = vmatpush1.msra.mxu0 %v1324
    %v1326 = vand.u32 %v103, 4294901760
    %v1327 = vsub.f32 %v103, %v1326
    %v1328 = vand.u32 %v1327, 4294901760
    %1329 = vmatprep.subr.mxu0 %v1328
    %v1330 = vand.u32 %v102, 4294901760
    %v1331 = vsub.f32 %v102, %v1330
    %v1332 = vand.u32 %v1331, 4294901760
    %1333 = vmatpush1.msra.mxu0 %v1332
    %v1334 = vand.u32 %v105, 4294901760
    %v1335 = vsub.f32 %v105, %v1334
    %v1336 = vand.u32 %v1335, 4294901760
    %1337 = vmatprep.subr.mxu0 %v1336
    %v1338 = vand.u32 %v104, 4294901760
    %v1339 = vsub.f32 %v104, %v1338
    %v1340 = vand.u32 %v1339, 4294901760
    %1341 = vmatpush1.msra.mxu0 %v1340
    %v1342 = vand.u32 %v198, 4294901760
    %1343 = vmatprep.mubr.f32.mxu0 %v1342
    %v1344 = vand.u32 %v190, 4294901760
    %1345 = vmatmul.mubr.f32.gmra.mrb[0].mxu0 %v1344
    %v1346 = vpop.f32.mrb[0].mxu0
    %v1347 = vadd.f32 %v1082, %v1346
    %v1348 = vpop.f32.mrb[0].mxu0
    %v1349 = vadd.f32 %v1084, %v1348
    %1350 = vdwg.mxu0
    %v1351 = vand.u32 %v43, 4294901760
    %1352 = vmatprep.subr.mxu0 %v1351
    %v1353 = vand.u32 %v42, 4294901760
    %1354 = vmatpush1.msra.mxu0 %v1353
    %v1355 = vand.u32 %v45, 4294901760
    %1356 = vmatprep.subr.mxu0 %v1355
    %v1357 = vand.u32 %v44, 4294901760
    %1358 = vmatpush1.msra.mxu0 %v1357
    %v1359 = vand.u32 %v47, 4294901760
    %1360 = vmatprep.subr.mxu0 %v1359
    %v1361 = vand.u32 %v46, 4294901760
    %1362 = vmatpush1.msra.mxu0 %v1361
    %v1363 = vand.u32 %v49, 4294901760
    %1364 = vmatprep.subr.mxu0 %v1363
    %v1365 = vand.u32 %v48, 4294901760
    %1366 = vmatpush1.msra.mxu0 %v1365
    %v1367 = vand.u32 %v51, 4294901760
    %1368 = vmatprep.subr.mxu0 %v1367
    %v1369 = vand.u32 %v50, 4294901760
    %1370 = vmatpush1.msra.mxu0 %v1369
    %v1371 = vand.u32 %v53, 4294901760
    %1372 = vmatprep.subr.mxu0 %v1371
    %v1373 = vand.u32 %v52, 4294901760
    %1374 = vmatpush1.msra.mxu0 %v1373
    %v1375 = vand.u32 %v55, 4294901760
    %1376 = vmatprep.subr.mxu0 %v1375
    %v1377 = vand.u32 %v54, 4294901760
    %1378 = vmatpush1.msra.mxu0 %v1377
    %v1379 = vand.u32 %v57, 4294901760
    %1380 = vmatprep.subr.mxu0 %v1379
    %v1381 = vand.u32 %v56, 4294901760
    %1382 = vmatpush1.msra.mxu0 %v1381
    %v1383 = vand.u32 %v59, 4294901760
    %1384 = vmatprep.subr.mxu0 %v1383
    %v1385 = vand.u32 %v58, 4294901760
    %1386 = vmatpush1.msra.mxu0 %v1385
    %v1387 = vand.u32 %v61, 4294901760
    %1388 = vmatprep.subr.mxu0 %v1387
    %v1389 = vand.u32 %v60, 4294901760
    %1390 = vmatpush1.msra.mxu0 %v1389
    %v1391 = vand.u32 %v63, 4294901760
    %1392 = vmatprep.subr.mxu0 %v1391
    %v1393 = vand.u32 %v62, 4294901760
    %1394 = vmatpush1.msra.mxu0 %v1393
    %v1395 = vand.u32 %v65, 4294901760
    %1396 = vmatprep.subr.mxu0 %v1395
    %v1397 = vand.u32 %v64, 4294901760
    %1398 = vmatpush1.msra.mxu0 %v1397
    %v1399 = vand.u32 %v67, 4294901760
    %1400 = vmatprep.subr.mxu0 %v1399
    %v1401 = vand.u32 %v66, 4294901760
    %1402 = vmatpush1.msra.mxu0 %v1401
    %v1403 = vand.u32 %v69, 4294901760
    %1404 = vmatprep.subr.mxu0 %v1403
    %v1405 = vand.u32 %v68, 4294901760
    %1406 = vmatpush1.msra.mxu0 %v1405
    %v1407 = vand.u32 %v71, 4294901760
    %1408 = vmatprep.subr.mxu0 %v1407
    %v1409 = vand.u32 %v70, 4294901760
    %1410 = vmatpush1.msra.mxu0 %v1409
    %v1411 = vand.u32 %v73, 4294901760
    %1412 = vmatprep.subr.mxu0 %v1411
    %v1413 = vand.u32 %v72, 4294901760
    %1414 = vmatpush1.msra.mxu0 %v1413
    %v1415 = vand.u32 %v75, 4294901760
    %1416 = vmatprep.subr.mxu0 %v1415
    %v1417 = vand.u32 %v74, 4294901760
    %1418 = vmatpush1.msra.mxu0 %v1417
    %v1419 = vand.u32 %v77, 4294901760
    %1420 = vmatprep.subr.mxu0 %v1419
    %v1421 = vand.u32 %v76, 4294901760
    %1422 = vmatpush1.msra.mxu0 %v1421
    %v1423 = vand.u32 %v79, 4294901760
    %1424 = vmatprep.subr.mxu0 %v1423
    %v1425 = vand.u32 %v78, 4294901760
    %1426 = vmatpush1.msra.mxu0 %v1425
    %v1427 = vand.u32 %v81, 4294901760
    %1428 = vmatprep.subr.mxu0 %v1427
    %v1429 = vand.u32 %v80, 4294901760
    %1430 = vmatpush1.msra.mxu0 %v1429
    %v1431 = vand.u32 %v83, 4294901760
    %1432 = vmatprep.subr.mxu0 %v1431
    %v1433 = vand.u32 %v82, 4294901760
    %1434 = vmatpush1.msra.mxu0 %v1433
    %v1435 = vand.u32 %v85, 4294901760
    %1436 = vmatprep.subr.mxu0 %v1435
    %v1437 = vand.u32 %v84, 4294901760
    %1438 = vmatpush1.msra.mxu0 %v1437
    %v1439 = vand.u32 %v87, 4294901760
    %1440 = vmatprep.subr.mxu0 %v1439
    %v1441 = vand.u32 %v86, 4294901760
    %1442 = vmatpush1.msra.mxu0 %v1441
    %v1443 = vand.u32 %v89, 4294901760
    %1444 = vmatprep.subr.mxu0 %v1443
    %v1445 = vand.u32 %v88, 4294901760
    %1446 = vmatpush1.msra.mxu0 %v1445
    %v1447 = vand.u32 %v91, 4294901760
    %1448 = vmatprep.subr.mxu0 %v1447
    %v1449 = vand.u32 %v90, 4294901760
    %1450 = vmatpush1.msra.mxu0 %v1449
    %v1451 = vand.u32 %v93, 4294901760
    %1452 = vmatprep.subr.mxu0 %v1451
    %v1453 = vand.u32 %v92, 4294901760
    %1454 = vmatpush1.msra.mxu0 %v1453
    %v1455 = vand.u32 %v95, 4294901760
    %1456 = vmatprep.subr.mxu0 %v1455
    %v1457 = vand.u32 %v94, 4294901760
    %1458 = vmatpush1.msra.mxu0 %v1457
    %v1459 = vand.u32 %v97, 4294901760
    %1460 = vmatprep.subr.mxu0 %v1459
    %v1461 = vand.u32 %v96, 4294901760
    %1462 = vmatpush1.msra.mxu0 %v1461
    %v1463 = vand.u32 %v99, 4294901760
    %1464 = vmatprep.subr.mxu0 %v1463
    %v1465 = vand.u32 %v98, 4294901760
    %1466 = vmatpush1.msra.mxu0 %v1465
    %v1467 = vand.u32 %v101, 4294901760
    %1468 = vmatprep.subr.mxu0 %v1467
    %v1469 = vand.u32 %v100, 4294901760
    %1470 = vmatpush1.msra.mxu0 %v1469
    %v1471 = vand.u32 %v103, 4294901760
    %1472 = vmatprep.subr.mxu0 %v1471
    %v1473 = vand.u32 %v102, 4294901760
    %1474 = vmatpush1.msra.mxu0 %v1473
    %v1475 = vand.u32 %v105, 4294901760
    %1476 = vmatprep.subr.mxu0 %v1475
    %v1477 = vand.u32 %v104, 4294901760
    %1478 = vmatpush1.msra.mxu0 %v1477
    %v1479 = vand.u32 %v198, 4294901760
    %1480 = vmatprep.mubr.f32.mxu0 %v1479
    %v1481 = vand.u32 %v190, 4294901760
    %1482 = vmatmul.mubr.f32.gmra.mrb[0].mxu0 %v1481
    %v1483 = vpop.f32.mrb[0].mxu0
    %v1484 = vadd.f32 %v1347, %v1483
    %v1485 = vpop.f32.mrb[0].mxu0
    %v1486 = vadd.f32 %v1349, %v1485
    %1487 = vdwg.mxu0
    %v1488 = vand.u32 %v107, 4294901760
    %1489 = vmatprep.subr.mxu0 %v1488
    %v1490 = vand.u32 %v106, 4294901760
    %1491 = vmatpush1.msra.mxu0 %v1490
    %v1492 = vand.u32 %v109, 4294901760
    %1493 = vmatprep.subr.mxu0 %v1492
    %v1494 = vand.u32 %v108, 4294901760
    %1495 = vmatpush1.msra.mxu0 %v1494
    %v1496 = vand.u32 %v111, 4294901760
    %1497 = vmatprep.subr.mxu0 %v1496
    %v1498 = vand.u32 %v110, 4294901760
    %1499 = vmatpush1.msra.mxu0 %v1498
    %v1500 = vand.u32 %v113, 4294901760
    %1501 = vmatprep.subr.mxu0 %v1500
    %v1502 = vand.u32 %v112, 4294901760
    %1503 = vmatpush1.msra.mxu0 %v1502
    %v1504 = vand.u32 %v115, 4294901760
    %1505 = vmatprep.subr.mxu0 %v1504
    %v1506 = vand.u32 %v114, 4294901760
    %1507 = vmatpush1.msra.mxu0 %v1506
    %v1508 = vand.u32 %v117, 4294901760
    %1509 = vmatprep.subr.mxu0 %v1508
    %v1510 = vand.u32 %v116, 4294901760
    %1511 = vmatpush1.msra.mxu0 %v1510
    %v1512 = vand.u32 %v119, 4294901760
    %1513 = vmatprep.subr.mxu0 %v1512
    %v1514 = vand.u32 %v118, 4294901760
    %1515 = vmatpush1.msra.mxu0 %v1514
    %v1516 = vand.u32 %v121, 4294901760
    %1517 = vmatprep.subr.mxu0 %v1516
    %v1518 = vand.u32 %v120, 4294901760
    %1519 = vmatpush1.msra.mxu0 %v1518
    %v1520 = vand.u32 %v123, 4294901760
    %1521 = vmatprep.subr.mxu0 %v1520
    %v1522 = vand.u32 %v122, 4294901760
    %1523 = vmatpush1.msra.mxu0 %v1522
    %v1524 = vand.u32 %v125, 4294901760
    %1525 = vmatprep.subr.mxu0 %v1524
    %v1526 = vand.u32 %v124, 4294901760
    %1527 = vmatpush1.msra.mxu0 %v1526
    %v1528 = vand.u32 %v127, 4294901760
    %1529 = vmatprep.subr.mxu0 %v1528
    %v1530 = vand.u32 %v126, 4294901760
    %1531 = vmatpush1.msra.mxu0 %v1530
    %v1532 = vand.u32 %v129, 4294901760
    %1533 = vmatprep.subr.mxu0 %v1532
    %v1534 = vand.u32 %v128, 4294901760
    %1535 = vmatpush1.msra.mxu0 %v1534
    %v1536 = vand.u32 %v131, 4294901760
    %1537 = vmatprep.subr.mxu0 %v1536
    %v1538 = vand.u32 %v130, 4294901760
    %1539 = vmatpush1.msra.mxu0 %v1538
    %v1540 = vand.u32 %v133, 4294901760
    %1541 = vmatprep.subr.mxu0 %v1540
    %v1542 = vand.u32 %v132, 4294901760
    %1543 = vmatpush1.msra.mxu0 %v1542
    %v1544 = vand.u32 %v135, 4294901760
    %1545 = vmatprep.subr.mxu0 %v1544
    %v1546 = vand.u32 %v134, 4294901760
    %1547 = vmatpush1.msra.mxu0 %v1546
    %v1548 = vand.u32 %v137, 4294901760
    %1549 = vmatprep.subr.mxu0 %v1548
    %v1550 = vand.u32 %v136, 4294901760
    %1551 = vmatpush1.msra.mxu0 %v1550
    %v1552 = vand.u32 %v139, 4294901760
    %1553 = vmatprep.subr.mxu0 %v1552
    %v1554 = vand.u32 %v138, 4294901760
    %1555 = vmatpush1.msra.mxu0 %v1554
    %v1556 = vand.u32 %v141, 4294901760
    %1557 = vmatprep.subr.mxu0 %v1556
    %v1558 = vand.u32 %v140, 4294901760
    %1559 = vmatpush1.msra.mxu0 %v1558
    %v1560 = vand.u32 %v143, 4294901760
    %1561 = vmatprep.subr.mxu0 %v1560
    %v1562 = vand.u32 %v142, 4294901760
    %1563 = vmatpush1.msra.mxu0 %v1562
    %v1564 = vand.u32 %v145, 4294901760
    %1565 = vmatprep.subr.mxu0 %v1564
    %v1566 = vand.u32 %v144, 4294901760
    %1567 = vmatpush1.msra.mxu0 %v1566
    %v1568 = vand.u32 %v147, 4294901760
    %1569 = vmatprep.subr.mxu0 %v1568
    %v1570 = vand.u32 %v146, 4294901760
    %1571 = vmatpush1.msra.mxu0 %v1570
    %v1572 = vand.u32 %v149, 4294901760
    %1573 = vmatprep.subr.mxu0 %v1572
    %v1574 = vand.u32 %v148, 4294901760
    %1575 = vmatpush1.msra.mxu0 %v1574
    %v1576 = vand.u32 %v151, 4294901760
    %1577 = vmatprep.subr.mxu0 %v1576
    %v1578 = vand.u32 %v150, 4294901760
    %1579 = vmatpush1.msra.mxu0 %v1578
    %v1580 = vand.u32 %v153, 4294901760
    %1581 = vmatprep.subr.mxu0 %v1580
    %v1582 = vand.u32 %v152, 4294901760
    %1583 = vmatpush1.msra.mxu0 %v1582
    %v1584 = vand.u32 %v155, 4294901760
    %1585 = vmatprep.subr.mxu0 %v1584
    %v1586 = vand.u32 %v154, 4294901760
    %1587 = vmatpush1.msra.mxu0 %v1586
    %v1588 = vand.u32 %v157, 4294901760
    %1589 = vmatprep.subr.mxu0 %v1588
    %v1590 = vand.u32 %v156, 4294901760
    %1591 = vmatpush1.msra.mxu0 %v1590
    %v1592 = vand.u32 %v159, 4294901760
    %1593 = vmatprep.subr.mxu0 %v1592
    %v1594 = vand.u32 %v158, 4294901760
    %1595 = vmatpush1.msra.mxu0 %v1594
    %v1596 = vand.u32 %v161, 4294901760
    %1597 = vmatprep.subr.mxu0 %v1596
    %v1598 = vand.u32 %v160, 4294901760
    %1599 = vmatpush1.msra.mxu0 %v1598
    %v1600 = vand.u32 %v163, 4294901760
    %1601 = vmatprep.subr.mxu0 %v1600
    %v1602 = vand.u32 %v162, 4294901760
    %1603 = vmatpush1.msra.mxu0 %v1602
    %v1604 = vand.u32 %v165, 4294901760
    %1605 = vmatprep.subr.mxu0 %v1604
    %v1606 = vand.u32 %v164, 4294901760
    %1607 = vmatpush1.msra.mxu0 %v1606
    %v1608 = vand.u32 %v167, 4294901760
    %1609 = vmatprep.subr.mxu0 %v1608
    %v1610 = vand.u32 %v166, 4294901760
    %1611 = vmatpush1.msra.mxu0 %v1610
    %v1612 = vand.u32 %v169, 4294901760
    %1613 = vmatprep.subr.mxu0 %v1612
    %v1614 = vand.u32 %v168, 4294901760
    %1615 = vmatpush1.msra.mxu0 %v1614
    %v1616 = vand.u32 %v199, 4294901760
    %v1617 = vsub.f32 %v199, %v1616
    %v1618 = vand.u32 %v1617, 4294901760
    %v1619 = vsub.f32 %v1617, %v1618
    %v1620 = vand.u32 %v1619, 4294901760
    %1621 = vmatprep.mubr.f32.mxu0 %v1620
    %v1622 = vand.u32 %v197, 4294901760
    %v1623 = vsub.f32 %v197, %v1622
    %v1624 = vand.u32 %v1623, 4294901760
    %v1625 = vsub.f32 %v1623, %v1624
    %v1626 = vand.u32 %v1625, 4294901760
    %1627 = vmatmul.mubr.f32.gmra.mrb[0].mxu0 %v1626
    %v1628 = vpop.f32.mrb[0].mxu0
    %v1629 = vadd.f32 %v1484, %v1628
    %v1630 = vpop.f32.mrb[0].mxu0
    %v1631 = vadd.f32 %v1486, %v1630
    %1632 = vdwg.mxu0
    %v1633 = vand.u32 %v107, 4294901760
    %v1634 = vsub.f32 %v107, %v1633
    %v1635 = vand.u32 %v1634, 4294901760
    %v1636 = vsub.f32 %v1634, %v1635
    %v1637 = vand.u32 %v1636, 4294901760
    %1638 = vmatprep.subr.mxu0 %v1637
    %v1639 = vand.u32 %v106, 4294901760
    %v1640 = vsub.f32 %v106, %v1639
    %v1641 = vand.u32 %v1640, 4294901760
    %v1642 = vsub.f32 %v1640, %v1641
    %v1643 = vand.u32 %v1642, 4294901760
    %1644 = vmatpush1.msra.mxu0 %v1643
    %v1645 = vand.u32 %v109, 4294901760
    %v1646 = vsub.f32 %v109, %v1645
    %v1647 = vand.u32 %v1646, 4294901760
    %v1648 = vsub.f32 %v1646, %v1647
    %v1649 = vand.u32 %v1648, 4294901760
    %1650 = vmatprep.subr.mxu0 %v1649
    %v1651 = vand.u32 %v108, 4294901760
    %v1652 = vsub.f32 %v108, %v1651
    %v1653 = vand.u32 %v1652, 4294901760
    %v1654 = vsub.f32 %v1652, %v1653
    %v1655 = vand.u32 %v1654, 4294901760
    %1656 = vmatpush1.msra.mxu0 %v1655
    %v1657 = vand.u32 %v111, 4294901760
    %v1658 = vsub.f32 %v111, %v1657
    %v1659 = vand.u32 %v1658, 4294901760
    %v1660 = vsub.f32 %v1658, %v1659
    %v1661 = vand.u32 %v1660, 4294901760
    %1662 = vmatprep.subr.mxu0 %v1661
    %v1663 = vand.u32 %v110, 4294901760
    %v1664 = vsub.f32 %v110, %v1663
    %v1665 = vand.u32 %v1664, 4294901760
    %v1666 = vsub.f32 %v1664, %v1665
    %v1667 = vand.u32 %v1666, 4294901760
    %1668 = vmatpush1.msra.mxu0 %v1667
    %v1669 = vand.u32 %v113, 4294901760
    %v1670 = vsub.f32 %v113, %v1669
    %v1671 = vand.u32 %v1670, 4294901760
    %v1672 = vsub.f32 %v1670, %v1671
    %v1673 = vand.u32 %v1672, 4294901760
    %1674 = vmatprep.subr.mxu0 %v1673
    %v1675 = vand.u32 %v112, 4294901760
    %v1676 = vsub.f32 %v112, %v1675
    %v1677 = vand.u32 %v1676, 4294901760
    %v1678 = vsub.f32 %v1676, %v1677
    %v1679 = vand.u32 %v1678, 4294901760
    %1680 = vmatpush1.msra.mxu0 %v1679
    %v1681 = vand.u32 %v115, 4294901760
    %v1682 = vsub.f32 %v115, %v1681
    %v1683 = vand.u32 %v1682, 4294901760
    %v1684 = vsub.f32 %v1682, %v1683
    %v1685 = vand.u32 %v1684, 4294901760
    %1686 = vmatprep.subr.mxu0 %v1685
    %v1687 = vand.u32 %v114, 4294901760
    %v1688 = vsub.f32 %v114, %v1687
    %v1689 = vand.u32 %v1688, 4294901760
    %v1690 = vsub.f32 %v1688, %v1689
    %v1691 = vand.u32 %v1690, 4294901760
    %1692 = vmatpush1.msra.mxu0 %v1691
    %v1693 = vand.u32 %v117, 4294901760
    %v1694 = vsub.f32 %v117, %v1693
    %v1695 = vand.u32 %v1694, 4294901760
    %v1696 = vsub.f32 %v1694, %v1695
    %v1697 = vand.u32 %v1696, 4294901760
    %1698 = vmatprep.subr.mxu0 %v1697
    %v1699 = vand.u32 %v116, 4294901760
    %v1700 = vsub.f32 %v116, %v1699
    %v1701 = vand.u32 %v1700, 4294901760
    %v1702 = vsub.f32 %v1700, %v1701
    %v1703 = vand.u32 %v1702, 4294901760
    %1704 = vmatpush1.msra.mxu0 %v1703
    %v1705 = vand.u32 %v119, 4294901760
    %v1706 = vsub.f32 %v119, %v1705
    %v1707 = vand.u32 %v1706, 4294901760
    %v1708 = vsub.f32 %v1706, %v1707
    %v1709 = vand.u32 %v1708, 4294901760
    %1710 = vmatprep.subr.mxu0 %v1709
    %v1711 = vand.u32 %v118, 4294901760
    %v1712 = vsub.f32 %v118, %v1711
    %v1713 = vand.u32 %v1712, 4294901760
    %v1714 = vsub.f32 %v1712, %v1713
    %v1715 = vand.u32 %v1714, 4294901760
    %1716 = vmatpush1.msra.mxu0 %v1715
    %v1717 = vand.u32 %v121, 4294901760
    %v1718 = vsub.f32 %v121, %v1717
    %v1719 = vand.u32 %v1718, 4294901760
    %v1720 = vsub.f32 %v1718, %v1719
    %v1721 = vand.u32 %v1720, 4294901760
    %1722 = vmatprep.subr.mxu0 %v1721
    %v1723 = vand.u32 %v120, 4294901760
    %v1724 = vsub.f32 %v120, %v1723
    %v1725 = vand.u32 %v1724, 4294901760
    %v1726 = vsub.f32 %v1724, %v1725
    %v1727 = vand.u32 %v1726, 4294901760
    %1728 = vmatpush1.msra.mxu0 %v1727
    %v1729 = vand.u32 %v123, 4294901760
    %v1730 = vsub.f32 %v123, %v1729
    %v1731 = vand.u32 %v1730, 4294901760
    %v1732 = vsub.f32 %v1730, %v1731
    %v1733 = vand.u32 %v1732, 4294901760
    %1734 = vmatprep.subr.mxu0 %v1733
    %v1735 = vand.u32 %v122, 4294901760
    %v1736 = vsub.f32 %v122, %v1735
    %v1737 = vand.u32 %v1736, 4294901760
    %v1738 = vsub.f32 %v1736, %v1737
    %v1739 = vand.u32 %v1738, 4294901760
    %1740 = vmatpush1.msra.mxu0 %v1739
    %v1741 = vand.u32 %v125, 4294901760
    %v1742 = vsub.f32 %v125, %v1741
    %v1743 = vand.u32 %v1742, 4294901760
    %v1744 = vsub.f32 %v1742, %v1743
    %v1745 = vand.u32 %v1744, 4294901760
    %1746 = vmatprep.subr.mxu0 %v1745
    %v1747 = vand.u32 %v124, 4294901760
    %v1748 = vsub.f32 %v124, %v1747
    %v1749 = vand.u32 %v1748, 4294901760
    %v1750 = vsub.f32 %v1748, %v1749
    %v1751 = vand.u32 %v1750, 4294901760
    %1752 = vmatpush1.msra.mxu0 %v1751
    %v1753 = vand.u32 %v127, 4294901760
    %v1754 = vsub.f32 %v127, %v1753
    %v1755 = vand.u32 %v1754, 4294901760
    %v1756 = vsub.f32 %v1754, %v1755
    %v1757 = vand.u32 %v1756, 4294901760
    %1758 = vmatprep.subr.mxu0 %v1757
    %v1759 = vand.u32 %v126, 4294901760
    %v1760 = vsub.f32 %v126, %v1759
    %v1761 = vand.u32 %v1760, 4294901760
    %v1762 = vsub.f32 %v1760, %v1761
    %v1763 = vand.u32 %v1762, 4294901760
    %1764 = vmatpush1.msra.mxu0 %v1763
    %v1765 = vand.u32 %v129, 4294901760
    %v1766 = vsub.f32 %v129, %v1765
    %v1767 = vand.u32 %v1766, 4294901760
    %v1768 = vsub.f32 %v1766, %v1767
    %v1769 = vand.u32 %v1768, 4294901760
    %1770 = vmatprep.subr.mxu0 %v1769
    %v1771 = vand.u32 %v128, 4294901760
    %v1772 = vsub.f32 %v128, %v1771
    %v1773 = vand.u32 %v1772, 4294901760
    %v1774 = vsub.f32 %v1772, %v1773
    %v1775 = vand.u32 %v1774, 4294901760
    %1776 = vmatpush1.msra.mxu0 %v1775
    %v1777 = vand.u32 %v131, 4294901760
    %v1778 = vsub.f32 %v131, %v1777
    %v1779 = vand.u32 %v1778, 4294901760
    %v1780 = vsub.f32 %v1778, %v1779
    %v1781 = vand.u32 %v1780, 4294901760
    %1782 = vmatprep.subr.mxu0 %v1781
    %v1783 = vand.u32 %v130, 4294901760
    %v1784 = vsub.f32 %v130, %v1783
    %v1785 = vand.u32 %v1784, 4294901760
    %v1786 = vsub.f32 %v1784, %v1785
    %v1787 = vand.u32 %v1786, 4294901760
    %1788 = vmatpush1.msra.mxu0 %v1787
    %v1789 = vand.u32 %v133, 4294901760
    %v1790 = vsub.f32 %v133, %v1789
    %v1791 = vand.u32 %v1790, 4294901760
    %v1792 = vsub.f32 %v1790, %v1791
    %v1793 = vand.u32 %v1792, 4294901760
    %1794 = vmatprep.subr.mxu0 %v1793
    %v1795 = vand.u32 %v132, 4294901760
    %v1796 = vsub.f32 %v132, %v1795
    %v1797 = vand.u32 %v1796, 4294901760
    %v1798 = vsub.f32 %v1796, %v1797
    %v1799 = vand.u32 %v1798, 4294901760
    %1800 = vmatpush1.msra.mxu0 %v1799
    %v1801 = vand.u32 %v135, 4294901760
    %v1802 = vsub.f32 %v135, %v1801
    %v1803 = vand.u32 %v1802, 4294901760
    %v1804 = vsub.f32 %v1802, %v1803
    %v1805 = vand.u32 %v1804, 4294901760
    %1806 = vmatprep.subr.mxu0 %v1805
    %v1807 = vand.u32 %v134, 4294901760
    %v1808 = vsub.f32 %v134, %v1807
    %v1809 = vand.u32 %v1808, 4294901760
    %v1810 = vsub.f32 %v1808, %v1809
    %v1811 = vand.u32 %v1810, 4294901760
    %1812 = vmatpush1.msra.mxu0 %v1811
    %v1813 = vand.u32 %v137, 4294901760
    %v1814 = vsub.f32 %v137, %v1813
    %v1815 = vand.u32 %v1814, 4294901760
    %v1816 = vsub.f32 %v1814, %v1815
    %v1817 = vand.u32 %v1816, 4294901760
    %1818 = vmatprep.subr.mxu0 %v1817
    %v1819 = vand.u32 %v136, 4294901760
    %v1820 = vsub.f32 %v136, %v1819
    %v1821 = vand.u32 %v1820, 4294901760
    %v1822 = vsub.f32 %v1820, %v1821
    %v1823 = vand.u32 %v1822, 4294901760
    %1824 = vmatpush1.msra.mxu0 %v1823
    %v1825 = vand.u32 %v139, 4294901760
    %v1826 = vsub.f32 %v139, %v1825
    %v1827 = vand.u32 %v1826, 4294901760
    %v1828 = vsub.f32 %v1826, %v1827
    %v1829 = vand.u32 %v1828, 4294901760
    %1830 = vmatprep.subr.mxu0 %v1829
    %v1831 = vand.u32 %v138, 4294901760
    %v1832 = vsub.f32 %v138, %v1831
    %v1833 = vand.u32 %v1832, 4294901760
    %v1834 = vsub.f32 %v1832, %v1833
    %v1835 = vand.u32 %v1834, 4294901760
    %1836 = vmatpush1.msra.mxu0 %v1835
    %v1837 = vand.u32 %v141, 4294901760
    %v1838 = vsub.f32 %v141, %v1837
    %v1839 = vand.u32 %v1838, 4294901760
    %v1840 = vsub.f32 %v1838, %v1839
    %v1841 = vand.u32 %v1840, 4294901760
    %1842 = vmatprep.subr.mxu0 %v1841
    %v1843 = vand.u32 %v140, 4294901760
    %v1844 = vsub.f32 %v140, %v1843
    %v1845 = vand.u32 %v1844, 4294901760
    %v1846 = vsub.f32 %v1844, %v1845
    %v1847 = vand.u32 %v1846, 4294901760
    %1848 = vmatpush1.msra.mxu0 %v1847
    %v1849 = vand.u32 %v143, 4294901760
    %v1850 = vsub.f32 %v143, %v1849
    %v1851 = vand.u32 %v1850, 4294901760
    %v1852 = vsub.f32 %v1850, %v1851
    %v1853 = vand.u32 %v1852, 4294901760
    %1854 = vmatprep.subr.mxu0 %v1853
    %v1855 = vand.u32 %v142, 4294901760
    %v1856 = vsub.f32 %v142, %v1855
    %v1857 = vand.u32 %v1856, 4294901760
    %v1858 = vsub.f32 %v1856, %v1857
    %v1859 = vand.u32 %v1858, 4294901760
    %1860 = vmatpush1.msra.mxu0 %v1859
    %v1861 = vand.u32 %v145, 4294901760
    %v1862 = vsub.f32 %v145, %v1861
    %v1863 = vand.u32 %v1862, 4294901760
    %v1864 = vsub.f32 %v1862, %v1863
    %v1865 = vand.u32 %v1864, 4294901760
    %1866 = vmatprep.subr.mxu0 %v1865
    %v1867 = vand.u32 %v144, 4294901760
    %v1868 = vsub.f32 %v144, %v1867
    %v1869 = vand.u32 %v1868, 4294901760
    %v1870 = vsub.f32 %v1868, %v1869
    %v1871 = vand.u32 %v1870, 4294901760
    %1872 = vmatpush1.msra.mxu0 %v1871
    %v1873 = vand.u32 %v147, 4294901760
    %v1874 = vsub.f32 %v147, %v1873
    %v1875 = vand.u32 %v1874, 4294901760
    %v1876 = vsub.f32 %v1874, %v1875
    %v1877 = vand.u32 %v1876, 4294901760
    %1878 = vmatprep.subr.mxu0 %v1877
    %v1879 = vand.u32 %v146, 4294901760
    %v1880 = vsub.f32 %v146, %v1879
    %v1881 = vand.u32 %v1880, 4294901760
    %v1882 = vsub.f32 %v1880, %v1881
    %v1883 = vand.u32 %v1882, 4294901760
    %1884 = vmatpush1.msra.mxu0 %v1883
    %v1885 = vand.u32 %v149, 4294901760
    %v1886 = vsub.f32 %v149, %v1885
    %v1887 = vand.u32 %v1886, 4294901760
    %v1888 = vsub.f32 %v1886, %v1887
    %v1889 = vand.u32 %v1888, 4294901760
    %1890 = vmatprep.subr.mxu0 %v1889
    %v1891 = vand.u32 %v148, 4294901760
    %v1892 = vsub.f32 %v148, %v1891
    %v1893 = vand.u32 %v1892, 4294901760
    %v1894 = vsub.f32 %v1892, %v1893
    %v1895 = vand.u32 %v1894, 4294901760
    %1896 = vmatpush1.msra.mxu0 %v1895
    %v1897 = vand.u32 %v151, 4294901760
    %v1898 = vsub.f32 %v151, %v1897
    %v1899 = vand.u32 %v1898, 4294901760
    %v1900 = vsub.f32 %v1898, %v1899
    %v1901 = vand.u32 %v1900, 4294901760
    %1902 = vmatprep.subr.mxu0 %v1901
    %v1903 = vand.u32 %v150, 4294901760
    %v1904 = vsub.f32 %v150, %v1903
    %v1905 = vand.u32 %v1904, 4294901760
    %v1906 = vsub.f32 %v1904, %v1905
    %v1907 = vand.u32 %v1906, 4294901760
    %1908 = vmatpush1.msra.mxu0 %v1907
    %v1909 = vand.u32 %v153, 4294901760
    %v1910 = vsub.f32 %v153, %v1909
    %v1911 = vand.u32 %v1910, 4294901760
    %v1912 = vsub.f32 %v1910, %v1911
    %v1913 = vand.u32 %v1912, 4294901760
    %1914 = vmatprep.subr.mxu0 %v1913
    %v1915 = vand.u32 %v152, 4294901760
    %v1916 = vsub.f32 %v152, %v1915
    %v1917 = vand.u32 %v1916, 4294901760
    %v1918 = vsub.f32 %v1916, %v1917
    %v1919 = vand.u32 %v1918, 4294901760
    %1920 = vmatpush1.msra.mxu0 %v1919
    %v1921 = vand.u32 %v155, 4294901760
    %v1922 = vsub.f32 %v155, %v1921
    %v1923 = vand.u32 %v1922, 4294901760
    %v1924 = vsub.f32 %v1922, %v1923
    %v1925 = vand.u32 %v1924, 4294901760
    %1926 = vmatprep.subr.mxu0 %v1925
    %v1927 = vand.u32 %v154, 4294901760
    %v1928 = vsub.f32 %v154, %v1927
    %v1929 = vand.u32 %v1928, 4294901760
    %v1930 = vsub.f32 %v1928, %v1929
    %v1931 = vand.u32 %v1930, 4294901760
    %1932 = vmatpush1.msra.mxu0 %v1931
    %v1933 = vand.u32 %v157, 4294901760
    %v1934 = vsub.f32 %v157, %v1933
    %v1935 = vand.u32 %v1934, 4294901760
    %v1936 = vsub.f32 %v1934, %v1935
    %v1937 = vand.u32 %v1936, 4294901760
    %1938 = vmatprep.subr.mxu0 %v1937
    %v1939 = vand.u32 %v156, 4294901760
    %v1940 = vsub.f32 %v156, %v1939
    %v1941 = vand.u32 %v1940, 4294901760
    %v1942 = vsub.f32 %v1940, %v1941
    %v1943 = vand.u32 %v1942, 4294901760
    %1944 = vmatpush1.msra.mxu0 %v1943
    %v1945 = vand.u32 %v159, 4294901760
    %v1946 = vsub.f32 %v159, %v1945
    %v1947 = vand.u32 %v1946, 4294901760
    %v1948 = vsub.f32 %v1946, %v1947
    %v1949 = vand.u32 %v1948, 4294901760
    %1950 = vmatprep.subr.mxu0 %v1949
    %v1951 = vand.u32 %v158, 4294901760
    %v1952 = vsub.f32 %v158, %v1951
    %v1953 = vand.u32 %v1952, 4294901760
    %v1954 = vsub.f32 %v1952, %v1953
    %v1955 = vand.u32 %v1954, 4294901760
    %1956 = vmatpush1.msra.mxu0 %v1955
    %v1957 = vand.u32 %v161, 4294901760
    %v1958 = vsub.f32 %v161, %v1957
    %v1959 = vand.u32 %v1958, 4294901760
    %v1960 = vsub.f32 %v1958, %v1959
    %v1961 = vand.u32 %v1960, 4294901760
    %1962 = vmatprep.subr.mxu0 %v1961
    %v1963 = vand.u32 %v160, 4294901760
    %v1964 = vsub.f32 %v160, %v1963
    %v1965 = vand.u32 %v1964, 4294901760
    %v1966 = vsub.f32 %v1964, %v1965
    %v1967 = vand.u32 %v1966, 4294901760
    %1968 = vmatpush1.msra.mxu0 %v1967
    %v1969 = vand.u32 %v163, 4294901760
    %v1970 = vsub.f32 %v163, %v1969
    %v1971 = vand.u32 %v1970, 4294901760
    %v1972 = vsub.f32 %v1970, %v1971
    %v1973 = vand.u32 %v1972, 4294901760
    %1974 = vmatprep.subr.mxu0 %v1973
    %v1975 = vand.u32 %v162, 4294901760
    %v1976 = vsub.f32 %v162, %v1975
    %v1977 = vand.u32 %v1976, 4294901760
    %v1978 = vsub.f32 %v1976, %v1977
    %v1979 = vand.u32 %v1978, 4294901760
    %1980 = vmatpush1.msra.mxu0 %v1979
    %v1981 = vand.u32 %v165, 4294901760
    %v1982 = vsub.f32 %v165, %v1981
    %v1983 = vand.u32 %v1982, 4294901760
    %v1984 = vsub.f32 %v1982, %v1983
    %v1985 = vand.u32 %v1984, 4294901760
    %1986 = vmatprep.subr.mxu0 %v1985
    %v1987 = vand.u32 %v164, 4294901760
    %v1988 = vsub.f32 %v164, %v1987
    %v1989 = vand.u32 %v1988, 4294901760
    %v1990 = vsub.f32 %v1988, %v1989
    %v1991 = vand.u32 %v1990, 4294901760
    %1992 = vmatpush1.msra.mxu0 %v1991
    %v1993 = vand.u32 %v167, 4294901760
    %v1994 = vsub.f32 %v167, %v1993
    %v1995 = vand.u32 %v1994, 4294901760
    %v1996 = vsub.f32 %v1994, %v1995
    %v1997 = vand.u32 %v1996, 4294901760
    %1998 = vmatprep.subr.mxu0 %v1997
    %v1999 = vand.u32 %v166, 4294901760
    %v2000 = vsub.f32 %v166, %v1999
    %v2001 = vand.u32 %v2000, 4294901760
    %v2002 = vsub.f32 %v2000, %v2001
    %v2003 = vand.u32 %v2002, 4294901760
    %2004 = vmatpush1.msra.mxu0 %v2003
    %v2005 = vand.u32 %v169, 4294901760
    %v2006 = vsub.f32 %v169, %v2005
    %v2007 = vand.u32 %v2006, 4294901760
    %v2008 = vsub.f32 %v2006, %v2007
    %v2009 = vand.u32 %v2008, 4294901760
    %2010 = vmatprep.subr.mxu0 %v2009
    %v2011 = vand.u32 %v168, 4294901760
    %v2012 = vsub.f32 %v168, %v2011
    %v2013 = vand.u32 %v2012, 4294901760
    %v2014 = vsub.f32 %v2012, %v2013
    %v2015 = vand.u32 %v2014, 4294901760
    %2016 = vmatpush1.msra.mxu0 %v2015
    %v2017 = vand.u32 %v199, 4294901760
    %2018 = vmatprep.mubr.f32.mxu0 %v2017
    %v2019 = vand.u32 %v197, 4294901760
    %2020 = vmatmul.mubr.f32.gmra.mrb[0].mxu0 %v2019
    %v2021 = vpop.f32.mrb[0].mxu0
    %v2022 = vadd.f32 %v1629, %v2021
    %v2023 = vpop.f32.mrb[0].mxu0
    %v2024 = vadd.f32 %v1631, %v2023
    %2025 = vdwg.mxu0
    %v2026 = vand.u32 %v107, 4294901760
    %v2027 = vsub.f32 %v107, %v2026
    %2028 = vmatprep.subr.mxu0 %v2027
    %v2029 = vand.u32 %v106, 4294901760
    %v2030 = vsub.f32 %v106, %v2029
    %2031 = vmatpush1.msra.mxu0 %v2030
    %v2032 = vand.u32 %v109, 4294901760
    %v2033 = vsub.f32 %v109, %v2032
    %2034 = vmatprep.subr.mxu0 %v2033
    %v2035 = vand.u32 %v108, 4294901760
    %v2036 = vsub.f32 %v108, %v2035
    %2037 = vmatpush1.msra.mxu0 %v2036
    %v2038 = vand.u32 %v111, 4294901760
    %v2039 = vsub.f32 %v111, %v2038
    %2040 = vmatprep.subr.mxu0 %v2039
    %v2041 = vand.u32 %v110, 4294901760
    %v2042 = vsub.f32 %v110, %v2041
    %2043 = vmatpush1.msra.mxu0 %v2042
    %v2044 = vand.u32 %v113, 4294901760
    %v2045 = vsub.f32 %v113, %v2044
    %2046 = vmatprep.subr.mxu0 %v2045
    %v2047 = vand.u32 %v112, 4294901760
    %v2048 = vsub.f32 %v112, %v2047
    %2049 = vmatpush1.msra.mxu0 %v2048
    %v2050 = vand.u32 %v115, 4294901760
    %v2051 = vsub.f32 %v115, %v2050
    %2052 = vmatprep.subr.mxu0 %v2051
    %v2053 = vand.u32 %v114, 4294901760
    %v2054 = vsub.f32 %v114, %v2053
    %2055 = vmatpush1.msra.mxu0 %v2054
    %v2056 = vand.u32 %v117, 4294901760
    %v2057 = vsub.f32 %v117, %v2056
    %2058 = vmatprep.subr.mxu0 %v2057
    %v2059 = vand.u32 %v116, 4294901760
    %v2060 = vsub.f32 %v116, %v2059
    %2061 = vmatpush1.msra.mxu0 %v2060
    %v2062 = vand.u32 %v119, 4294901760
    %v2063 = vsub.f32 %v119, %v2062
    %2064 = vmatprep.subr.mxu0 %v2063
    %v2065 = vand.u32 %v118, 4294901760
    %v2066 = vsub.f32 %v118, %v2065
    %2067 = vmatpush1.msra.mxu0 %v2066
    %v2068 = vand.u32 %v121, 4294901760
    %v2069 = vsub.f32 %v121, %v2068
    %2070 = vmatprep.subr.mxu0 %v2069
    %v2071 = vand.u32 %v120, 4294901760
    %v2072 = vsub.f32 %v120, %v2071
    %2073 = vmatpush1.msra.mxu0 %v2072
    %v2074 = vand.u32 %v123, 4294901760
    %v2075 = vsub.f32 %v123, %v2074
    %2076 = vmatprep.subr.mxu0 %v2075
    %v2077 = vand.u32 %v122, 4294901760
    %v2078 = vsub.f32 %v122, %v2077
    %2079 = vmatpush1.msra.mxu0 %v2078
    %v2080 = vand.u32 %v125, 4294901760
    %v2081 = vsub.f32 %v125, %v2080
    %2082 = vmatprep.subr.mxu0 %v2081
    %v2083 = vand.u32 %v124, 4294901760
    %v2084 = vsub.f32 %v124, %v2083
    %2085 = vmatpush1.msra.mxu0 %v2084
    %v2086 = vand.u32 %v127, 4294901760
    %v2087 = vsub.f32 %v127, %v2086
    %2088 = vmatprep.subr.mxu0 %v2087
    %v2089 = vand.u32 %v126, 4294901760
    %v2090 = vsub.f32 %v126, %v2089
    %2091 = vmatpush1.msra.mxu0 %v2090
    %v2092 = vand.u32 %v129, 4294901760
    %v2093 = vsub.f32 %v129, %v2092
    %2094 = vmatprep.subr.mxu0 %v2093
    %v2095 = vand.u32 %v128, 4294901760
    %v2096 = vsub.f32 %v128, %v2095
    %2097 = vmatpush1.msra.mxu0 %v2096
    %v2098 = vand.u32 %v131, 4294901760
    %v2099 = vsub.f32 %v131, %v2098
    %2100 = vmatprep.subr.mxu0 %v2099
    %v2101 = vand.u32 %v130, 4294901760
    %v2102 = vsub.f32 %v130, %v2101
    %2103 = vmatpush1.msra.mxu0 %v2102
    %v2104 = vand.u32 %v133, 4294901760
    %v2105 = vsub.f32 %v133, %v2104
    %2106 = vmatprep.subr.mxu0 %v2105
    %v2107 = vand.u32 %v132, 4294901760
    %v2108 = vsub.f32 %v132, %v2107
    %2109 = vmatpush1.msra.mxu0 %v2108
    %v2110 = vand.u32 %v135, 4294901760
    %v2111 = vsub.f32 %v135, %v2110
    %2112 = vmatprep.subr.mxu0 %v2111
    %v2113 = vand.u32 %v134, 4294901760
    %v2114 = vsub.f32 %v134, %v2113
    %2115 = vmatpush1.msra.mxu0 %v2114
    %v2116 = vand.u32 %v137, 4294901760
    %v2117 = vsub.f32 %v137, %v2116
    %2118 = vmatprep.subr.mxu0 %v2117
    %v2119 = vand.u32 %v136, 4294901760
    %v2120 = vsub.f32 %v136, %v2119
    %2121 = vmatpush1.msra.mxu0 %v2120
    %v2122 = vand.u32 %v139, 4294901760
    %v2123 = vsub.f32 %v139, %v2122
    %2124 = vmatprep.subr.mxu0 %v2123
    %v2125 = vand.u32 %v138, 4294901760
    %v2126 = vsub.f32 %v138, %v2125
    %2127 = vmatpush1.msra.mxu0 %v2126
    %v2128 = vand.u32 %v141, 4294901760
    %v2129 = vsub.f32 %v141, %v2128
    %2130 = vmatprep.subr.mxu0 %v2129
    %v2131 = vand.u32 %v140, 4294901760
    %v2132 = vsub.f32 %v140, %v2131
    %2133 = vmatpush1.msra.mxu0 %v2132
    %v2134 = vand.u32 %v143, 4294901760
    %v2135 = vsub.f32 %v143, %v2134
    %2136 = vmatprep.subr.mxu0 %v2135
    %v2137 = vand.u32 %v142, 4294901760
    %v2138 = vsub.f32 %v142, %v2137
    %2139 = vmatpush1.msra.mxu0 %v2138
    %v2140 = vand.u32 %v145, 4294901760
    %v2141 = vsub.f32 %v145, %v2140
    %2142 = vmatprep.subr.mxu0 %v2141
    %v2143 = vand.u32 %v144, 4294901760
    %v2144 = vsub.f32 %v144, %v2143
    %2145 = vmatpush1.msra.mxu0 %v2144
    %v2146 = vand.u32 %v147, 4294901760
    %v2147 = vsub.f32 %v147, %v2146
    %2148 = vmatprep.subr.mxu0 %v2147
    %v2149 = vand.u32 %v146, 4294901760
    %v2150 = vsub.f32 %v146, %v2149
    %2151 = vmatpush1.msra.mxu0 %v2150
    %v2152 = vand.u32 %v149, 4294901760
    %v2153 = vsub.f32 %v149, %v2152
    %2154 = vmatprep.subr.mxu0 %v2153
    %v2155 = vand.u32 %v148, 4294901760
    %v2156 = vsub.f32 %v148, %v2155
    %2157 = vmatpush1.msra.mxu0 %v2156
    %v2158 = vand.u32 %v151, 4294901760
    %v2159 = vsub.f32 %v151, %v2158
    %2160 = vmatprep.subr.mxu0 %v2159
    %v2161 = vand.u32 %v150, 4294901760
    %v2162 = vsub.f32 %v150, %v2161
    %2163 = vmatpush1.msra.mxu0 %v2162
    %v2164 = vand.u32 %v153, 4294901760
    %v2165 = vsub.f32 %v153, %v2164
    %2166 = vmatprep.subr.mxu0 %v2165
    %v2167 = vand.u32 %v152, 4294901760
    %v2168 = vsub.f32 %v152, %v2167
    %2169 = vmatpush1.msra.mxu0 %v2168
    %v2170 = vand.u32 %v155, 4294901760
    %v2171 = vsub.f32 %v155, %v2170
    %2172 = vmatprep.subr.mxu0 %v2171
    %v2173 = vand.u32 %v154, 4294901760
    %v2174 = vsub.f32 %v154, %v2173
    %2175 = vmatpush1.msra.mxu0 %v2174
    %v2176 = vand.u32 %v157, 4294901760
    %v2177 = vsub.f32 %v157, %v2176
    %2178 = vmatprep.subr.mxu0 %v2177
    %v2179 = vand.u32 %v156, 4294901760
    %v2180 = vsub.f32 %v156, %v2179
    %2181 = vmatpush1.msra.mxu0 %v2180
    %v2182 = vand.u32 %v159, 4294901760
    %v2183 = vsub.f32 %v159, %v2182
    %2184 = vmatprep.subr.mxu0 %v2183
    %v2185 = vand.u32 %v158, 4294901760
    %v2186 = vsub.f32 %v158, %v2185
    %2187 = vmatpush1.msra.mxu0 %v2186
    %v2188 = vand.u32 %v161, 4294901760
    %v2189 = vsub.f32 %v161, %v2188
    %2190 = vmatprep.subr.mxu0 %v2189
    %v2191 = vand.u32 %v160, 4294901760
    %v2192 = vsub.f32 %v160, %v2191
    %2193 = vmatpush1.msra.mxu0 %v2192
    %v2194 = vand.u32 %v163, 4294901760
    %v2195 = vsub.f32 %v163, %v2194
    %2196 = vmatprep.subr.mxu0 %v2195
    %v2197 = vand.u32 %v162, 4294901760
    %v2198 = vsub.f32 %v162, %v2197
    %2199 = vmatpush1.msra.mxu0 %v2198
    %v2200 = vand.u32 %v165, 4294901760
    %v2201 = vsub.f32 %v165, %v2200
    %2202 = vmatprep.subr.mxu0 %v2201
    %v2203 = vand.u32 %v164, 4294901760
    %v2204 = vsub.f32 %v164, %v2203
    %2205 = vmatpush1.msra.mxu0 %v2204
    %v2206 = vand.u32 %v167, 4294901760
    %v2207 = vsub.f32 %v167, %v2206
    %2208 = vmatprep.subr.mxu0 %v2207
    %v2209 = vand.u32 %v166, 4294901760
    %v2210 = vsub.f32 %v166, %v2209
    %2211 = vmatpush1.msra.mxu0 %v2210
    %v2212 = vand.u32 %v169, 4294901760
    %v2213 = vsub.f32 %v169, %v2212
    %2214 = vmatprep.subr.mxu0 %v2213
    %v2215 = vand.u32 %v168, 4294901760
    %v2216 = vsub.f32 %v168, %v2215
    %2217 = vmatpush1.msra.mxu0 %v2216
    %v2218 = vand.u32 %v199, 4294901760
    %v2219 = vsub.f32 %v199, %v2218
    %2220 = vmatprep.mubr.f32.mxu0 %v2219
    %v2221 = vand.u32 %v197, 4294901760
    %v2222 = vsub.f32 %v197, %v2221
    %2223 = vmatmul.mubr.f32.gmra.mrb[0].mxu0 %v2222
    %v2224 = vpop.f32.mrb[0].mxu0
    %v2225 = vadd.f32 %v2022, %v2224
    %v2226 = vpop.f32.mrb[0].mxu0
    %v2227 = vadd.f32 %v2024, %v2226
    %2228 = vdwg.mxu0
    %v2229 = vand.u32 %v107, 4294901760
    %2230 = vmatprep.subr.mxu0 %v2229
    %v2231 = vand.u32 %v106, 4294901760
    %2232 = vmatpush1.msra.mxu0 %v2231
    %v2233 = vand.u32 %v109, 4294901760
    %2234 = vmatprep.subr.mxu0 %v2233
    %v2235 = vand.u32 %v108, 4294901760
    %2236 = vmatpush1.msra.mxu0 %v2235
    %v2237 = vand.u32 %v111, 4294901760
    %2238 = vmatprep.subr.mxu0 %v2237
    %v2239 = vand.u32 %v110, 4294901760
    %2240 = vmatpush1.msra.mxu0 %v2239
    %v2241 = vand.u32 %v113, 4294901760
    %2242 = vmatprep.subr.mxu0 %v2241
    %v2243 = vand.u32 %v112, 4294901760
    %2244 = vmatpush1.msra.mxu0 %v2243
    %v2245 = vand.u32 %v115, 4294901760
    %2246 = vmatprep.subr.mxu0 %v2245
    %v2247 = vand.u32 %v114, 4294901760
    %2248 = vmatpush1.msra.mxu0 %v2247
    %v2249 = vand.u32 %v117, 4294901760
    %2250 = vmatprep.subr.mxu0 %v2249
    %v2251 = vand.u32 %v116, 4294901760
    %2252 = vmatpush1.msra.mxu0 %v2251
    %v2253 = vand.u32 %v119, 4294901760
    %2254 = vmatprep.subr.mxu0 %v2253
    %v2255 = vand.u32 %v118, 4294901760
    %2256 = vmatpush1.msra.mxu0 %v2255
    %v2257 = vand.u32 %v121, 4294901760
    %2258 = vmatprep.subr.mxu0 %v2257
    %v2259 = vand.u32 %v120, 4294901760
    %2260 = vmatpush1.msra.mxu0 %v2259
    %v2261 = vand.u32 %v123, 4294901760
    %2262 = vmatprep.subr.mxu0 %v2261
    %v2263 = vand.u32 %v122, 4294901760
    %2264 = vmatpush1.msra.mxu0 %v2263
    %v2265 = vand.u32 %v125, 4294901760
    %2266 = vmatprep.subr.mxu0 %v2265
    %v2267 = vand.u32 %v124, 4294901760
    %2268 = vmatpush1.msra.mxu0 %v2267
    %v2269 = vand.u32 %v127, 4294901760
    %2270 = vmatprep.subr.mxu0 %v2269
    %v2271 = vand.u32 %v126, 4294901760
    %2272 = vmatpush1.msra.mxu0 %v2271
    %v2273 = vand.u32 %v129, 4294901760
    %2274 = vmatprep.subr.mxu0 %v2273
    %v2275 = vand.u32 %v128, 4294901760
    %2276 = vmatpush1.msra.mxu0 %v2275
    %v2277 = vand.u32 %v131, 4294901760
    %2278 = vmatprep.subr.mxu0 %v2277
    %v2279 = vand.u32 %v130, 4294901760
    %2280 = vmatpush1.msra.mxu0 %v2279
    %v2281 = vand.u32 %v133, 4294901760
    %2282 = vmatprep.subr.mxu0 %v2281
    %v2283 = vand.u32 %v132, 4294901760
    %2284 = vmatpush1.msra.mxu0 %v2283
    %v2285 = vand.u32 %v135, 4294901760
    %2286 = vmatprep.subr.mxu0 %v2285
    %v2287 = vand.u32 %v134, 4294901760
    %2288 = vmatpush1.msra.mxu0 %v2287
    %v2289 = vand.u32 %v137, 4294901760
    %2290 = vmatprep.subr.mxu0 %v2289
    %v2291 = vand.u32 %v136, 4294901760
    %2292 = vmatpush1.msra.mxu0 %v2291
    %v2293 = vand.u32 %v139, 4294901760
    %2294 = vmatprep.subr.mxu0 %v2293
    %v2295 = vand.u32 %v138, 4294901760
    %2296 = vmatpush1.msra.mxu0 %v2295
    %v2297 = vand.u32 %v141, 4294901760
    %2298 = vmatprep.subr.mxu0 %v2297
    %v2299 = vand.u32 %v140, 4294901760
    %2300 = vmatpush1.msra.mxu0 %v2299
    %v2301 = vand.u32 %v143, 4294901760
    %2302 = vmatprep.subr.mxu0 %v2301
    %v2303 = vand.u32 %v142, 4294901760
    %2304 = vmatpush1.msra.mxu0 %v2303
    %v2305 = vand.u32 %v145, 4294901760
    %2306 = vmatprep.subr.mxu0 %v2305
    %v2307 = vand.u32 %v144, 4294901760
    %2308 = vmatpush1.msra.mxu0 %v2307
    %v2309 = vand.u32 %v147, 4294901760
    %2310 = vmatprep.subr.mxu0 %v2309
    %v2311 = vand.u32 %v146, 4294901760
    %2312 = vmatpush1.msra.mxu0 %v2311
    %v2313 = vand.u32 %v149, 4294901760
    %2314 = vmatprep.subr.mxu0 %v2313
    %v2315 = vand.u32 %v148, 4294901760
    %2316 = vmatpush1.msra.mxu0 %v2315
    %v2317 = vand.u32 %v151, 4294901760
    %2318 = vmatprep.subr.mxu0 %v2317
    %v2319 = vand.u32 %v150, 4294901760
    %2320 = vmatpush1.msra.mxu0 %v2319
    %v2321 = vand.u32 %v153, 4294901760
    %2322 = vmatprep.subr.mxu0 %v2321
    %v2323 = vand.u32 %v152, 4294901760
    %2324 = vmatpush1.msra.mxu0 %v2323
    %v2325 = vand.u32 %v155, 4294901760
    %2326 = vmatprep.subr.mxu0 %v2325
    %v2327 = vand.u32 %v154, 4294901760
    %2328 = vmatpush1.msra.mxu0 %v2327
    %v2329 = vand.u32 %v157, 4294901760
    %2330 = vmatprep.subr.mxu0 %v2329
    %v2331 = vand.u32 %v156, 4294901760
    %2332 = vmatpush1.msra.mxu0 %v2331
    %v2333 = vand.u32 %v159, 4294901760
    %2334 = vmatprep.subr.mxu0 %v2333
    %v2335 = vand.u32 %v158, 4294901760
    %2336 = vmatpush1.msra.mxu0 %v2335
    %v2337 = vand.u32 %v161, 4294901760
    %2338 = vmatprep.subr.mxu0 %v2337
    %v2339 = vand.u32 %v160, 4294901760
    %2340 = vmatpush1.msra.mxu0 %v2339
    %v2341 = vand.u32 %v163, 4294901760
    %2342 = vmatprep.subr.mxu0 %v2341
    %v2343 = vand.u32 %v162, 4294901760
    %2344 = vmatpush1.msra.mxu0 %v2343
    %v2345 = vand.u32 %v165, 4294901760
    %2346 = vmatprep.subr.mxu0 %v2345
    %v2347 = vand.u32 %v164, 4294901760
    %2348 = vmatpush1.msra.mxu0 %v2347
    %v2349 = vand.u32 %v167, 4294901760
    %2350 = vmatprep.subr.mxu0 %v2349
    %v2351 = vand.u32 %v166, 4294901760
    %2352 = vmatpush1.msra.mxu0 %v2351
    %v2353 = vand.u32 %v169, 4294901760
    %2354 = vmatprep.subr.mxu0 %v2353
    %v2355 = vand.u32 %v168, 4294901760
    %2356 = vmatpush1.msra.mxu0 %v2355
    %v2357 = vand.u32 %v199, 4294901760
    %v2358 = vsub.f32 %v199, %v2357
    %v2359 = vand.u32 %v2358, 4294901760
    %2360 = vmatprep.mubr.f32.mxu0 %v2359
    %v2361 = vand.u32 %v197, 4294901760
    %v2362 = vsub.f32 %v197, %v2361
    %v2363 = vand.u32 %v2362, 4294901760
    %2364 = vmatmul.mubr.f32.gmra.mrb[0].mxu0 %v2363
    %v2365 = vpop.f32.mrb[0].mxu0
    %v2366 = vadd.f32 %v2225, %v2365
    %v2367 = vpop.f32.mrb[0].mxu0
    %v2368 = vadd.f32 %v2227, %v2367
    %2369 = vdwg.mxu0
    %v2370 = vand.u32 %v107, 4294901760
    %v2371 = vsub.f32 %v107, %v2370
    %v2372 = vand.u32 %v2371, 4294901760
    %2373 = vmatprep.subr.mxu0 %v2372
    %v2374 = vand.u32 %v106, 4294901760
    %v2375 = vsub.f32 %v106, %v2374
    %v2376 = vand.u32 %v2375, 4294901760
    %2377 = vmatpush1.msra.mxu0 %v2376
    %v2378 = vand.u32 %v109, 4294901760
    %v2379 = vsub.f32 %v109, %v2378
    %v2380 = vand.u32 %v2379, 4294901760
    %2381 = vmatprep.subr.mxu0 %v2380
    %v2382 = vand.u32 %v108, 4294901760
    %v2383 = vsub.f32 %v108, %v2382
    %v2384 = vand.u32 %v2383, 4294901760
    %2385 = vmatpush1.msra.mxu0 %v2384
    %v2386 = vand.u32 %v111, 4294901760
    %v2387 = vsub.f32 %v111, %v2386
    %v2388 = vand.u32 %v2387, 4294901760
    %2389 = vmatprep.subr.mxu0 %v2388
    %v2390 = vand.u32 %v110, 4294901760
    %v2391 = vsub.f32 %v110, %v2390
    %v2392 = vand.u32 %v2391, 4294901760
    %2393 = vmatpush1.msra.mxu0 %v2392
    %v2394 = vand.u32 %v113, 4294901760
    %v2395 = vsub.f32 %v113, %v2394
    %v2396 = vand.u32 %v2395, 4294901760
    %2397 = vmatprep.subr.mxu0 %v2396
    %v2398 = vand.u32 %v112, 4294901760
    %v2399 = vsub.f32 %v112, %v2398
    %v2400 = vand.u32 %v2399, 4294901760
    %2401 = vmatpush1.msra.mxu0 %v2400
    %v2402 = vand.u32 %v115, 4294901760
    %v2403 = vsub.f32 %v115, %v2402
    %v2404 = vand.u32 %v2403, 4294901760
    %2405 = vmatprep.subr.mxu0 %v2404
    %v2406 = vand.u32 %v114, 4294901760
    %v2407 = vsub.f32 %v114, %v2406
    %v2408 = vand.u32 %v2407, 4294901760
    %2409 = vmatpush1.msra.mxu0 %v2408
    %v2410 = vand.u32 %v117, 4294901760
    %v2411 = vsub.f32 %v117, %v2410
    %v2412 = vand.u32 %v2411, 4294901760
    %2413 = vmatprep.subr.mxu0 %v2412
    %v2414 = vand.u32 %v116, 4294901760
    %v2415 = vsub.f32 %v116, %v2414
    %v2416 = vand.u32 %v2415, 4294901760
    %2417 = vmatpush1.msra.mxu0 %v2416
    %v2418 = vand.u32 %v119, 4294901760
    %v2419 = vsub.f32 %v119, %v2418
    %v2420 = vand.u32 %v2419, 4294901760
    %2421 = vmatprep.subr.mxu0 %v2420
    %v2422 = vand.u32 %v118, 4294901760
    %v2423 = vsub.f32 %v118, %v2422
    %v2424 = vand.u32 %v2423, 4294901760
    %2425 = vmatpush1.msra.mxu0 %v2424
    %v2426 = vand.u32 %v121, 4294901760
    %v2427 = vsub.f32 %v121, %v2426
    %v2428 = vand.u32 %v2427, 4294901760
    %2429 = vmatprep.subr.mxu0 %v2428
    %v2430 = vand.u32 %v120, 4294901760
    %v2431 = vsub.f32 %v120, %v2430
    %v2432 = vand.u32 %v2431, 4294901760
    %2433 = vmatpush1.msra.mxu0 %v2432
    %v2434 = vand.u32 %v123, 4294901760
    %v2435 = vsub.f32 %v123, %v2434
    %v2436 = vand.u32 %v2435, 4294901760
    %2437 = vmatprep.subr.mxu0 %v2436
    %v2438 = vand.u32 %v122, 4294901760
    %v2439 = vsub.f32 %v122, %v2438
    %v2440 = vand.u32 %v2439, 4294901760
    %2441 = vmatpush1.msra.mxu0 %v2440
    %v2442 = vand.u32 %v125, 4294901760
    %v2443 = vsub.f32 %v125, %v2442
    %v2444 = vand.u32 %v2443, 4294901760
    %2445 = vmatprep.subr.mxu0 %v2444
    %v2446 = vand.u32 %v124, 4294901760
    %v2447 = vsub.f32 %v124, %v2446
    %v2448 = vand.u32 %v2447, 4294901760
    %2449 = vmatpush1.msra.mxu0 %v2448
    %v2450 = vand.u32 %v127, 4294901760
    %v2451 = vsub.f32 %v127, %v2450
    %v2452 = vand.u32 %v2451, 4294901760
    %2453 = vmatprep.subr.mxu0 %v2452
    %v2454 = vand.u32 %v126, 4294901760
    %v2455 = vsub.f32 %v126, %v2454
    %v2456 = vand.u32 %v2455, 4294901760
    %2457 = vmatpush1.msra.mxu0 %v2456
    %v2458 = vand.u32 %v129, 4294901760
    %v2459 = vsub.f32 %v129, %v2458
    %v2460 = vand.u32 %v2459, 4294901760
    %2461 = vmatprep.subr.mxu0 %v2460
    %v2462 = vand.u32 %v128, 4294901760
    %v2463 = vsub.f32 %v128, %v2462
    %v2464 = vand.u32 %v2463, 4294901760
    %2465 = vmatpush1.msra.mxu0 %v2464
    %v2466 = vand.u32 %v131, 4294901760
    %v2467 = vsub.f32 %v131, %v2466
    %v2468 = vand.u32 %v2467, 4294901760
    %2469 = vmatprep.subr.mxu0 %v2468
    %v2470 = vand.u32 %v130, 4294901760
    %v2471 = vsub.f32 %v130, %v2470
    %v2472 = vand.u32 %v2471, 4294901760
    %2473 = vmatpush1.msra.mxu0 %v2472
    %v2474 = vand.u32 %v133, 4294901760
    %v2475 = vsub.f32 %v133, %v2474
    %v2476 = vand.u32 %v2475, 4294901760
    %2477 = vmatprep.subr.mxu0 %v2476
    %v2478 = vand.u32 %v132, 4294901760
    %v2479 = vsub.f32 %v132, %v2478
    %v2480 = vand.u32 %v2479, 4294901760
    %2481 = vmatpush1.msra.mxu0 %v2480
    %v2482 = vand.u32 %v135, 4294901760
    %v2483 = vsub.f32 %v135, %v2482
    %v2484 = vand.u32 %v2483, 4294901760
    %2485 = vmatprep.subr.mxu0 %v2484
    %v2486 = vand.u32 %v134, 4294901760
    %v2487 = vsub.f32 %v134, %v2486
    %v2488 = vand.u32 %v2487, 4294901760
    %2489 = vmatpush1.msra.mxu0 %v2488
    %v2490 = vand.u32 %v137, 4294901760
    %v2491 = vsub.f32 %v137, %v2490
    %v2492 = vand.u32 %v2491, 4294901760
    %2493 = vmatprep.subr.mxu0 %v2492
    %v2494 = vand.u32 %v136, 4294901760
    %v2495 = vsub.f32 %v136, %v2494
    %v2496 = vand.u32 %v2495, 4294901760
    %2497 = vmatpush1.msra.mxu0 %v2496
    %v2498 = vand.u32 %v139, 4294901760
    %v2499 = vsub.f32 %v139, %v2498
    %v2500 = vand.u32 %v2499, 4294901760
    %2501 = vmatprep.subr.mxu0 %v2500
    %v2502 = vand.u32 %v138, 4294901760
    %v2503 = vsub.f32 %v138, %v2502
    %v2504 = vand.u32 %v2503, 4294901760
    %2505 = vmatpush1.msra.mxu0 %v2504
    %v2506 = vand.u32 %v141, 4294901760
    %v2507 = vsub.f32 %v141, %v2506
    %v2508 = vand.u32 %v2507, 4294901760
    %2509 = vmatprep.subr.mxu0 %v2508
    %v2510 = vand.u32 %v140, 4294901760
    %v2511 = vsub.f32 %v140, %v2510
    %v2512 = vand.u32 %v2511, 4294901760
    %2513 = vmatpush1.msra.mxu0 %v2512
    %v2514 = vand.u32 %v143, 4294901760
    %v2515 = vsub.f32 %v143, %v2514
    %v2516 = vand.u32 %v2515, 4294901760
    %2517 = vmatprep.subr.mxu0 %v2516
    %v2518 = vand.u32 %v142, 4294901760
    %v2519 = vsub.f32 %v142, %v2518
    %v2520 = vand.u32 %v2519, 4294901760
    %2521 = vmatpush1.msra.mxu0 %v2520
    %v2522 = vand.u32 %v145, 4294901760
    %v2523 = vsub.f32 %v145, %v2522
    %v2524 = vand.u32 %v2523, 4294901760
    %2525 = vmatprep.subr.mxu0 %v2524
    %v2526 = vand.u32 %v144, 4294901760
    %v2527 = vsub.f32 %v144, %v2526
    %v2528 = vand.u32 %v2527, 4294901760
    %2529 = vmatpush1.msra.mxu0 %v2528
    %v2530 = vand.u32 %v147, 4294901760
    %v2531 = vsub.f32 %v147, %v2530
    %v2532 = vand.u32 %v2531, 4294901760
    %2533 = vmatprep.subr.mxu0 %v2532
    %v2534 = vand.u32 %v146, 4294901760
    %v2535 = vsub.f32 %v146, %v2534
    %v2536 = vand.u32 %v2535, 4294901760
    %2537 = vmatpush1.msra.mxu0 %v2536
    %v2538 = vand.u32 %v149, 4294901760
    %v2539 = vsub.f32 %v149, %v2538
    %v2540 = vand.u32 %v2539, 4294901760
    %2541 = vmatprep.subr.mxu0 %v2540
    %v2542 = vand.u32 %v148, 4294901760
    %v2543 = vsub.f32 %v148, %v2542
    %v2544 = vand.u32 %v2543, 4294901760
    %2545 = vmatpush1.msra.mxu0 %v2544
    %v2546 = vand.u32 %v151, 4294901760
    %v2547 = vsub.f32 %v151, %v2546
    %v2548 = vand.u32 %v2547, 4294901760
    %2549 = vmatprep.subr.mxu0 %v2548
    %v2550 = vand.u32 %v150, 4294901760
    %v2551 = vsub.f32 %v150, %v2550
    %v2552 = vand.u32 %v2551, 4294901760
    %2553 = vmatpush1.msra.mxu0 %v2552
    %v2554 = vand.u32 %v153, 4294901760
    %v2555 = vsub.f32 %v153, %v2554
    %v2556 = vand.u32 %v2555, 4294901760
    %2557 = vmatprep.subr.mxu0 %v2556
    %v2558 = vand.u32 %v152, 4294901760
    %v2559 = vsub.f32 %v152, %v2558
    %v2560 = vand.u32 %v2559, 4294901760
    %2561 = vmatpush1.msra.mxu0 %v2560
    %v2562 = vand.u32 %v155, 4294901760
    %v2563 = vsub.f32 %v155, %v2562
    %v2564 = vand.u32 %v2563, 4294901760
    %2565 = vmatprep.subr.mxu0 %v2564
    %v2566 = vand.u32 %v154, 4294901760
    %v2567 = vsub.f32 %v154, %v2566
    %v2568 = vand.u32 %v2567, 4294901760
    %2569 = vmatpush1.msra.mxu0 %v2568
    %v2570 = vand.u32 %v157, 4294901760
    %v2571 = vsub.f32 %v157, %v2570
    %v2572 = vand.u32 %v2571, 4294901760
    %2573 = vmatprep.subr.mxu0 %v2572
    %v2574 = vand.u32 %v156, 4294901760
    %v2575 = vsub.f32 %v156, %v2574
    %v2576 = vand.u32 %v2575, 4294901760
    %2577 = vmatpush1.msra.mxu0 %v2576
    %v2578 = vand.u32 %v159, 4294901760
    %v2579 = vsub.f32 %v159, %v2578
    %v2580 = vand.u32 %v2579, 4294901760
    %2581 = vmatprep.subr.mxu0 %v2580
    %v2582 = vand.u32 %v158, 4294901760
    %v2583 = vsub.f32 %v158, %v2582
    %v2584 = vand.u32 %v2583, 4294901760
    %2585 = vmatpush1.msra.mxu0 %v2584
    %v2586 = vand.u32 %v161, 4294901760
    %v2587 = vsub.f32 %v161, %v2586
    %v2588 = vand.u32 %v2587, 4294901760
    %2589 = vmatprep.subr.mxu0 %v2588
    %v2590 = vand.u32 %v160, 4294901760
    %v2591 = vsub.f32 %v160, %v2590
    %v2592 = vand.u32 %v2591, 4294901760
    %2593 = vmatpush1.msra.mxu0 %v2592
    %v2594 = vand.u32 %v163, 4294901760
    %v2595 = vsub.f32 %v163, %v2594
    %v2596 = vand.u32 %v2595, 4294901760
    %2597 = vmatprep.subr.mxu0 %v2596
    %v2598 = vand.u32 %v162, 4294901760
    %v2599 = vsub.f32 %v162, %v2598
    %v2600 = vand.u32 %v2599, 4294901760
    %2601 = vmatpush1.msra.mxu0 %v2600
    %v2602 = vand.u32 %v165, 4294901760
    %v2603 = vsub.f32 %v165, %v2602
    %v2604 = vand.u32 %v2603, 4294901760
    %2605 = vmatprep.subr.mxu0 %v2604
    %v2606 = vand.u32 %v164, 4294901760
    %v2607 = vsub.f32 %v164, %v2606
    %v2608 = vand.u32 %v2607, 4294901760
    %2609 = vmatpush1.msra.mxu0 %v2608
    %v2610 = vand.u32 %v167, 4294901760
    %v2611 = vsub.f32 %v167, %v2610
    %v2612 = vand.u32 %v2611, 4294901760
    %2613 = vmatprep.subr.mxu0 %v2612
    %v2614 = vand.u32 %v166, 4294901760
    %v2615 = vsub.f32 %v166, %v2614
    %v2616 = vand.u32 %v2615, 4294901760
    %2617 = vmatpush1.msra.mxu0 %v2616
    %v2618 = vand.u32 %v169, 4294901760
    %v2619 = vsub.f32 %v169, %v2618
    %v2620 = vand.u32 %v2619, 4294901760
    %2621 = vmatprep.subr.mxu0 %v2620
    %v2622 = vand.u32 %v168, 4294901760
    %v2623 = vsub.f32 %v168, %v2622
    %v2624 = vand.u32 %v2623, 4294901760
    %2625 = vmatpush1.msra.mxu0 %v2624
    %v2626 = vand.u32 %v199, 4294901760
    %2627 = vmatprep.mubr.f32.mxu0 %v2626
    %v2628 = vand.u32 %v197, 4294901760
    %2629 = vmatmul.mubr.f32.gmra.mrb[0].mxu0 %v2628
    %v2630 = vpop.f32.mrb[0].mxu0
    %v2631 = vadd.f32 %v2366, %v2630
    %v2632 = vpop.f32.mrb[0].mxu0
    %v2633 = vadd.f32 %v2368, %v2632
    %2634 = vdwg.mxu0
    %v2635 = vand.u32 %v107, 4294901760
    %2636 = vmatprep.subr.mxu0 %v2635
    %v2637 = vand.u32 %v106, 4294901760
    %2638 = vmatpush1.msra.mxu0 %v2637
    %v2639 = vand.u32 %v109, 4294901760
    %2640 = vmatprep.subr.mxu0 %v2639
    %v2641 = vand.u32 %v108, 4294901760
    %2642 = vmatpush1.msra.mxu0 %v2641
    %v2643 = vand.u32 %v111, 4294901760
    %2644 = vmatprep.subr.mxu0 %v2643
    %v2645 = vand.u32 %v110, 4294901760
    %2646 = vmatpush1.msra.mxu0 %v2645
    %v2647 = vand.u32 %v113, 4294901760
    %2648 = vmatprep.subr.mxu0 %v2647
    %v2649 = vand.u32 %v112, 4294901760
    %2650 = vmatpush1.msra.mxu0 %v2649
    %v2651 = vand.u32 %v115, 4294901760
    %2652 = vmatprep.subr.mxu0 %v2651
    %v2653 = vand.u32 %v114, 4294901760
    %2654 = vmatpush1.msra.mxu0 %v2653
    %v2655 = vand.u32 %v117, 4294901760
    %2656 = vmatprep.subr.mxu0 %v2655
    %v2657 = vand.u32 %v116, 4294901760
    %2658 = vmatpush1.msra.mxu0 %v2657
    %v2659 = vand.u32 %v119, 4294901760
    %2660 = vmatprep.subr.mxu0 %v2659
    %v2661 = vand.u32 %v118, 4294901760
    %2662 = vmatpush1.msra.mxu0 %v2661
    %v2663 = vand.u32 %v121, 4294901760
    %2664 = vmatprep.subr.mxu0 %v2663
    %v2665 = vand.u32 %v120, 4294901760
    %2666 = vmatpush1.msra.mxu0 %v2665
    %v2667 = vand.u32 %v123, 4294901760
    %2668 = vmatprep.subr.mxu0 %v2667
    %v2669 = vand.u32 %v122, 4294901760
    %2670 = vmatpush1.msra.mxu0 %v2669
    %v2671 = vand.u32 %v125, 4294901760
    %2672 = vmatprep.subr.mxu0 %v2671
    %v2673 = vand.u32 %v124, 4294901760
    %2674 = vmatpush1.msra.mxu0 %v2673
    %v2675 = vand.u32 %v127, 4294901760
    %2676 = vmatprep.subr.mxu0 %v2675
    %v2677 = vand.u32 %v126, 4294901760
    %2678 = vmatpush1.msra.mxu0 %v2677
    %v2679 = vand.u32 %v129, 4294901760
    %2680 = vmatprep.subr.mxu0 %v2679
    %v2681 = vand.u32 %v128, 4294901760
    %2682 = vmatpush1.msra.mxu0 %v2681
    %v2683 = vand.u32 %v131, 4294901760
    %2684 = vmatprep.subr.mxu0 %v2683
    %v2685 = vand.u32 %v130, 4294901760
    %2686 = vmatpush1.msra.mxu0 %v2685
    %v2687 = vand.u32 %v133, 4294901760
    %2688 = vmatprep.subr.mxu0 %v2687
    %v2689 = vand.u32 %v132, 4294901760
    %2690 = vmatpush1.msra.mxu0 %v2689
    %v2691 = vand.u32 %v135, 4294901760
    %2692 = vmatprep.subr.mxu0 %v2691
    %v2693 = vand.u32 %v134, 4294901760
    %2694 = vmatpush1.msra.mxu0 %v2693
    %v2695 = vand.u32 %v137, 4294901760
    %2696 = vmatprep.subr.mxu0 %v2695
    %v2697 = vand.u32 %v136, 4294901760
    %2698 = vmatpush1.msra.mxu0 %v2697
    %v2699 = vand.u32 %v139, 4294901760
    %2700 = vmatprep.subr.mxu0 %v2699
    %v2701 = vand.u32 %v138, 4294901760
    %2702 = vmatpush1.msra.mxu0 %v2701
    %v2703 = vand.u32 %v141, 4294901760
    %2704 = vmatprep.subr.mxu0 %v2703
    %v2705 = vand.u32 %v140, 4294901760
    %2706 = vmatpush1.msra.mxu0 %v2705
    %v2707 = vand.u32 %v143, 4294901760
    %2708 = vmatprep.subr.mxu0 %v2707
    %v2709 = vand.u32 %v142, 4294901760
    %2710 = vmatpush1.msra.mxu0 %v2709
    %v2711 = vand.u32 %v145, 4294901760
    %2712 = vmatprep.subr.mxu0 %v2711
    %v2713 = vand.u32 %v144, 4294901760
    %2714 = vmatpush1.msra.mxu0 %v2713
    %v2715 = vand.u32 %v147, 4294901760
    %2716 = vmatprep.subr.mxu0 %v2715
    %v2717 = vand.u32 %v146, 4294901760
    %2718 = vmatpush1.msra.mxu0 %v2717
    %v2719 = vand.u32 %v149, 4294901760
    %2720 = vmatprep.subr.mxu0 %v2719
    %v2721 = vand.u32 %v148, 4294901760
    %2722 = vmatpush1.msra.mxu0 %v2721
    %v2723 = vand.u32 %v151, 4294901760
    %2724 = vmatprep.subr.mxu0 %v2723
    %v2725 = vand.u32 %v150, 4294901760
    %2726 = vmatpush1.msra.mxu0 %v2725
    %v2727 = vand.u32 %v153, 4294901760
    %2728 = vmatprep.subr.mxu0 %v2727
    %v2729 = vand.u32 %v152, 4294901760
    %2730 = vmatpush1.msra.mxu0 %v2729
    %v2731 = vand.u32 %v155, 4294901760
    %2732 = vmatprep.subr.mxu0 %v2731
    %v2733 = vand.u32 %v154, 4294901760
    %2734 = vmatpush1.msra.mxu0 %v2733
    %v2735 = vand.u32 %v157, 4294901760
    %2736 = vmatprep.subr.mxu0 %v2735
    %v2737 = vand.u32 %v156, 4294901760
    %2738 = vmatpush1.msra.mxu0 %v2737
    %v2739 = vand.u32 %v159, 4294901760
    %2740 = vmatprep.subr.mxu0 %v2739
    %v2741 = vand.u32 %v158, 4294901760
    %2742 = vmatpush1.msra.mxu0 %v2741
    %v2743 = vand.u32 %v161, 4294901760
    %2744 = vmatprep.subr.mxu0 %v2743
    %v2745 = vand.u32 %v160, 4294901760
    %2746 = vmatpush1.msra.mxu0 %v2745
    %v2747 = vand.u32 %v163, 4294901760
    %2748 = vmatprep.subr.mxu0 %v2747
    %v2749 = vand.u32 %v162, 4294901760
    %2750 = vmatpush1.msra.mxu0 %v2749
    %v2751 = vand.u32 %v165, 4294901760
    %2752 = vmatprep.subr.mxu0 %v2751
    %v2753 = vand.u32 %v164, 4294901760
    %2754 = vmatpush1.msra.mxu0 %v2753
    %v2755 = vand.u32 %v167, 4294901760
    %2756 = vmatprep.subr.mxu0 %v2755
    %v2757 = vand.u32 %v166, 4294901760
    %2758 = vmatpush1.msra.mxu0 %v2757
    %v2759 = vand.u32 %v169, 4294901760
    %2760 = vmatprep.subr.mxu0 %v2759
    %v2761 = vand.u32 %v168, 4294901760
    %2762 = vmatpush1.msra.mxu0 %v2761
    %v2763 = vand.u32 %v199, 4294901760
    %2764 = vmatprep.mubr.f32.mxu0 %v2763
    %v2765 = vand.u32 %v197, 4294901760
    %2766 = vmatmul.mubr.f32.gmra.mrb[0].mxu0 %v2765
    %v2767 = vpop.f32.mrb[0].mxu0
    %v2768 = vadd.f32 %v2631, %v2767
    %v2769 = vpop.f32.mrb[0].mxu0
    %v2770 = vadd.f32 %v2633, %v2769
    %2771 = vdwg.mxu0
    %v2772 = vmax.f32 %v2768, %v2770
    %v2773 = vmax.f32 %v2772, 0.0
    %v2774 = vld [vmem:[%s3] sm:$0xff]
    %v2775 = vld [vmem:[%s3 + $0x8] sm:$0xff]
    %v2776 = vld [vmem:[%s3 + $0x10] sm:$0xff]
    %v2777 = vld [vmem:[%s3 + $0x18] sm:$0xff]
    %v2778 = vld [vmem:[%s3 + $0x20] sm:$0xff]
    %v2779 = vld [vmem:[%s3 + $0x28] sm:$0xff]
    %v2780 = vld [vmem:[%s3 + $0x30] sm:$0xff]
    %v2781 = vld [vmem:[%s3 + $0x38] sm:$0xff]
    %v2782 = vld [vmem:[%s3 + $0x40] sm:$0xff]
    %v2783 = vld [vmem:[%s3 + $0x48] sm:$0xff]
    %v2784 = vld [vmem:[%s3 + $0x50] sm:$0xff]
    %v2785 = vld [vmem:[%s3 + $0x58] sm:$0xff]
    %v2786 = vld [vmem:[%s3 + $0x60] sm:$0xff]
    %v2787 = vld [vmem:[%s3 + $0x68] sm:$0xff]
    %v2788 = vld [vmem:[%s3 + $0x70] sm:$0xff]
    %v2789 = vld [vmem:[%s3 + $0x78] sm:$0xff]
    %v2790 = vld [vmem:[%s4] sm:$0x1]
    %v2792 = vlaneseq
    %v2793 = vshrl.u32 %v2792, 7
    %v2794 = vsub.s32 0, %v2793
    %v2795 = vrot.slane %v2790, %v2794
    %2797 = vmatprep.subr.mxu0 0.0
    %v2798 = vand.u32 %v2774, 4294901760
    %2799 = vmatpush1.msra.mxu0 %v2798
    %2800 = vmatprep.subr.mxu0 0.0
    %v2801 = vand.u32 %v2775, 4294901760
    %2802 = vmatpush1.msra.mxu0 %v2801
    %2803 = vmatprep.subr.mxu0 0.0
    %v2804 = vand.u32 %v2776, 4294901760
    %2805 = vmatpush1.msra.mxu0 %v2804
    %2806 = vmatprep.subr.mxu0 0.0
    %v2807 = vand.u32 %v2777, 4294901760
    %2808 = vmatpush1.msra.mxu0 %v2807
    %2809 = vmatprep.subr.mxu0 0.0
    %v2810 = vand.u32 %v2778, 4294901760
    %2811 = vmatpush1.msra.mxu0 %v2810
    %2812 = vmatprep.subr.mxu0 0.0
    %v2813 = vand.u32 %v2779, 4294901760
    %2814 = vmatpush1.msra.mxu0 %v2813
    %2815 = vmatprep.subr.mxu0 0.0
    %v2816 = vand.u32 %v2780, 4294901760
    %2817 = vmatpush1.msra.mxu0 %v2816
    %2818 = vmatprep.subr.mxu0 0.0
    %v2819 = vand.u32 %v2781, 4294901760
    %2820 = vmatpush1.msra.mxu0 %v2819
    %2821 = vmatprep.subr.mxu0 0.0
    %v2822 = vand.u32 %v2782, 4294901760
    %2823 = vmatpush1.msra.mxu0 %v2822
    %2824 = vmatprep.subr.mxu0 0.0
    %v2825 = vand.u32 %v2783, 4294901760
    %2826 = vmatpush1.msra.mxu0 %v2825
    %2827 = vmatprep.subr.mxu0 0.0
    %v2828 = vand.u32 %v2784, 4294901760
    %2829 = vmatpush1.msra.mxu0 %v2828
    %2830 = vmatprep.subr.mxu0 0.0
    %v2831 = vand.u32 %v2785, 4294901760
    %2832 = vmatpush1.msra.mxu0 %v2831
    %2833 = vmatprep.subr.mxu0 0.0
    %v2834 = vand.u32 %v2786, 4294901760
    %2835 = vmatpush1.msra.mxu0 %v2834
    %2836 = vmatprep.subr.mxu0 0.0
    %v2837 = vand.u32 %v2787, 4294901760
    %2838 = vmatpush1.msra.mxu0 %v2837
    %2839 = vmatprep.subr.mxu0 0.0
    %v2840 = vand.u32 %v2788, 4294901760
    %2841 = vmatpush1.msra.mxu0 %v2840
    %2842 = vmatprep.subr.mxu0 0.0
    %v2843 = vand.u32 %v2789, 4294901760
    %2844 = vmatpush1.msra.mxu0 %v2843
    %2845 = vmatprep.subr.mxu0 0.0
    %2846 = vmatpush1.msra.mxu0 0.0
    %2847 = vmatprep.subr.mxu0 0.0
    %2848 = vmatpush1.msra.mxu0 0.0
    %2849 = vmatprep.subr.mxu0 0.0
    %2850 = vmatpush1.msra.mxu0 0.0
    %2851 = vmatprep.subr.mxu0 0.0
    %2852 = vmatpush1.msra.mxu0 0.0
    %2853 = vmatprep.subr.mxu0 0.0
    %2854 = vmatpush1.msra.mxu0 0.0
    %2855 = vmatprep.subr.mxu0 0.0
    %2856 = vmatpush1.msra.mxu0 0.0
    %2857 = vmatprep.subr.mxu0 0.0
    %2858 = vmatpush1.msra.mxu0 0.0
    %2859 = vmatprep.subr.mxu0 0.0
    %2860 = vmatpush1.msra.mxu0 0.0
    %2861 = vmatprep.subr.mxu0 0.0
    %2862 = vmatpush1.msra.mxu0 0.0
    %2863 = vmatprep.subr.mxu0 0.0
    %2864 = vmatpush1.msra.mxu0 0.0
    %2865 = vmatprep.subr.mxu0 0.0
    %2866 = vmatpush1.msra.mxu0 0.0
    %2867 = vmatprep.subr.mxu0 0.0
    %2868 = vmatpush1.msra.mxu0 0.0
    %2869 = vmatprep.subr.mxu0 0.0
    %2870 = vmatpush1.msra.mxu0 0.0
    %2871 = vmatprep.subr.mxu0 0.0
    %2872 = vmatpush1.msra.mxu0 0.0
    %2873 = vmatprep.subr.mxu0 0.0
    %2874 = vmatpush1.msra.mxu0 0.0
    %2875 = vmatprep.subr.mxu0 0.0
    %2876 = vmatpush1.msra.mxu0 0.0
    %2877 = vmatprep.mubr.f32.mxu0 0.0
    %v2878 = vand.u32 %v2773, 4294901760
    %v2879 = vsub.f32 %v2773, %v2878
    %v2880 = vand.u32 %v2879, 4294901760
    %v2881 = vsub.f32 %v2879, %v2880
    %v2882 = vand.u32 %v2881, 4294901760
    %2883 = vmatmul.mubr.f32.gmra.mrb[0].mxu0 %v2882
    %v2884 = vpop.f32.mrb[0].mxu0
    %v2885 = vadd.f32 %v2795, %v2884
    %v2886 = vpop.f32.mrb[0].mxu0
    %2887 = vdwg.mxu0
    %2888 = vmatprep.subr.mxu0 0.0
    %v2889 = vand.u32 %v2774, 4294901760
    %v2890 = vsub.f32 %v2774, %v2889
    %v2891 = vand.u32 %v2890, 4294901760
    %v2892 = vsub.f32 %v2890, %v2891
    %v2893 = vand.u32 %v2892, 4294901760
    %2894 = vmatpush1.msra.mxu0 %v2893
    %2895 = vmatprep.subr.mxu0 0.0
    %v2896 = vand.u32 %v2775, 4294901760
    %v2897 = vsub.f32 %v2775, %v2896
    %v2898 = vand.u32 %v2897, 4294901760
    %v2899 = vsub.f32 %v2897, %v2898
    %v2900 = vand.u32 %v2899, 4294901760
    %2901 = vmatpush1.msra.mxu0 %v2900
    %2902 = vmatprep.subr.mxu0 0.0
    %v2903 = vand.u32 %v2776, 4294901760
    %v2904 = vsub.f32 %v2776, %v2903
    %v2905 = vand.u32 %v2904, 4294901760
    %v2906 = vsub.f32 %v2904, %v2905
    %v2907 = vand.u32 %v2906, 4294901760
    %2908 = vmatpush1.msra.mxu0 %v2907
    %2909 = vmatprep.subr.mxu0 0.0
    %v2910 = vand.u32 %v2777, 4294901760
    %v2911 = vsub.f32 %v2777, %v2910
    %v2912 = vand.u32 %v2911, 4294901760
    %v2913 = vsub.f32 %v2911, %v2912
    %v2914 = vand.u32 %v2913, 4294901760
    %2915 = vmatpush1.msra.mxu0 %v2914
    %2916 = vmatprep.subr.mxu0 0.0
    %v2917 = vand.u32 %v2778, 4294901760
    %v2918 = vsub.f32 %v2778, %v2917
    %v2919 = vand.u32 %v2918, 4294901760
    %v2920 = vsub.f32 %v2918, %v2919
    %v2921 = vand.u32 %v2920, 4294901760
    %2922 = vmatpush1.msra.mxu0 %v2921
    %2923 = vmatprep.subr.mxu0 0.0
    %v2924 = vand.u32 %v2779, 4294901760
    %v2925 = vsub.f32 %v2779, %v2924
    %v2926 = vand.u32 %v2925, 4294901760
    %v2927 = vsub.f32 %v2925, %v2926
    %v2928 = vand.u32 %v2927, 4294901760
    %2929 = vmatpush1.msra.mxu0 %v2928
    %2930 = vmatprep.subr.mxu0 0.0
    %v2931 = vand.u32 %v2780, 4294901760
    %v2932 = vsub.f32 %v2780, %v2931
    %v2933 = vand.u32 %v2932, 4294901760
    %v2934 = vsub.f32 %v2932, %v2933
    %v2935 = vand.u32 %v2934, 4294901760
    %2936 = vmatpush1.msra.mxu0 %v2935
    %2937 = vmatprep.subr.mxu0 0.0
    %v2938 = vand.u32 %v2781, 4294901760
    %v2939 = vsub.f32 %v2781, %v2938
    %v2940 = vand.u32 %v2939, 4294901760
    %v2941 = vsub.f32 %v2939, %v2940
    %v2942 = vand.u32 %v2941, 4294901760
    %2943 = vmatpush1.msra.mxu0 %v2942
    %2944 = vmatprep.subr.mxu0 0.0
    %v2945 = vand.u32 %v2782, 4294901760
    %v2946 = vsub.f32 %v2782, %v2945
    %v2947 = vand.u32 %v2946, 4294901760
    %v2948 = vsub.f32 %v2946, %v2947
    %v2949 = vand.u32 %v2948, 4294901760
    %2950 = vmatpush1.msra.mxu0 %v2949
    %2951 = vmatprep.subr.mxu0 0.0
    %v2952 = vand.u32 %v2783, 4294901760
    %v2953 = vsub.f32 %v2783, %v2952
    %v2954 = vand.u32 %v2953, 4294901760
    %v2955 = vsub.f32 %v2953, %v2954
    %v2956 = vand.u32 %v2955, 4294901760
    %2957 = vmatpush1.msra.mxu0 %v2956
    %2958 = vmatprep.subr.mxu0 0.0
    %v2959 = vand.u32 %v2784, 4294901760
    %v2960 = vsub.f32 %v2784, %v2959
    %v2961 = vand.u32 %v2960, 4294901760
    %v2962 = vsub.f32 %v2960, %v2961
    %v2963 = vand.u32 %v2962, 4294901760
    %2964 = vmatpush1.msra.mxu0 %v2963
    %2965 = vmatprep.subr.mxu0 0.0
    %v2966 = vand.u32 %v2785, 4294901760
    %v2967 = vsub.f32 %v2785, %v2966
    %v2968 = vand.u32 %v2967, 4294901760
    %v2969 = vsub.f32 %v2967, %v2968
    %v2970 = vand.u32 %v2969, 4294901760
    %2971 = vmatpush1.msra.mxu0 %v2970
    %2972 = vmatprep.subr.mxu0 0.0
    %v2973 = vand.u32 %v2786, 4294901760
    %v2974 = vsub.f32 %v2786, %v2973
    %v2975 = vand.u32 %v2974, 4294901760
    %v2976 = vsub.f32 %v2974, %v2975
    %v2977 = vand.u32 %v2976, 4294901760
    %2978 = vmatpush1.msra.mxu0 %v2977
    %2979 = vmatprep.subr.mxu0 0.0
    %v2980 = vand.u32 %v2787, 4294901760
    %v2981 = vsub.f32 %v2787, %v2980
    %v2982 = vand.u32 %v2981, 4294901760
    %v2983 = vsub.f32 %v2981, %v2982
    %v2984 = vand.u32 %v2983, 4294901760
    %2985 = vmatpush1.msra.mxu0 %v2984
    %2986 = vmatprep.subr.mxu0 0.0
    %v2987 = vand.u32 %v2788, 4294901760
    %v2988 = vsub.f32 %v2788, %v2987
    %v2989 = vand.u32 %v2988, 4294901760
    %v2990 = vsub.f32 %v2988, %v2989
    %v2991 = vand.u32 %v2990, 4294901760
    %2992 = vmatpush1.msra.mxu0 %v2991
    %2993 = vmatprep.subr.mxu0 0.0
    %v2994 = vand.u32 %v2789, 4294901760
    %v2995 = vsub.f32 %v2789, %v2994
    %v2996 = vand.u32 %v2995, 4294901760
    %v2997 = vsub.f32 %v2995, %v2996
    %v2998 = vand.u32 %v2997, 4294901760
    %2999 = vmatpush1.msra.mxu0 %v2998
    %3000 = vmatprep.subr.mxu0 0.0
    %3001 = vmatpush1.msra.mxu0 0.0
    %3002 = vmatprep.subr.mxu0 0.0
    %3003 = vmatpush1.msra.mxu0 0.0
    %3004 = vmatprep.subr.mxu0 0.0
    %3005 = vmatpush1.msra.mxu0 0.0
    %3006 = vmatprep.subr.mxu0 0.0
    %3007 = vmatpush1.msra.mxu0 0.0
    %3008 = vmatprep.subr.mxu0 0.0
    %3009 = vmatpush1.msra.mxu0 0.0
    %3010 = vmatprep.subr.mxu0 0.0
    %3011 = vmatpush1.msra.mxu0 0.0
    %3012 = vmatprep.subr.mxu0 0.0
    %3013 = vmatpush1.msra.mxu0 0.0
    %3014 = vmatprep.subr.mxu0 0.0
    %3015 = vmatpush1.msra.mxu0 0.0
    %3016 = vmatprep.subr.mxu0 0.0
    %3017 = vmatpush1.msra.mxu0 0.0
    %3018 = vmatprep.subr.mxu0 0.0
    %3019 = vmatpush1.msra.mxu0 0.0
    %3020 = vmatprep.subr.mxu0 0.0
    %3021 = vmatpush1.msra.mxu0 0.0
    %3022 = vmatprep.subr.mxu0 0.0
    %3023 = vmatpush1.msra.mxu0 0.0
    %3024 = vmatprep.subr.mxu0 0.0
    %3025 = vmatpush1.msra.mxu0 0.0
    %3026 = vmatprep.subr.mxu0 0.0
    %3027 = vmatpush1.msra.mxu0 0.0
    %3028 = vmatprep.subr.mxu0 0.0
    %3029 = vmatpush1.msra.mxu0 0.0
    %3030 = vmatprep.subr.mxu0 0.0
    %3031 = vmatpush1.msra.mxu0 0.0
    %3032 = vmatprep.mubr.f32.mxu0 0.0
    %v3033 = vand.u32 %v2773, 4294901760
    %3034 = vmatmul.mubr.f32.gmra.mrb[0].mxu0 %v3033
    %v3035 = vpop.f32.mrb[0].mxu0
    %v3036 = vadd.f32 %v2885, %v3035
    %v3037 = vpop.f32.mrb[0].mxu0
    %3038 = vdwg.mxu0
    %3039 = vmatprep.subr.mxu0 0.0
    %v3040 = vand.u32 %v2774, 4294901760
    %v3041 = vsub.f32 %v2774, %v3040
    %3042 = vmatpush1.msra.mxu0 %v3041
    %3043 = vmatprep.subr.mxu0 0.0
    %v3044 = vand.u32 %v2775, 4294901760
    %v3045 = vsub.f32 %v2775, %v3044
    %3046 = vmatpush1.msra.mxu0 %v3045
    %3047 = vmatprep.subr.mxu0 0.0
    %v3048 = vand.u32 %v2776, 4294901760
    %v3049 = vsub.f32 %v2776, %v3048
    %3050 = vmatpush1.msra.mxu0 %v3049
    %3051 = vmatprep.subr.mxu0 0.0
    %v3052 = vand.u32 %v2777, 4294901760
    %v3053 = vsub.f32 %v2777, %v3052
    %3054 = vmatpush1.msra.mxu0 %v3053
    %3055 = vmatprep.subr.mxu0 0.0
    %v3056 = vand.u32 %v2778, 4294901760
    %v3057 = vsub.f32 %v2778, %v3056
    %3058 = vmatpush1.msra.mxu0 %v3057
    %3059 = vmatprep.subr.mxu0 0.0
    %v3060 = vand.u32 %v2779, 4294901760
    %v3061 = vsub.f32 %v2779, %v3060
    %3062 = vmatpush1.msra.mxu0 %v3061
    %3063 = vmatprep.subr.mxu0 0.0
    %v3064 = vand.u32 %v2780, 4294901760
    %v3065 = vsub.f32 %v2780, %v3064
    %3066 = vmatpush1.msra.mxu0 %v3065
    %3067 = vmatprep.subr.mxu0 0.0
    %v3068 = vand.u32 %v2781, 4294901760
    %v3069 = vsub.f32 %v2781, %v3068
    %3070 = vmatpush1.msra.mxu0 %v3069
    %3071 = vmatprep.subr.mxu0 0.0
    %v3072 = vand.u32 %v2782, 4294901760
    %v3073 = vsub.f32 %v2782, %v3072
    %3074 = vmatpush1.msra.mxu0 %v3073
    %3075 = vmatprep.subr.mxu0 0.0
    %v3076 = vand.u32 %v2783, 4294901760
    %v3077 = vsub.f32 %v2783, %v3076
    %3078 = vmatpush1.msra.mxu0 %v3077
    %3079 = vmatprep.subr.mxu0 0.0
    %v3080 = vand.u32 %v2784, 4294901760
    %v3081 = vsub.f32 %v2784, %v3080
    %3082 = vmatpush1.msra.mxu0 %v3081
    %3083 = vmatprep.subr.mxu0 0.0
    %v3084 = vand.u32 %v2785, 4294901760
    %v3085 = vsub.f32 %v2785, %v3084
    %3086 = vmatpush1.msra.mxu0 %v3085
    %3087 = vmatprep.subr.mxu0 0.0
    %v3088 = vand.u32 %v2786, 4294901760
    %v3089 = vsub.f32 %v2786, %v3088
    %3090 = vmatpush1.msra.mxu0 %v3089
    %3091 = vmatprep.subr.mxu0 0.0
    %v3092 = vand.u32 %v2787, 4294901760
    %v3093 = vsub.f32 %v2787, %v3092
    %3094 = vmatpush1.msra.mxu0 %v3093
    %3095 = vmatprep.subr.mxu0 0.0
    %v3096 = vand.u32 %v2788, 4294901760
    %v3097 = vsub.f32 %v2788, %v3096
    %3098 = vmatpush1.msra.mxu0 %v3097
    %3099 = vmatprep.subr.mxu0 0.0
    %v3100 = vand.u32 %v2789, 4294901760
    %v3101 = vsub.f32 %v2789, %v3100
    %3102 = vmatpush1.msra.mxu0 %v3101
    %3103 = vmatprep.subr.mxu0 0.0
    %3104 = vmatpush1.msra.mxu0 0.0
    %3105 = vmatprep.subr.mxu0 0.0
    %3106 = vmatpush1.msra.mxu0 0.0
    %3107 = vmatprep.subr.mxu0 0.0
    %3108 = vmatpush1.msra.mxu0 0.0
    %3109 = vmatprep.subr.mxu0 0.0
    %3110 = vmatpush1.msra.mxu0 0.0
    %3111 = vmatprep.subr.mxu0 0.0
    %3112 = vmatpush1.msra.mxu0 0.0
    %3113 = vmatprep.subr.mxu0 0.0
    %3114 = vmatpush1.msra.mxu0 0.0
    %3115 = vmatprep.subr.mxu0 0.0
    %3116 = vmatpush1.msra.mxu0 0.0
    %3117 = vmatprep.subr.mxu0 0.0
    %3118 = vmatpush1.msra.mxu0 0.0
    %3119 = vmatprep.subr.mxu0 0.0
    %3120 = vmatpush1.msra.mxu0 0.0
    %3121 = vmatprep.subr.mxu0 0.0
    %3122 = vmatpush1.msra.mxu0 0.0
    %3123 = vmatprep.subr.mxu0 0.0
    %3124 = vmatpush1.msra.mxu0 0.0
    %3125 = vmatprep.subr.mxu0 0.0
    %3126 = vmatpush1.msra.mxu0 0.0
    %3127 = vmatprep.subr.mxu0 0.0
    %3128 = vmatpush1.msra.mxu0 0.0
    %3129 = vmatprep.subr.mxu0 0.0
    %3130 = vmatpush1.msra.mxu0 0.0
    %3131 = vmatprep.subr.mxu0 0.0
    %3132 = vmatpush1.msra.mxu0 0.0
    %3133 = vmatprep.subr.mxu0 0.0
    %3134 = vmatpush1.msra.mxu0 0.0
    %3135 = vmatprep.mubr.f32.mxu0 0.0
    %v3136 = vand.u32 %v2773, 4294901760
    %v3137 = vsub.f32 %v2773, %v3136
    %3138 = vmatmul.mubr.f32.gmra.mrb[0].mxu0 %v3137
    %v3139 = vpop.f32.mrb[0].mxu0
    %v3140 = vadd.f32 %v3036, %v3139
    %v3141 = vpop.f32.mrb[0].mxu0
    %3142 = vdwg.mxu0
    %3143 = vmatprep.subr.mxu0 0.0
    %v3144 = vand.u32 %v2774, 4294901760
    %3145 = vmatpush1.msra.mxu0 %v3144
    %3146 = vmatprep.subr.mxu0 0.0
    %v3147 = vand.u32 %v2775, 4294901760
    %3148 = vmatpush1.msra.mxu0 %v3147
    %3149 = vmatprep.subr.mxu0 0.0
    %v3150 = vand.u32 %v2776, 4294901760
    %3151 = vmatpush1.msra.mxu0 %v3150
    %3152 = vmatprep.subr.mxu0 0.0
    %v3153 = vand.u32 %v2777, 4294901760
    %3154 = vmatpush1.msra.mxu0 %v3153
    %3155 = vmatprep.subr.mxu0 0.0
    %v3156 = vand.u32 %v2778, 4294901760
    %3157 = vmatpush1.msra.mxu0 %v3156
    %3158 = vmatprep.subr.mxu0 0.0
    %v3159 = vand.u32 %v2779, 4294901760
    %3160 = vmatpush1.msra.mxu0 %v3159
    %3161 = vmatprep.subr.mxu0 0.0
    %v3162 = vand.u32 %v2780, 4294901760
    %3163 = vmatpush1.msra.mxu0 %v3162
    %3164 = vmatprep.subr.mxu0 0.0
    %v3165 = vand.u32 %v2781, 4294901760
    %3166 = vmatpush1.msra.mxu0 %v3165
    %3167 = vmatprep.subr.mxu0 0.0
    %v3168 = vand.u32 %v2782, 4294901760
    %3169 = vmatpush1.msra.mxu0 %v3168
    %3170 = vmatprep.subr.mxu0 0.0
    %v3171 = vand.u32 %v2783, 4294901760
    %3172 = vmatpush1.msra.mxu0 %v3171
    %3173 = vmatprep.subr.mxu0 0.0
    %v3174 = vand.u32 %v2784, 4294901760
    %3175 = vmatpush1.msra.mxu0 %v3174
    %3176 = vmatprep.subr.mxu0 0.0
    %v3177 = vand.u32 %v2785, 4294901760
    %3178 = vmatpush1.msra.mxu0 %v3177
    %3179 = vmatprep.subr.mxu0 0.0
    %v3180 = vand.u32 %v2786, 4294901760
    %3181 = vmatpush1.msra.mxu0 %v3180
    %3182 = vmatprep.subr.mxu0 0.0
    %v3183 = vand.u32 %v2787, 4294901760
    %3184 = vmatpush1.msra.mxu0 %v3183
    %3185 = vmatprep.subr.mxu0 0.0
    %v3186 = vand.u32 %v2788, 4294901760
    %3187 = vmatpush1.msra.mxu0 %v3186
    %3188 = vmatprep.subr.mxu0 0.0
    %v3189 = vand.u32 %v2789, 4294901760
    %3190 = vmatpush1.msra.mxu0 %v3189
    %3191 = vmatprep.subr.mxu0 0.0
    %3192 = vmatpush1.msra.mxu0 0.0
    %3193 = vmatprep.subr.mxu0 0.0
    %3194 = vmatpush1.msra.mxu0 0.0
    %3195 = vmatprep.subr.mxu0 0.0
    %3196 = vmatpush1.msra.mxu0 0.0
    %3197 = vmatprep.subr.mxu0 0.0
    %3198 = vmatpush1.msra.mxu0 0.0
    %3199 = vmatprep.subr.mxu0 0.0
    %3200 = vmatpush1.msra.mxu0 0.0
    %3201 = vmatprep.subr.mxu0 0.0
    %3202 = vmatpush1.msra.mxu0 0.0
    %3203 = vmatprep.subr.mxu0 0.0
    %3204 = vmatpush1.msra.mxu0 0.0
    %3205 = vmatprep.subr.mxu0 0.0
    %3206 = vmatpush1.msra.mxu0 0.0
    %3207 = vmatprep.subr.mxu0 0.0
    %3208 = vmatpush1.msra.mxu0 0.0
    %3209 = vmatprep.subr.mxu0 0.0
    %3210 = vmatpush1.msra.mxu0 0.0
    %3211 = vmatprep.subr.mxu0 0.0
    %3212 = vmatpush1.msra.mxu0 0.0
    %3213 = vmatprep.subr.mxu0 0.0
    %3214 = vmatpush1.msra.mxu0 0.0
    %3215 = vmatprep.subr.mxu0 0.0
    %3216 = vmatpush1.msra.mxu0 0.0
    %3217 = vmatprep.subr.mxu0 0.0
    %3218 = vmatpush1.msra.mxu0 0.0
    %3219 = vmatprep.subr.mxu0 0.0
    %3220 = vmatpush1.msra.mxu0 0.0
    %3221 = vmatprep.subr.mxu0 0.0
    %3222 = vmatpush1.msra.mxu0 0.0
    %3223 = vmatprep.mubr.f32.mxu0 0.0
    %v3224 = vand.u32 %v2773, 4294901760
    %v3225 = vsub.f32 %v2773, %v3224
    %v3226 = vand.u32 %v3225, 4294901760
    %3227 = vmatmul.mubr.f32.gmra.mrb[0].mxu0 %v3226
    %v3228 = vpop.f32.mrb[0].mxu0
    %v3229 = vadd.f32 %v3140, %v3228
    %v3230 = vpop.f32.mrb[0].mxu0
    %3231 = vdwg.mxu0
    %3232 = vmatprep.subr.mxu0 0.0
    %v3233 = vand.u32 %v2774, 4294901760
    %v3234 = vsub.f32 %v2774, %v3233
    %v3235 = vand.u32 %v3234, 4294901760
    %3236 = vmatpush1.msra.mxu0 %v3235
    %3237 = vmatprep.subr.mxu0 0.0
    %v3238 = vand.u32 %v2775, 4294901760
    %v3239 = vsub.f32 %v2775, %v3238
    %v3240 = vand.u32 %v3239, 4294901760
    %3241 = vmatpush1.msra.mxu0 %v3240
    %3242 = vmatprep.subr.mxu0 0.0
    %v3243 = vand.u32 %v2776, 4294901760
    %v3244 = vsub.f32 %v2776, %v3243
    %v3245 = vand.u32 %v3244, 4294901760
    %3246 = vmatpush1.msra.mxu0 %v3245
    %3247 = vmatprep.subr.mxu0 0.0
    %v3248 = vand.u32 %v2777, 4294901760
    %v3249 = vsub.f32 %v2777, %v3248
    %v3250 = vand.u32 %v3249, 4294901760
    %3251 = vmatpush1.msra.mxu0 %v3250
    %3252 = vmatprep.subr.mxu0 0.0
    %v3253 = vand.u32 %v2778, 4294901760
    %v3254 = vsub.f32 %v2778, %v3253
    %v3255 = vand.u32 %v3254, 4294901760
    %3256 = vmatpush1.msra.mxu0 %v3255
    %3257 = vmatprep.subr.mxu0 0.0
    %v3258 = vand.u32 %v2779, 4294901760
    %v3259 = vsub.f32 %v2779, %v3258
    %v3260 = vand.u32 %v3259, 4294901760
    %3261 = vmatpush1.msra.mxu0 %v3260
    %3262 = vmatprep.subr.mxu0 0.0
    %v3263 = vand.u32 %v2780, 4294901760
    %v3264 = vsub.f32 %v2780, %v3263
    %v3265 = vand.u32 %v3264, 4294901760
    %3266 = vmatpush1.msra.mxu0 %v3265
    %3267 = vmatprep.subr.mxu0 0.0
    %v3268 = vand.u32 %v2781, 4294901760
    %v3269 = vsub.f32 %v2781, %v3268
    %v3270 = vand.u32 %v3269, 4294901760
    %3271 = vmatpush1.msra.mxu0 %v3270
    %3272 = vmatprep.subr.mxu0 0.0
    %v3273 = vand.u32 %v2782, 4294901760
    %v3274 = vsub.f32 %v2782, %v3273
    %v3275 = vand.u32 %v3274, 4294901760
    %3276 = vmatpush1.msra.mxu0 %v3275
    %3277 = vmatprep.subr.mxu0 0.0
    %v3278 = vand.u32 %v2783, 4294901760
    %v3279 = vsub.f32 %v2783, %v3278
    %v3280 = vand.u32 %v3279, 4294901760
    %3281 = vmatpush1.msra.mxu0 %v3280
    %3282 = vmatprep.subr.mxu0 0.0
    %v3283 = vand.u32 %v2784, 4294901760
    %v3284 = vsub.f32 %v2784, %v3283
    %v3285 = vand.u32 %v3284, 4294901760
    %3286 = vmatpush1.msra.mxu0 %v3285
    %3287 = vmatprep.subr.mxu0 0.0
    %v3288 = vand.u32 %v2785, 4294901760
    %v3289 = vsub.f32 %v2785, %v3288
    %v3290 = vand.u32 %v3289, 4294901760
    %3291 = vmatpush1.msra.mxu0 %v3290
    %3292 = vmatprep.subr.mxu0 0.0
    %v3293 = vand.u32 %v2786, 4294901760
    %v3294 = vsub.f32 %v2786, %v3293
    %v3295 = vand.u32 %v3294, 4294901760
    %3296 = vmatpush1.msra.mxu0 %v3295
    %3297 = vmatprep.subr.mxu0 0.0
    %v3298 = vand.u32 %v2787, 4294901760
    %v3299 = vsub.f32 %v2787, %v3298
    %v3300 = vand.u32 %v3299, 4294901760
    %3301 = vmatpush1.msra.mxu0 %v3300
    %3302 = vmatprep.subr.mxu0 0.0
    %v3303 = vand.u32 %v2788, 4294901760
    %v3304 = vsub.f32 %v2788, %v3303
    %v3305 = vand.u32 %v3304, 4294901760
    %3306 = vmatpush1.msra.mxu0 %v3305
    %3307 = vmatprep.subr.mxu0 0.0
    %v3308 = vand.u32 %v2789, 4294901760
    %v3309 = vsub.f32 %v2789, %v3308
    %v3310 = vand.u32 %v3309, 4294901760
    %3311 = vmatpush1.msra.mxu0 %v3310
    %3312 = vmatprep.subr.mxu0 0.0
    %3313 = vmatpush1.msra.mxu0 0.0
    %3314 = vmatprep.subr.mxu0 0.0
    %3315 = vmatpush1.msra.mxu0 0.0
    %3316 = vmatprep.subr.mxu0 0.0
    %3317 = vmatpush1.msra.mxu0 0.0
    %3318 = vmatprep.subr.mxu0 0.0
    %3319 = vmatpush1.msra.mxu0 0.0
    %3320 = vmatprep.subr.mxu0 0.0
    %3321 = vmatpush1.msra.mxu0 0.0
    %3322 = vmatprep.subr.mxu0 0.0
    %3323 = vmatpush1.msra.mxu0 0.0
    %3324 = vmatprep.subr.mxu0 0.0
    %3325 = vmatpush1.msra.mxu0 0.0
    %3326 = vmatprep.subr.mxu0 0.0
    %3327 = vmatpush1.msra.mxu0 0.0
    %3328 = vmatprep.subr.mxu0 0.0
    %3329 = vmatpush1.msra.mxu0 0.0
    %3330 = vmatprep.subr.mxu0 0.0
    %3331 = vmatpush1.msra.mxu0 0.0
    %3332 = vmatprep.subr.mxu0 0.0
    %3333 = vmatpush1.msra.mxu0 0.0
    %3334 = vmatprep.subr.mxu0 0.0
    %3335 = vmatpush1.msra.mxu0 0.0
    %3336 = vmatprep.subr.mxu0 0.0
    %3337 = vmatpush1.msra.mxu0 0.0
    %3338 = vmatprep.subr.mxu0 0.0
    %3339 = vmatpush1.msra.mxu0 0.0
    %3340 = vmatprep.subr.mxu0 0.0
    %3341 = vmatpush1.msra.mxu0 0.0
    %3342 = vmatprep.subr.mxu0 0.0
    %3343 = vmatpush1.msra.mxu0 0.0
    %3344 = vmatprep.mubr.f32.mxu0 0.0
    %v3345 = vand.u32 %v2773, 4294901760
    %3346 = vmatmul.mubr.f32.gmra.mrb[0].mxu0 %v3345
    %v3347 = vpop.f32.mrb[0].mxu0
    %v3348 = vadd.f32 %v3229, %v3347
    %v3349 = vpop.f32.mrb[0].mxu0
    %3350 = vdwg.mxu0
    %3351 = vmatprep.subr.mxu0 0.0
    %v3352 = vand.u32 %v2774, 4294901760
    %3353 = vmatpush1.msra.mxu0 %v3352
    %3354 = vmatprep.subr.mxu0 0.0
    %v3355 = vand.u32 %v2775, 4294901760
    %3356 = vmatpush1.msra.mxu0 %v3355
    %3357 = vmatprep.subr.mxu0 0.0
    %v3358 = vand.u32 %v2776, 4294901760
    %3359 = vmatpush1.msra.mxu0 %v3358
    %3360 = vmatprep.subr.mxu0 0.0
    %v3361 = vand.u32 %v2777, 4294901760
    %3362 = vmatpush1.msra.mxu0 %v3361
    %3363 = vmatprep.subr.mxu0 0.0
    %v3364 = vand.u32 %v2778, 4294901760
    %3365 = vmatpush1.msra.mxu0 %v3364
    %3366 = vmatprep.subr.mxu0 0.0
    %v3367 = vand.u32 %v2779, 4294901760
    %3368 = vmatpush1.msra.mxu0 %v3367
    %3369 = vmatprep.subr.mxu0 0.0
    %v3370 = vand.u32 %v2780, 4294901760
    %3371 = vmatpush1.msra.mxu0 %v3370
    %3372 = vmatprep.subr.mxu0 0.0
    %v3373 = vand.u32 %v2781, 4294901760
    %3374 = vmatpush1.msra.mxu0 %v3373
    %3375 = vmatprep.subr.mxu0 0.0
    %v3376 = vand.u32 %v2782, 4294901760
    %3377 = vmatpush1.msra.mxu0 %v3376
    %3378 = vmatprep.subr.mxu0 0.0
    %v3379 = vand.u32 %v2783, 4294901760
    %3380 = vmatpush1.msra.mxu0 %v3379
    %3381 = vmatprep.subr.mxu0 0.0
    %v3382 = vand.u32 %v2784, 4294901760
    %3383 = vmatpush1.msra.mxu0 %v3382
    %3384 = vmatprep.subr.mxu0 0.0
    %v3385 = vand.u32 %v2785, 4294901760
    %3386 = vmatpush1.msra.mxu0 %v3385
    %3387 = vmatprep.subr.mxu0 0.0
    %v3388 = vand.u32 %v2786, 4294901760
    %3389 = vmatpush1.msra.mxu0 %v3388
    %3390 = vmatprep.subr.mxu0 0.0
    %v3391 = vand.u32 %v2787, 4294901760
    %3392 = vmatpush1.msra.mxu0 %v3391
    %3393 = vmatprep.subr.mxu0 0.0
    %v3394 = vand.u32 %v2788, 4294901760
    %3395 = vmatpush1.msra.mxu0 %v3394
    %3396 = vmatprep.subr.mxu0 0.0
    %v3397 = vand.u32 %v2789, 4294901760
    %3398 = vmatpush1.msra.mxu0 %v3397
    %3399 = vmatprep.subr.mxu0 0.0
    %3400 = vmatpush1.msra.mxu0 0.0
    %3401 = vmatprep.subr.mxu0 0.0
    %3402 = vmatpush1.msra.mxu0 0.0
    %3403 = vmatprep.subr.mxu0 0.0
    %3404 = vmatpush1.msra.mxu0 0.0
    %3405 = vmatprep.subr.mxu0 0.0
    %3406 = vmatpush1.msra.mxu0 0.0
    %3407 = vmatprep.subr.mxu0 0.0
    %3408 = vmatpush1.msra.mxu0 0.0
    %3409 = vmatprep.subr.mxu0 0.0
    %3410 = vmatpush1.msra.mxu0 0.0
    %3411 = vmatprep.subr.mxu0 0.0
    %3412 = vmatpush1.msra.mxu0 0.0
    %3413 = vmatprep.subr.mxu0 0.0
    %3414 = vmatpush1.msra.mxu0 0.0
    %3415 = vmatprep.subr.mxu0 0.0
    %3416 = vmatpush1.msra.mxu0 0.0
    %3417 = vmatprep.subr.mxu0 0.0
    %3418 = vmatpush1.msra.mxu0 0.0
    %3419 = vmatprep.subr.mxu0 0.0
    %3420 = vmatpush1.msra.mxu0 0.0
    %3421 = vmatprep.subr.mxu0 0.0
    %3422 = vmatpush1.msra.mxu0 0.0
    %3423 = vmatprep.subr.mxu0 0.0
    %3424 = vmatpush1.msra.mxu0 0.0
    %3425 = vmatprep.subr.mxu0 0.0
    %3426 = vmatpush1.msra.mxu0 0.0
    %3427 = vmatprep.subr.mxu0 0.0
    %3428 = vmatpush1.msra.mxu0 0.0
    %3429 = vmatprep.subr.mxu0 0.0
    %3430 = vmatpush1.msra.mxu0 0.0
    %3431 = vmatprep.mubr.f32.mxu0 0.0
    %v3432 = vand.u32 %v2773, 4294901760
    %3433 = vmatmul.mubr.f32.gmra.mrb[0].mxu0 %v3432
    %v3434 = vpop.f32.mrb[0].mxu0
    %v3435 = vadd.f32 %v3348, %v3434
    %v3436 = vpop.f32.mrb[0].mxu0
    %3437 = vdwg.mxu0
    %v3438 = vmax.f32 %v3435, 0.0
    %v3439 = vld [vmem:[%s5] sm:$0xff]
    %v3440 = vld [vmem:[%s5 + $0x8] sm:$0xff]
    %v3441 = vld [vmem:[%s6] sm:$0x1]
    %v3443 = vlaneseq
    %v3444 = vshrl.u32 %v3443, 7
    %v3445 = vsub.s32 0, %v3444
    %v3446 = vrot.slane %v3441, %v3445
    %vm3448 = vcmask 130048
    %v3450 = vsel %vm3448, %v3438, 0
    %3452 = vmatprep.subr.mxu0 0.0
    %v3453 = vand.u32 %v3439, 4294901760
    %3454 = vmatpush1.msra.mxu0 %v3453
    %3455 = vmatprep.subr.mxu0 0.0
    %v3456 = vand.u32 %v3440, 4294901760
    %3457 = vmatpush1.msra.mxu0 %v3456
    %3458 = vmatprep.subr.mxu0 0.0
    %3459 = vmatpush1.msra.mxu0 0.0
    %3460 = vmatprep.subr.mxu0 0.0
    %3461 = vmatpush1.msra.mxu0 0.0
    %3462 = vmatprep.subr.mxu0 0.0
    %3463 = vmatpush1.msra.mxu0 0.0
    %3464 = vmatprep.subr.mxu0 0.0
    %3465 = vmatpush1.msra.mxu0 0.0
    %3466 = vmatprep.subr.mxu0 0.0
    %3467 = vmatpush1.msra.mxu0 0.0
    %3468 = vmatprep.subr.mxu0 0.0
    %3469 = vmatpush1.msra.mxu0 0.0
    %3470 = vmatprep.subr.mxu0 0.0
    %3471 = vmatpush1.msra.mxu0 0.0
    %3472 = vmatprep.subr.mxu0 0.0
    %3473 = vmatpush1.msra.mxu0 0.0
    %3474 = vmatprep.subr.mxu0 0.0
    %3475 = vmatpush1.msra.mxu0 0.0
    %3476 = vmatprep.subr.mxu0 0.0
    %3477 = vmatpush1.msra.mxu0 0.0
    %3478 = vmatprep.subr.mxu0 0.0
    %3479 = vmatpush1.msra.mxu0 0.0
    %3480 = vmatprep.subr.mxu0 0.0
    %3481 = vmatpush1.msra.mxu0 0.0
    %3482 = vmatprep.subr.mxu0 0.0
    %3483 = vmatpush1.msra.mxu0 0.0
    %3484 = vmatprep.subr.mxu0 0.0
    %3485 = vmatpush1.msra.mxu0 0.0
    %3486 = vmatprep.subr.mxu0 0.0
    %3487 = vmatpush1.msra.mxu0 0.0
    %3488 = vmatprep.subr.mxu0 0.0
    %3489 = vmatpush1.msra.mxu0 0.0
    %3490 = vmatprep.subr.mxu0 0.0
    %3491 = vmatpush1.msra.mxu0 0.0
    %3492 = vmatprep.subr.mxu0 0.0
    %3493 = vmatpush1.msra.mxu0 0.0
    %3494 = vmatprep.subr.mxu0 0.0
    %3495 = vmatpush1.msra.mxu0 0.0
    %3496 = vmatprep.subr.mxu0 0.0
    %3497 = vmatpush1.msra.mxu0 0.0
    %3498 = vmatprep.subr.mxu0 0.0
    %3499 = vmatpush1.msra.mxu0 0.0
    %3500 = vmatprep.subr.mxu0 0.0
    %3501 = vmatpush1.msra.mxu0 0.0
    %3502 = vmatprep.subr.mxu0 0.0
    %3503 = vmatpush1.msra.mxu0 0.0
    %3504 = vmatprep.subr.mxu0 0.0
    %3505 = vmatpush1.msra.mxu0 0.0
    %3506 = vmatprep.subr.mxu0 0.0
    %3507 = vmatpush1.msra.mxu0 0.0
    %3508 = vmatprep.subr.mxu0 0.0
    %3509 = vmatpush1.msra.mxu0 0.0
    %3510 = vmatprep.subr.mxu0 0.0
    %3511 = vmatpush1.msra.mxu0 0.0
    %3512 = vmatprep.subr.mxu0 0.0
    %3513 = vmatpush1.msra.mxu0 0.0
    %3514 = vmatprep.subr.mxu0 0.0
    %3515 = vmatpush1.msra.mxu0 0.0
    %3516 = vmatprep.subr.mxu0 0.0
    %3517 = vmatpush1.msra.mxu0 0.0
    %3518 = vmatprep.mubr.f32.mxu0 0.0
    %v3519 = vand.u32 %v3450, 4294901760
    %v3520 = vsub.f32 %v3450, %v3519
    %v3521 = vand.u32 %v3520, 4294901760
    %v3522 = vsub.f32 %v3520, %v3521
    %v3523 = vand.u32 %v3522, 4294901760
    %3524 = vmatmul.mubr.f32.gmra.mrb[0].mxu0 %v3523
    %v3525 = vpop.f32.mrb[0].mxu0
    %v3526 = vadd.f32 %v3446, %v3525
    %v3527 = vpop.f32.mrb[0].mxu0
    %3528 = vdwg.mxu0
    %3529 = vmatprep.subr.mxu0 0.0
    %v3530 = vand.u32 %v3439, 4294901760
    %v3531 = vsub.f32 %v3439, %v3530
    %v3532 = vand.u32 %v3531, 4294901760
    %v3533 = vsub.f32 %v3531, %v3532
    %v3534 = vand.u32 %v3533, 4294901760
    %3535 = vmatpush1.msra.mxu0 %v3534
    %3536 = vmatprep.subr.mxu0 0.0
    %v3537 = vand.u32 %v3440, 4294901760
    %v3538 = vsub.f32 %v3440, %v3537
    %v3539 = vand.u32 %v3538, 4294901760
    %v3540 = vsub.f32 %v3538, %v3539
    %v3541 = vand.u32 %v3540, 4294901760
    %3542 = vmatpush1.msra.mxu0 %v3541
    %3543 = vmatprep.subr.mxu0 0.0
    %3544 = vmatpush1.msra.mxu0 0.0
    %3545 = vmatprep.subr.mxu0 0.0
    %3546 = vmatpush1.msra.mxu0 0.0
    %3547 = vmatprep.subr.mxu0 0.0
    %3548 = vmatpush1.msra.mxu0 0.0
    %3549 = vmatprep.subr.mxu0 0.0
    %3550 = vmatpush1.msra.mxu0 0.0
    %3551 = vmatprep.subr.mxu0 0.0
    %3552 = vmatpush1.msra.mxu0 0.0
    %3553 = vmatprep.subr.mxu0 0.0
    %3554 = vmatpush1.msra.mxu0 0.0
    %3555 = vmatprep.subr.mxu0 0.0
    %3556 = vmatpush1.msra.mxu0 0.0
    %3557 = vmatprep.subr.mxu0 0.0
    %3558 = vmatpush1.msra.mxu0 0.0
    %3559 = vmatprep.subr.mxu0 0.0
    %3560 = vmatpush1.msra.mxu0 0.0
    %3561 = vmatprep.subr.mxu0 0.0
    %3562 = vmatpush1.msra.mxu0 0.0
    %3563 = vmatprep.subr.mxu0 0.0
    %3564 = vmatpush1.msra.mxu0 0.0
    %3565 = vmatprep.subr.mxu0 0.0
    %3566 = vmatpush1.msra.mxu0 0.0
    %3567 = vmatprep.subr.mxu0 0.0
    %3568 = vmatpush1.msra.mxu0 0.0
    %3569 = vmatprep.subr.mxu0 0.0
    %3570 = vmatpush1.msra.mxu0 0.0
    %3571 = vmatprep.subr.mxu0 0.0
    %3572 = vmatpush1.msra.mxu0 0.0
    %3573 = vmatprep.subr.mxu0 0.0
    %3574 = vmatpush1.msra.mxu0 0.0
    %3575 = vmatprep.subr.mxu0 0.0
    %3576 = vmatpush1.msra.mxu0 0.0
    %3577 = vmatprep.subr.mxu0 0.0
    %3578 = vmatpush1.msra.mxu0 0.0
    %3579 = vmatprep.subr.mxu0 0.0
    %3580 = vmatpush1.msra.mxu0 0.0
    %3581 = vmatprep.subr.mxu0 0.0
    %3582 = vmatpush1.msra.mxu0 0.0
    %3583 = vmatprep.subr.mxu0 0.0
    %3584 = vmatpush1.msra.mxu0 0.0
    %3585 = vmatprep.subr.mxu0 0.0
    %3586 = vmatpush1.msra.mxu0 0.0
    %3587 = vmatprep.subr.mxu0 0.0
    %3588 = vmatpush1.msra.mxu0 0.0
    %3589 = vmatprep.subr.mxu0 0.0
    %3590 = vmatpush1.msra.mxu0 0.0
    %3591 = vmatprep.subr.mxu0 0.0
    %3592 = vmatpush1.msra.mxu0 0.0
    %3593 = vmatprep.subr.mxu0 0.0
    %3594 = vmatpush1.msra.mxu0 0.0
    %3595 = vmatprep.subr.mxu0 0.0
    %3596 = vmatpush1.msra.mxu0 0.0
    %3597 = vmatprep.subr.mxu0 0.0
    %3598 = vmatpush1.msra.mxu0 0.0
    %3599 = vmatprep.subr.mxu0 0.0
    %3600 = vmatpush1.msra.mxu0 0.0
    %3601 = vmatprep.subr.mxu0 0.0
    %3602 = vmatpush1.msra.mxu0 0.0
    %3603 = vmatprep.mubr.f32.mxu0 0.0
    %v3604 = vand.u32 %v3450, 4294901760
    %3605 = vmatmul.mubr.f32.gmra.mrb[0].mxu0 %v3604
    %v3606 = vpop.f32.mrb[0].mxu0
    %v3607 = vadd.f32 %v3526, %v3606
    %v3608 = vpop.f32.mrb[0].mxu0
    %3609 = vdwg.mxu0
    %3610 = vmatprep.subr.mxu0 0.0
    %v3611 = vand.u32 %v3439, 4294901760
    %v3612 = vsub.f32 %v3439, %v3611
    %3613 = vmatpush1.msra.mxu0 %v3612
    %3614 = vmatprep.subr.mxu0 0.0
    %v3615 = vand.u32 %v3440, 4294901760
    %v3616 = vsub.f32 %v3440, %v3615
    %3617 = vmatpush1.msra.mxu0 %v3616
    %3618 = vmatprep.subr.mxu0 0.0
    %3619 = vmatpush1.msra.mxu0 0.0
    %3620 = vmatprep.subr.mxu0 0.0
    %3621 = vmatpush1.msra.mxu0 0.0
    %3622 = vmatprep.subr.mxu0 0.0
    %3623 = vmatpush1.msra.mxu0 0.0
    %3624 = vmatprep.subr.mxu0 0.0
    %3625 = vmatpush1.msra.mxu0 0.0
    %3626 = vmatprep.subr.mxu0 0.0
    %3627 = vmatpush1.msra.mxu0 0.0
    %3628 = vmatprep.subr.mxu0 0.0
    %3629 = vmatpush1.msra.mxu0 0.0
    %3630 = vmatprep.subr.mxu0 0.0
    %3631 = vmatpush1.msra.mxu0 0.0
    %3632 = vmatprep.subr.mxu0 0.0
    %3633 = vmatpush1.msra.mxu0 0.0
    %3634 = vmatprep.subr.mxu0 0.0
    %3635 = vmatpush1.msra.mxu0 0.0
    %3636 = vmatprep.subr.mxu0 0.0
    %3637 = vmatpush1.msra.mxu0 0.0
    %3638 = vmatprep.subr.mxu0 0.0
    %3639 = vmatpush1.msra.mxu0 0.0
    %3640 = vmatprep.subr.mxu0 0.0
    %3641 = vmatpush1.msra.mxu0 0.0
    %3642 = vmatprep.subr.mxu0 0.0
    %3643 = vmatpush1.msra.mxu0 0.0
    %3644 = vmatprep.subr.mxu0 0.0
    %3645 = vmatpush1.msra.mxu0 0.0
    %3646 = vmatprep.subr.mxu0 0.0
    %3647 = vmatpush1.msra.mxu0 0.0
    %3648 = vmatprep.subr.mxu0 0.0
    %3649 = vmatpush1.msra.mxu0 0.0
    %3650 = vmatprep.subr.mxu0 0.0
    %3651 = vmatpush1.msra.mxu0 0.0
    %3652 = vmatprep.subr.mxu0 0.0
    %3653 = vmatpush1.msra.mxu0 0.0
    %3654 = vmatprep.subr.mxu0 0.0
    %3655 = vmatpush1.msra.mxu0 0.0
    %3656 = vmatprep.subr.mxu0 0.0
    %3657 = vmatpush1.msra.mxu0 0.0
    %3658 = vmatprep.subr.mxu0 0.0
    %3659 = vmatpush1.msra.mxu0 0.0
    %3660 = vmatprep.subr.mxu0 0.0
    %3661 = vmatpush1.msra.mxu0 0.0
    %3662 = vmatprep.subr.mxu0 0.0
    %3663 = vmatpush1.msra.mxu0 0.0
    %3664 = vmatprep.subr.mxu0 0.0
    %3665 = vmatpush1.msra.mxu0 0.0
    %3666 = vmatprep.subr.mxu0 0.0
    %3667 = vmatpush1.msra.mxu0 0.0
    %3668 = vmatprep.subr.mxu0 0.0
    %3669 = vmatpush1.msra.mxu0 0.0
    %3670 = vmatprep.subr.mxu0 0.0
    %3671 = vmatpush1.msra.mxu0 0.0
    %3672 = vmatprep.subr.mxu0 0.0
    %3673 = vmatpush1.msra.mxu0 0.0
    %3674 = vmatprep.subr.mxu0 0.0
    %3675 = vmatpush1.msra.mxu0 0.0
    %3676 = vmatprep.subr.mxu0 0.0
    %3677 = vmatpush1.msra.mxu0 0.0
    %3678 = vmatprep.mubr.f32.mxu0 0.0
    %v3679 = vand.u32 %v3450, 4294901760
    %v3680 = vsub.f32 %v3450, %v3679
    %3681 = vmatmul.mubr.f32.gmra.mrb[0].mxu0 %v3680
    %v3682 = vpop.f32.mrb[0].mxu0
    %v3683 = vadd.f32 %v3607, %v3682
    %v3684 = vpop.f32.mrb[0].mxu0
    %3685 = vdwg.mxu0
    %3686 = vmatprep.subr.mxu0 0.0
    %v3687 = vand.u32 %v3439, 4294901760
    %3688 = vmatpush1.msra.mxu0 %v3687
    %3689 = vmatprep.subr.mxu0 0.0
    %v3690 = vand.u32 %v3440, 4294901760
    %3691 = vmatpush1.msra.mxu0 %v3690
    %3692 = vmatprep.subr.mxu0 0.0
    %3693 = vmatpush1.msra.mxu0 0.0
    %3694 = vmatprep.subr.mxu0 0.0
    %3695 = vmatpush1.msra.mxu0 0.0
    %3696 = vmatprep.subr.mxu0 0.0
    %3697 = vmatpush1.msra.mxu0 0.0
    %3698 = vmatprep.subr.mxu0 0.0
    %3699 = vmatpush1.msra.mxu0 0.0
    %3700 = vmatprep.subr.mxu0 0.0
    %3701 = vmatpush1.msra.mxu0 0.0
    %3702 = vmatprep.subr.mxu0 0.0
    %3703 = vmatpush1.msra.mxu0 0.0
    %3704 = vmatprep.subr.mxu0 0.0
    %3705 = vmatpush1.msra.mxu0 0.0
    %3706 = vmatprep.subr.mxu0 0.0
    %3707 = vmatpush1.msra.mxu0 0.0
    %3708 = vmatprep.subr.mxu0 0.0
    %3709 = vmatpush1.msra.mxu0 0.0
    %3710 = vmatprep.subr.mxu0 0.0
    %3711 = vmatpush1.msra.mxu0 0.0
    %3712 = vmatprep.subr.mxu0 0.0
    %3713 = vmatpush1.msra.mxu0 0.0
    %3714 = vmatprep.subr.mxu0 0.0
    %3715 = vmatpush1.msra.mxu0 0.0
    %3716 = vmatprep.subr.mxu0 0.0
    %3717 = vmatpush1.msra.mxu0 0.0
    %3718 = vmatprep.subr.mxu0 0.0
    %3719 = vmatpush1.msra.mxu0 0.0
    %3720 = vmatprep.subr.mxu0 0.0
    %3721 = vmatpush1.msra.mxu0 0.0
    %3722 = vmatprep.subr.mxu0 0.0
    %3723 = vmatpush1.msra.mxu0 0.0
    %3724 = vmatprep.subr.mxu0 0.0
    %3725 = vmatpush1.msra.mxu0 0.0
    %3726 = vmatprep.subr.mxu0 0.0
    %3727 = vmatpush1.msra.mxu0 0.0
    %3728 = vmatprep.subr.mxu0 0.0
    %3729 = vmatpush1.msra.mxu0 0.0
    %3730 = vmatprep.subr.mxu0 0.0
    %3731 = vmatpush1.msra.mxu0 0.0
    %3732 = vmatprep.subr.mxu0 0.0
    %3733 = vmatpush1.msra.mxu0 0.0
    %3734 = vmatprep.subr.mxu0 0.0
    %3735 = vmatpush1.msra.mxu0 0.0
    %3736 = vmatprep.subr.mxu0 0.0
    %3737 = vmatpush1.msra.mxu0 0.0
    %3738 = vmatprep.subr.mxu0 0.0
    %3739 = vmatpush1.msra.mxu0 0.0
    %3740 = vmatprep.subr.mxu0 0.0
    %3741 = vmatpush1.msra.mxu0 0.0
    %3742 = vmatprep.subr.mxu0 0.0
    %3743 = vmatpush1.msra.mxu0 0.0
    %3744 = vmatprep.subr.mxu0 0.0
    %3745 = vmatpush1.msra.mxu0 0.0
    %3746 = vmatprep.subr.mxu0 0.0
    %3747 = vmatpush1.msra.mxu0 0.0
    %3748 = vmatprep.subr.mxu0 0.0
    %3749 = vmatpush1.msra.mxu0 0.0
    %3750 = vmatprep.subr.mxu0 0.0
    %3751 = vmatpush1.msra.mxu0 0.0
    %3752 = vmatprep.mubr.f32.mxu0 0.0
    %v3753 = vand.u32 %v3450, 4294901760
    %v3754 = vsub.f32 %v3450, %v3753
    %v3755 = vand.u32 %v3754, 4294901760
    %3756 = vmatmul.mubr.f32.gmra.mrb[0].mxu0 %v3755
    %v3757 = vpop.f32.mrb[0].mxu0
    %v3758 = vadd.f32 %v3683, %v3757
    %v3759 = vpop.f32.mrb[0].mxu0
    %3760 = vdwg.mxu0
    %3761 = vmatprep.subr.mxu0 0.0
    %v3762 = vand.u32 %v3439, 4294901760
    %v3763 = vsub.f32 %v3439, %v3762
    %v3764 = vand.u32 %v3763, 4294901760
    %3765 = vmatpush1.msra.mxu0 %v3764
    %3766 = vmatprep.subr.mxu0 0.0
    %v3767 = vand.u32 %v3440, 4294901760
    %v3768 = vsub.f32 %v3440, %v3767
    %v3769 = vand.u32 %v3768, 4294901760
    %3770 = vmatpush1.msra.mxu0 %v3769
    %3771 = vmatprep.subr.mxu0 0.0
    %3772 = vmatpush1.msra.mxu0 0.0
    %3773 = vmatprep.subr.mxu0 0.0
    %3774 = vmatpush1.msra.mxu0 0.0
    %3775 = vmatprep.subr.mxu0 0.0
    %3776 = vmatpush1.msra.mxu0 0.0
    %3777 = vmatprep.subr.mxu0 0.0
    %3778 = vmatpush1.msra.mxu0 0.0
    %3779 = vmatprep.subr.mxu0 0.0
    %3780 = vmatpush1.msra.mxu0 0.0
    %3781 = vmatprep.subr.mxu0 0.0
    %3782 = vmatpush1.msra.mxu0 0.0
    %3783 = vmatprep.subr.mxu0 0.0
    %3784 = vmatpush1.msra.mxu0 0.0
    %3785 = vmatprep.subr.mxu0 0.0
    %3786 = vmatpush1.msra.mxu0 0.0
    %3787 = vmatprep.subr.mxu0 0.0
    %3788 = vmatpush1.msra.mxu0 0.0
    %3789 = vmatprep.subr.mxu0 0.0
    %3790 = vmatpush1.msra.mxu0 0.0
    %3791 = vmatprep.subr.mxu0 0.0
    %3792 = vmatpush1.msra.mxu0 0.0
    %3793 = vmatprep.subr.mxu0 0.0
    %3794 = vmatpush1.msra.mxu0 0.0
    %3795 = vmatprep.subr.mxu0 0.0
    %3796 = vmatpush1.msra.mxu0 0.0
    %3797 = vmatprep.subr.mxu0 0.0
    %3798 = vmatpush1.msra.mxu0 0.0
    %3799 = vmatprep.subr.mxu0 0.0
    %3800 = vmatpush1.msra.mxu0 0.0
    %3801 = vmatprep.subr.mxu0 0.0
    %3802 = vmatpush1.msra.mxu0 0.0
    %3803 = vmatprep.subr.mxu0 0.0
    %3804 = vmatpush1.msra.mxu0 0.0
    %3805 = vmatprep.subr.mxu0 0.0
    %3806 = vmatpush1.msra.mxu0 0.0
    %3807 = vmatprep.subr.mxu0 0.0
    %3808 = vmatpush1.msra.mxu0 0.0
    %3809 = vmatprep.subr.mxu0 0.0
    %3810 = vmatpush1.msra.mxu0 0.0
    %3811 = vmatprep.subr.mxu0 0.0
    %3812 = vmatpush1.msra.mxu0 0.0
    %3813 = vmatprep.subr.mxu0 0.0
    %3814 = vmatpush1.msra.mxu0 0.0
    %3815 = vmatprep.subr.mxu0 0.0
    %3816 = vmatpush1.msra.mxu0 0.0
    %3817 = vmatprep.subr.mxu0 0.0
    %3818 = vmatpush1.msra.mxu0 0.0
    %3819 = vmatprep.subr.mxu0 0.0
    %3820 = vmatpush1.msra.mxu0 0.0
    %3821 = vmatprep.subr.mxu0 0.0
    %3822 = vmatpush1.msra.mxu0 0.0
    %3823 = vmatprep.subr.mxu0 0.0
    %3824 = vmatpush1.msra.mxu0 0.0
    %3825 = vmatprep.subr.mxu0 0.0
    %3826 = vmatpush1.msra.mxu0 0.0
    %3827 = vmatprep.subr.mxu0 0.0
    %3828 = vmatpush1.msra.mxu0 0.0
    %3829 = vmatprep.subr.mxu0 0.0
    %3830 = vmatpush1.msra.mxu0 0.0
    %3831 = vmatprep.mubr.f32.mxu0 0.0
    %v3832 = vand.u32 %v3450, 4294901760
    %3833 = vmatmul.mubr.f32.gmra.mrb[0].mxu0 %v3832
    %v3834 = vpop.f32.mrb[0].mxu0
    %v3835 = vadd.f32 %v3758, %v3834
    %v3836 = vpop.f32.mrb[0].mxu0
    %3837 = vdwg.mxu0
    %3838 = vmatprep.subr.mxu0 0.0
    %v3839 = vand.u32 %v3439, 4294901760
    %3840 = vmatpush1.msra.mxu0 %v3839
    %3841 = vmatprep.subr.mxu0 0.0
    %v3842 = vand.u32 %v3440, 4294901760
    %3843 = vmatpush1.msra.mxu0 %v3842
    %3844 = vmatprep.subr.mxu0 0.0
    %3845 = vmatpush1.msra.mxu0 0.0
    %3846 = vmatprep.subr.mxu0 0.0
    %3847 = vmatpush1.msra.mxu0 0.0
    %3848 = vmatprep.subr.mxu0 0.0
    %3849 = vmatpush1.msra.mxu0 0.0
    %3850 = vmatprep.subr.mxu0 0.0
    %3851 = vmatpush1.msra.mxu0 0.0
    %3852 = vmatprep.subr.mxu0 0.0
    %3853 = vmatpush1.msra.mxu0 0.0
    %3854 = vmatprep.subr.mxu0 0.0
    %3855 = vmatpush1.msra.mxu0 0.0
    %3856 = vmatprep.subr.mxu0 0.0
    %3857 = vmatpush1.msra.mxu0 0.0
    %3858 = vmatprep.subr.mxu0 0.0
    %3859 = vmatpush1.msra.mxu0 0.0
    %3860 = vmatprep.subr.mxu0 0.0
    %3861 = vmatpush1.msra.mxu0 0.0
    %3862 = vmatprep.subr.mxu0 0.0
    %3863 = vmatpush1.msra.mxu0 0.0
    %3864 = vmatprep.subr.mxu0 0.0
    %3865 = vmatpush1.msra.mxu0 0.0
    %3866 = vmatprep.subr.mxu0 0.0
    %3867 = vmatpush1.msra.mxu0 0.0
    %3868 = vmatprep.subr.mxu0 0.0
    %3869 = vmatpush1.msra.mxu0 0.0
    %3870 = vmatprep.subr.mxu0 0.0
    %3871 = vmatpush1.msra.mxu0 0.0
    %3872 = vmatprep.subr.mxu0 0.0
    %3873 = vmatpush1.msra.mxu0 0.0
    %3874 = vmatprep.subr.mxu0 0.0
    %3875 = vmatpush1.msra.mxu0 0.0
    %3876 = vmatprep.subr.mxu0 0.0
    %3877 = vmatpush1.msra.mxu0 0.0
    %3878 = vmatprep.subr.mxu0 0.0
    %3879 = vmatpush1.msra.mxu0 0.0
    %3880 = vmatprep.subr.mxu0 0.0
    %3881 = vmatpush1.msra.mxu0 0.0
    %3882 = vmatprep.subr.mxu0 0.0
    %3883 = vmatpush1.msra.mxu0 0.0
    %3884 = vmatprep.subr.mxu0 0.0
    %3885 = vmatpush1.msra.mxu0 0.0
    %3886 = vmatprep.subr.mxu0 0.0
    %3887 = vmatpush1.msra.mxu0 0.0
    %3888 = vmatprep.subr.mxu0 0.0
    %3889 = vmatpush1.msra.mxu0 0.0
    %3890 = vmatprep.subr.mxu0 0.0
    %3891 = vmatpush1.msra.mxu0 0.0
    %3892 = vmatprep.subr.mxu0 0.0
    %3893 = vmatpush1.msra.mxu0 0.0
    %3894 = vmatprep.subr.mxu0 0.0
    %3895 = vmatpush1.msra.mxu0 0.0
    %3896 = vmatprep.subr.mxu0 0.0
    %3897 = vmatpush1.msra.mxu0 0.0
    %3898 = vmatprep.subr.mxu0 0.0
    %3899 = vmatpush1.msra.mxu0 0.0
    %3900 = vmatprep.subr.mxu0 0.0
    %3901 = vmatpush1.msra.mxu0 0.0
    %3902 = vmatprep.subr.mxu0 0.0
    %3903 = vmatpush1.msra.mxu0 0.0
    %3904 = vmatprep.mubr.f32.mxu0 0.0
    %v3905 = vand.u32 %v3450, 4294901760
    %3906 = vmatmul.mubr.f32.gmra.mrb[0].mxu0 %v3905
    %v3907 = vpop.f32.mrb[0].mxu0
    %v3908 = vadd.f32 %v3835, %v3907
    %v3909 = vpop.f32.mrb[0].mxu0
    %3910 = vdwg.mxu0
    %vm3911 = vcmask 25600
    %3912 = vst.msk [vmem:[#allocation5] sm:$0x3] %vm3911, %v3908
    // Predicated region
    $region34: #{tpu_custom_call.1} parent=1 // pred_check
      _
    $region35: #{tpu_custom_call.1} parent=1 // pred_check_branch
      %3914 = sbr.rel (0) target = $region37
    $region36: #{tpu_custom_call.1} parent=1 // pred_region
      %s3916 = ssub.s32 32, 32
      %3917 = vsyncadd [#allocation4], %s3916
      %s3919 = sshll.u32 [#allocation5], 4
      %s3920 = int_to_ptr.vmem [resolvable:$true] %s3919
      %3922 = dma.vmem_to_hbm [thread:$0]  %s3920, 32, %s7, [#allocation4]
    $region37: #{tpu_custom_call.1} parent=1 // pred_fallthru
      _
    // Predicated region
    $region38: #{tpu_custom_call.1} parent=1 // pred_check
      _
    $region39: #{tpu_custom_call.1} parent=1 // pred_check_branch
      %3924 = sbr.rel (0) target = $region41
    $region40: #{tpu_custom_call.1} parent=1 // pred_region
      %3925 = dma.done [#allocation4], 32
    $region41: #{tpu_custom_call.1} parent=1 // pred_fallthru
      _
    %3926 = vsyncpa [#allocation3], 1
    %3927 = vsyncpa [#allocation4], 1

</llo_original>
